<compile_context>
chip_gen: v6e
topology: v6e:2x2x1
jax: 0.10.0
libtpu: 0.0.40
codegen_flags: <defaults>
</compile_context>

<pallas_src>
import functools

import jax
import jax.numpy as jnp
from jax.experimental import pallas as pl
from jax.experimental.pallas import tpu as pltpu


def _decoder_rnn_kernel(x_ref, wg_ref, bias_ref, outp_ref, out_ref, hid_ref,
                        *, B, T, H, O):
    """Single-invocation GRU forward + output projection (whole problem in VMEM).

    x_ref    : (B*T, H)  batch-major flattened input
    wg_ref   : (6, H, H) [W_ih_r^T, W_ih_z^T, W_ih_n^T, W_hh_r^T, W_hh_z^T, W_hh_n^T]
    bias_ref : (4, H)    [b_ih_r+b_hh_r, b_ih_z+b_hh_z, b_ih_n, b_hh_n]
    outp_ref : (H+1, O)  rows 0..H-1 = W_out^T, row H = b_out
    out_ref  : (B*T, O)  batch-major flattened output
    hid_ref  : (B, H)    final hidden state
    """
    x = x_ref[...]                                                      # (B*T, H)

    # ---- Prologue: batched, lane-aligned per-gate input projections (one MXU call per
    #      gate covering all timesteps); r/z combined biases and the n input bias are
    #      folded in here, off the serial h chain. ----
    gi_r = (jnp.dot(x, wg_ref[0], preferred_element_type=jnp.float32)
            + bias_ref[0:1, :]).reshape(B, T, H)
    gi_z = (jnp.dot(x, wg_ref[1], preferred_element_type=jnp.float32)
            + bias_ref[1:2, :]).reshape(B, T, H)
    gi_n = (jnp.dot(x, wg_ref[2], preferred_element_type=jnp.float32)
            + bias_ref[2:3, :]).reshape(B, T, H)

    w_hh_r = wg_ref[3]                                                  # (H, H), loaded once
    w_hh_z = wg_ref[4]
    w_hh_n = wg_ref[5]
    b_hh_n = bias_ref[3:4, :]                                           # (1, H)

    # ---- Recurrence: statically unrolled, h carried in registers; three lane-aligned
    #      (B,H)@(H,H) dots per step, no gate slicing on the critical path. ----
    h = jnp.zeros((B, H), jnp.float32)                                  # zero h0, like the module
    hs = []
    for t in range(T):
        gh_r = jnp.dot(h, w_hh_r, preferred_element_type=jnp.float32)
        gh_z = jnp.dot(h, w_hh_z, preferred_element_type=jnp.float32)
        gh_n = jnp.dot(h, w_hh_n, preferred_element_type=jnp.float32) + b_hh_n
        r = jax.nn.sigmoid(gi_r[:, t, :] + gh_r)
        z = jax.nn.sigmoid(gi_z[:, t, :] + gh_z)
        n = jnp.tanh(gi_n[:, t, :] + r * gh_n)
        h = (1.0 - z) * n + z * h                                       # (B, H)
        hs.append(h)

    hid_ref[...] = h                                                    # final hidden (B, H)

    # ---- Epilogue: assemble per-step hidden states (registers -> (B,T,H) value via
    #      iota/select: no VMEM scratch round-trip, only guaranteed-lowerable VPU ops),
    #      then ONE batched output projection written as a single 2-D (B*T, O) store. ----
    t_idx = jax.lax.broadcasted_iota(jnp.int32, (B, T, H), 1)
    hs3 = jnp.zeros((B, T, H), jnp.float32)
    for t in range(T):
        hs3 = jnp.where(t_idx == t, hs[t][:, None, :], hs3)
    hs_flat = hs3.reshape(B * T, H)                                     # (B*T, H), batch-major
    out = (jnp.dot(hs_flat, outp_ref[0:H, :], preferred_element_type=jnp.float32)
           + outp_ref[H:H + 1, :])                                      # (B*T, O)
    out_ref[...] = out


def prepare_decoder_params(params):
    """One-time (init-time) re-layout of the PyTorch-style GRU/Linear parameters.

    Deliberately NOT part of the jitted forward: a decoder forward is typically called
    once per decode step, and re-transposing/packing weights per call would launch extra
    tiny XLA kernels whose cost rivals the Pallas kernel itself.
    """
    w_ih, w_hh, b_ih, b_hh, w_out, b_out = params
    H = w_hh.shape[1]
    f32 = jnp.float32

    # (6, H, H): rows 0..2 = W_ih_{r,z,n}^T, rows 3..5 = W_hh_{r,z,n}^T
    # (so x @ W_gate^T == jnp.dot(x, w_gates[g]) with gate output lane-aligned at lane 0).
    w_gates = jnp.stack(
        [w_ih[0 * H:1 * H].T, w_ih[1 * H:2 * H].T, w_ih[2 * H:3 * H].T,
         w_hh[0 * H:1 * H].T, w_hh[1 * H:2 * H].T, w_hh[2 * H:3 * H].T],
        axis=0).astype(f32)

    b_ih1 = b_ih.reshape(-1).astype(f32)
    b_hh1 = b_hh.reshape(-1).astype(f32)
    # (4, H): [b_ih_r + b_hh_r, b_ih_z + b_hh_z, b_ih_n, b_hh_n]
    bias_pack = jnp.stack(
        [b_ih1[0 * H:1 * H] + b_hh1[0 * H:1 * H],
         b_ih1[1 * H:2 * H] + b_hh1[1 * H:2 * H],
         b_ih1[2 * H:3 * H],
         b_hh1[2 * H:3 * H]],
        axis=0)

    # (H+1, O): output weight (transposed) with its bias appended as the last row.
    out_pack = jnp.concatenate(
        [w_out.T.astype(f32), b_out.reshape(1, -1).astype(f32)], axis=0)

    return w_gates, bias_pack, out_pack


@jax.jit
def decoder_rnn_forward(inp, hidden_unused, packed_params):
    """inp: (B, T, H) float32 batch_first. Returns (output (B, T, O), hidden (1, B, H))."""
    del hidden_unused  # module ignores the passed-in hidden (uses zeros h0); we do the same
    w_gates, bias_pack, out_pack = packed_params
    B, T, H = inp.shape
    O = out_pack.shape[1]

    kernel = functools.partial(_decoder_rnn_kernel, B=B, T=T, H=H, O=O)
    vmem = pl.BlockSpec(memory_space=pltpu.MemorySpace.VMEM)

    # NOTE(scaling): everything is VMEM-resident and single-buffered (roughly
    # 20*B*T*H bytes of f32 activations) — a few tens of KB here, fine on every TPU
    # generation. If B*T*H ever grows toward the v7x 64 MiB VMEM (or the 32 MiB scoped
    # default), add a T- or B-grid with a carried-h accumulator and set
    # pltpu.CompilerParams(vmem_limit_bytes=...); for B in the hundreds on v7x, add a
    # leading batch grid axis with dimension_semantics=("parallel",) so both
    # TensorCores are used (keep single-block on v5e/v6e).
    out_flat, hid = pl.pallas_call(
        kernel,
        out_shape=[
            jax.ShapeDtypeStruct((B * T, O), jnp.float32),  # batch-major flat output
            jax.ShapeDtypeStruct((B, H), jnp.float32),      # final hidden (n_layers=1)
        ],
        in_specs=[vmem, vmem, vmem, vmem],
        out_specs=[vmem, vmem],
    )(inp.reshape(B * T, H), w_gates, bias_pack, out_pack)

    # Free metadata reshapes back to the module's output layout.
    return out_flat.reshape(B, T, O), hid[None]


def _reference_forward(inp, params):
    """Pure-JAX reference (PyTorch GRU semantics) for correctness checking."""
    w_ih, w_hh, b_ih, b_hh, w_out, b_out = params
    B, T, H = inp.shape

    def step(h, x_t):
        gi = x_t @ w_ih.T + b_ih[0]
        gh = h @ w_hh.T + b_hh[0]
        i_r, i_z, i_n = gi[:, :H], gi[:, H:2 * H], gi[:, 2 * H:]
        h_r, h_z, h_n = gh[:, :H], gh[:, H:2 * H], gh[:, 2 * H:]
        r = jax.nn.sigmoid(i_r + h_r)
        z = jax.nn.sigmoid(i_z + h_z)
        n = jnp.tanh(i_n + r * h_n)
        h_new = (1.0 - z) * n + z * h
        return h_new, h_new

    h0 = jnp.zeros((B, H), jnp.float32)
    h_last, hs = jax.lax.scan(step, h0, jnp.transpose(inp, (1, 0, 2)))
    out = jnp.einsum('tbh,oh->tbo', hs, w_out) + b_out[0]
    return jnp.transpose(out, (1, 0, 2)), h_last[None]


if __name__ == "__main__":
    # Small shapes consistent with the module: batch=2, seq=8, hidden=32, output=16.
    B, T, H, O = 2, 8, 32, 16

    key = jax.random.PRNGKey(0)
    ks = jax.random.split(key, 8)
    scale = 1.0 / jnp.sqrt(H)
    w_ih = jax.random.uniform(ks[0], (3 * H, H), jnp.float32, -scale, scale)
    w_hh = jax.random.uniform(ks[1], (3 * H, H), jnp.float32, -scale, scale)
    b_ih = jax.random.uniform(ks[2], (1, 3 * H), jnp.float32, -scale, scale)
    b_hh = jax.random.uniform(ks[3], (1, 3 * H), jnp.float32, -scale, scale)
    w_out = jax.random.uniform(ks[4], (O, H), jnp.float32, -scale, scale)
    b_out = jax.random.uniform(ks[5], (1, O), jnp.float32, -scale, scale)
    params = (w_ih, w_hh, b_ih, b_hh, w_out, b_out)

    # One-time weight re-layout (per-gate split, bias folding, packing) at "init" time.
    packed_params = prepare_decoder_params(params)

    inp = jax.random.normal(ks[6], (B, T, H), jnp.float32)
    hidden_in = jnp.zeros((1, B, H), jnp.float32)  # passed but ignored, like the module

    out, hid = decoder_rnn_forward(inp, hidden_in, packed_params)
    out, hid = jax.block_until_ready((out, hid))

    ref_out, ref_hid = _reference_forward(inp, params)
    assert jnp.allclose(out, ref_out, atol=1e-5, rtol=1e-5)
    assert jnp.allclose(hid, ref_hid, atol=1e-5, rtol=1e-5)

    # TODO(synk): self.softmax (LogSoftmax) is defined in __init__ but never used in
    # forward, so it is intentionally not implemented.
    print("KERNEL_OK")
</pallas_src>

<mosaic_0001>
module attributes {stable_mosaic.version = 11 : i64} {
  func.func @_decoder_rnn_kernel(%arg0: memref<16x32xf32, #tpu.memory_space<vmem>>, %arg1: memref<6x32x32xf32, #tpu.memory_space<vmem>>, %arg2: memref<4x32xf32, #tpu.memory_space<vmem>>, %arg3: memref<33x16xf32, #tpu.memory_space<vmem>>, %arg4: memref<16x16xf32, #tpu.memory_space<vmem>>, %arg5: memref<2x32xf32, #tpu.memory_space<vmem>>) attributes {dimension_semantics = [], scalar_prefetch = 0 : i64, scratch_operands = 0 : i64, tpu.core_type = #tpu.core_type<tc>} {
    %c0 = arith.constant 0 : index
    %c0_0 = arith.constant 0 : index
    %0 = vector.load %arg0[%c0, %c0_0] : memref<16x32xf32, #tpu.memory_space<vmem>>, vector<16x32xf32>
    %c0_1 = arith.constant 0 : index
    %c0_2 = arith.constant 0 : index
    %c0_3 = arith.constant 0 : index
    %1 = vector.load %arg1[%c0_1, %c0_2, %c0_3] : memref<6x32x32xf32, #tpu.memory_space<vmem>>, vector<1x32x32xf32>
    %2 = vector.shape_cast %1 : vector<1x32x32xf32> to vector<32x32xf32>
    %cst = arith.constant dense<0.000000e+00> : vector<16x32xf32>
    %3 = tpu.matmul %0, %2, %cst {dimension_numbers = #tpu.dot_dimension_numbers<[1], [0], [0], [1], [0, 0, 1, 1], [], []>} : vector<16x32xf32>, vector<32x32xf32>, vector<16x32xf32> -> vector<16x32xf32>
    %c0_4 = arith.constant 0 : index
    %c0_5 = arith.constant 0 : index
    %4 = vector.load %arg2[%c0_4, %c0_5] : memref<4x32xf32, #tpu.memory_space<vmem>>, vector<1x32xf32>
    %5 = vector.broadcast %4 : vector<1x32xf32> to vector<16x32xf32>
    %6 = arith.addf %3, %5 : vector<16x32xf32>
    %7 = vector.shape_cast %6 : vector<16x32xf32> to vector<2x8x32xf32>
    %c1 = arith.constant 1 : index
    %c0_6 = arith.constant 0 : index
    %c0_7 = arith.constant 0 : index
    %8 = vector.load %arg1[%c1, %c0_6, %c0_7] : memref<6x32x32xf32, #tpu.memory_space<vmem>>, vector<1x32x32xf32>
    %9 = vector.shape_cast %8 : vector<1x32x32xf32> to vector<32x32xf32>
    %cst_8 = arith.constant dense<0.000000e+00> : vector<16x32xf32>
    %10 = tpu.matmul %0, %9, %cst_8 {dimension_numbers = #tpu.dot_dimension_numbers<[1], [0], [0], [1], [0, 0, 1, 1], [], []>} : vector<16x32xf32>, vector<32x32xf32>, vector<16x32xf32> -> vector<16x32xf32>
    %c1_9 = arith.constant 1 : index
    %c0_10 = arith.constant 0 : index
    %11 = vector.load %arg2[%c1_9, %c0_10] : memref<4x32xf32, #tpu.memory_space<vmem>>, vector<1x32xf32>
    %12 = vector.broadcast %11 : vector<1x32xf32> to vector<16x32xf32>
    %13 = arith.addf %10, %12 : vector<16x32xf32>
    %14 = vector.shape_cast %13 : vector<16x32xf32> to vector<2x8x32xf32>
    %c2 = arith.constant 2 : index
    %c0_11 = arith.constant 0 : index
    %c0_12 = arith.constant 0 : index
    %15 = vector.load %arg1[%c2, %c0_11, %c0_12] : memref<6x32x32xf32, #tpu.memory_space<vmem>>, vector<1x32x32xf32>
    %16 = vector.shape_cast %15 : vector<1x32x32xf32> to vector<32x32xf32>
    %cst_13 = arith.constant dense<0.000000e+00> : vector<16x32xf32>
    %17 = tpu.matmul %0, %16, %cst_13 {dimension_numbers = #tpu.dot_dimension_numbers<[1], [0], [0], [1], [0, 0, 1, 1], [], []>} : vector<16x32xf32>, vector<32x32xf32>, vector<16x32xf32> -> vector<16x32xf32>
    %c2_14 = arith.constant 2 : index
    %c0_15 = arith.constant 0 : index
    %18 = vector.load %arg2[%c2_14, %c0_15] : memref<4x32xf32, #tpu.memory_space<vmem>>, vector<1x32xf32>
    %19 = vector.broadcast %18 : vector<1x32xf32> to vector<16x32xf32>
    %20 = arith.addf %17, %19 : vector<16x32xf32>
    %21 = vector.shape_cast %20 : vector<16x32xf32> to vector<2x8x32xf32>
    %c3 = arith.constant 3 : index
    %c0_16 = arith.constant 0 : index
    %c0_17 = arith.constant 0 : index
    %22 = vector.load %arg1[%c3, %c0_16, %c0_17] : memref<6x32x32xf32, #tpu.memory_space<vmem>>, vector<1x32x32xf32>
    %23 = vector.shape_cast %22 : vector<1x32x32xf32> to vector<32x32xf32>
    %c4 = arith.constant 4 : index
    %c0_18 = arith.constant 0 : index
    %c0_19 = arith.constant 0 : index
    %24 = vector.load %arg1[%c4, %c0_18, %c0_19] : memref<6x32x32xf32, #tpu.memory_space<vmem>>, vector<1x32x32xf32>
    %25 = vector.shape_cast %24 : vector<1x32x32xf32> to vector<32x32xf32>
    %c5 = arith.constant 5 : index
    %c0_20 = arith.constant 0 : index
    %c0_21 = arith.constant 0 : index
    %26 = vector.load %arg1[%c5, %c0_20, %c0_21] : memref<6x32x32xf32, #tpu.memory_space<vmem>>, vector<1x32x32xf32>
    %27 = vector.shape_cast %26 : vector<1x32x32xf32> to vector<32x32xf32>
    %c3_22 = arith.constant 3 : index
    %c0_23 = arith.constant 0 : index
    %28 = vector.load %arg2[%c3_22, %c0_23] : memref<4x32xf32, #tpu.memory_space<vmem>>, vector<1x32xf32>
    %cst_24 = arith.constant 0.000000e+00 : f32
    %29 = vector.broadcast %cst_24 : f32 to vector<2x32xf32>
    %cst_25 = arith.constant dense<0.000000e+00> : vector<2x32xf32>
    %30 = tpu.matmul %29, %23, %cst_25 {dimension_numbers = #tpu.dot_dimension_numbers<[1], [0], [0], [1], [0, 0, 1, 1], [], []>} : vector<2x32xf32>, vector<32x32xf32>, vector<2x32xf32> -> vector<2x32xf32>
    %cst_26 = arith.constant dense<0.000000e+00> : vector<2x32xf32>
    %31 = tpu.matmul %29, %25, %cst_26 {dimension_numbers = #tpu.dot_dimension_numbers<[1], [0], [0], [1], [0, 0, 1, 1], [], []>} : vector<2x32xf32>, vector<32x32xf32>, vector<2x32xf32> -> vector<2x32xf32>
    %cst_27 = arith.constant dense<0.000000e+00> : vector<2x32xf32>
    %32 = tpu.matmul %29, %27, %cst_27 {dimension_numbers = #tpu.dot_dimension_numbers<[1], [0], [0], [1], [0, 0, 1, 1], [], []>} : vector<2x32xf32>, vector<32x32xf32>, vector<2x32xf32> -> vector<2x32xf32>
    %33 = vector.broadcast %28 : vector<1x32xf32> to vector<2x32xf32>
    %34 = arith.addf %32, %33 : vector<2x32xf32>
    %35 = vector.extract_strided_slice %7 {offsets = [0, 0, 0], sizes = [2, 1, 32], strides = [1, 1, 1]} : vector<2x8x32xf32> to vector<2x1x32xf32>
    %36 = vector.shape_cast %35 : vector<2x1x32xf32> to vector<2x32xf32>
    %37 = arith.addf %36, %30 : vector<2x32xf32>
    %38 = arith.negf %37 : vector<2x32xf32>
    %39 = math.exp %38 : vector<2x32xf32>
    %cst_28 = arith.constant 1.000000e+00 : f32
    %40 = vector.broadcast %cst_28 : f32 to vector<2x32xf32>
    %41 = arith.addf %40, %39 : vector<2x32xf32>
    %42 = arith.divf %40, %41 : vector<2x32xf32>
    %43 = vector.extract_strided_slice %14 {offsets = [0, 0, 0], sizes = [2, 1, 32], strides = [1, 1, 1]} : vector<2x8x32xf32> to vector<2x1x32xf32>
    %44 = vector.shape_cast %43 : vector<2x1x32xf32> to vector<2x32xf32>
    %45 = arith.addf %44, %31 : vector<2x32xf32>
    %46 = arith.negf %45 : vector<2x32xf32>
    %47 = math.exp %46 : vector<2x32xf32>
    %cst_29 = arith.constant 1.000000e+00 : f32
    %48 = vector.broadcast %cst_29 : f32 to vector<2x32xf32>
    %49 = arith.addf %48, %47 : vector<2x32xf32>
    %50 = arith.divf %48, %49 : vector<2x32xf32>
    %51 = vector.extract_strided_slice %21 {offsets = [0, 0, 0], sizes = [2, 1, 32], strides = [1, 1, 1]} : vector<2x8x32xf32> to vector<2x1x32xf32>
    %52 = vector.shape_cast %51 : vector<2x1x32xf32> to vector<2x32xf32>
    %53 = arith.mulf %42, %34 : vector<2x32xf32>
    %54 = arith.addf %52, %53 : vector<2x32xf32>
    %55 = math.tanh %54 : vector<2x32xf32>
    %cst_30 = arith.constant 1.000000e+00 : f32
    %56 = vector.broadcast %cst_30 : f32 to vector<2x32xf32>
    %57 = arith.subf %56, %50 : vector<2x32xf32>
    %58 = arith.mulf %57, %55 : vector<2x32xf32>
    %59 = arith.mulf %50, %29 : vector<2x32xf32>
    %60 = arith.addf %58, %59 : vector<2x32xf32>
    %cst_31 = arith.constant dense<0.000000e+00> : vector<2x32xf32>
    %61 = tpu.matmul %60, %23, %cst_31 {dimension_numbers = #tpu.dot_dimension_numbers<[1], [0], [0], [1], [0, 0, 1, 1], [], []>} : vector<2x32xf32>, vector<32x32xf32>, vector<2x32xf32> -> vector<2x32xf32>
    %cst_32 = arith.constant dense<0.000000e+00> : vector<2x32xf32>
    %62 = tpu.matmul %60, %25, %cst_32 {dimension_numbers = #tpu.dot_dimension_numbers<[1], [0], [0], [1], [0, 0, 1, 1], [], []>} : vector<2x32xf32>, vector<32x32xf32>, vector<2x32xf32> -> vector<2x32xf32>
    %cst_33 = arith.constant dense<0.000000e+00> : vector<2x32xf32>
    %63 = tpu.matmul %60, %27, %cst_33 {dimension_numbers = #tpu.dot_dimension_numbers<[1], [0], [0], [1], [0, 0, 1, 1], [], []>} : vector<2x32xf32>, vector<32x32xf32>, vector<2x32xf32> -> vector<2x32xf32>
    %64 = vector.broadcast %28 : vector<1x32xf32> to vector<2x32xf32>
    %65 = arith.addf %63, %64 : vector<2x32xf32>
    %66 = vector.extract_strided_slice %7 {offsets = [0, 1, 0], sizes = [2, 1, 32], strides = [1, 1, 1]} : vector<2x8x32xf32> to vector<2x1x32xf32>
    %67 = vector.shape_cast %66 : vector<2x1x32xf32> to vector<2x32xf32>
    %68 = arith.addf %67, %61 : vector<2x32xf32>
    %69 = arith.negf %68 : vector<2x32xf32>
    %70 = math.exp %69 : vector<2x32xf32>
    %cst_34 = arith.constant 1.000000e+00 : f32
    %71 = vector.broadcast %cst_34 : f32 to vector<2x32xf32>
    %72 = arith.addf %71, %70 : vector<2x32xf32>
    %73 = arith.divf %71, %72 : vector<2x32xf32>
    %74 = vector.extract_strided_slice %14 {offsets = [0, 1, 0], sizes = [2, 1, 32], strides = [1, 1, 1]} : vector<2x8x32xf32> to vector<2x1x32xf32>
    %75 = vector.shape_cast %74 : vector<2x1x32xf32> to vector<2x32xf32>
    %76 = arith.addf %75, %62 : vector<2x32xf32>
    %77 = arith.negf %76 : vector<2x32xf32>
    %78 = math.exp %77 : vector<2x32xf32>
    %cst_35 = arith.constant 1.000000e+00 : f32
    %79 = vector.broadcast %cst_35 : f32 to vector<2x32xf32>
    %80 = arith.addf %79, %78 : vector<2x32xf32>
    %81 = arith.divf %79, %80 : vector<2x32xf32>
    %82 = vector.extract_strided_slice %21 {offsets = [0, 1, 0], sizes = [2, 1, 32], strides = [1, 1, 1]} : vector<2x8x32xf32> to vector<2x1x32xf32>
    %83 = vector.shape_cast %82 : vector<2x1x32xf32> to vector<2x32xf32>
    %84 = arith.mulf %73, %65 : vector<2x32xf32>
    %85 = arith.addf %83, %84 : vector<2x32xf32>
    %86 = math.tanh %85 : vector<2x32xf32>
    %cst_36 = arith.constant 1.000000e+00 : f32
    %87 = vector.broadcast %cst_36 : f32 to vector<2x32xf32>
    %88 = arith.subf %87, %81 : vector<2x32xf32>
    %89 = arith.mulf %88, %86 : vector<2x32xf32>
    %90 = arith.mulf %81, %60 : vector<2x32xf32>
    %91 = arith.addf %89, %90 : vector<2x32xf32>
    %cst_37 = arith.constant dense<0.000000e+00> : vector<2x32xf32>
    %92 = tpu.matmul %91, %23, %cst_37 {dimension_numbers = #tpu.dot_dimension_numbers<[1], [0], [0], [1], [0, 0, 1, 1], [], []>} : vector<2x32xf32>, vector<32x32xf32>, vector<2x32xf32> -> vector<2x32xf32>
    %cst_38 = arith.constant dense<0.000000e+00> : vector<2x32xf32>
    %93 = tpu.matmul %91, %25, %cst_38 {dimension_numbers = #tpu.dot_dimension_numbers<[1], [0], [0], [1], [0, 0, 1, 1], [], []>} : vector<2x32xf32>, vector<32x32xf32>, vector<2x32xf32> -> vector<2x32xf32>
    %cst_39 = arith.constant dense<0.000000e+00> : vector<2x32xf32>
    %94 = tpu.matmul %91, %27, %cst_39 {dimension_numbers = #tpu.dot_dimension_numbers<[1], [0], [0], [1], [0, 0, 1, 1], [], []>} : vector<2x32xf32>, vector<32x32xf32>, vector<2x32xf32> -> vector<2x32xf32>
    %95 = vector.broadcast %28 : vector<1x32xf32> to vector<2x32xf32>
    %96 = arith.addf %94, %95 : vector<2x32xf32>
    %97 = vector.extract_strided_slice %7 {offsets = [0, 2, 0], sizes = [2, 1, 32], strides = [1, 1, 1]} : vector<2x8x32xf32> to vector<2x1x32xf32>
    %98 = vector.shape_cast %97 : vector<2x1x32xf32> to vector<2x32xf32>
    %99 = arith.addf %98, %92 : vector<2x32xf32>
    %100 = arith.negf %99 : vector<2x32xf32>
    %101 = math.exp %100 : vector<2x32xf32>
    %cst_40 = arith.constant 1.000000e+00 : f32
    %102 = vector.broadcast %cst_40 : f32 to vector<2x32xf32>
    %103 = arith.addf %102, %101 : vector<2x32xf32>
    %104 = arith.divf %102, %103 : vector<2x32xf32>
    %105 = vector.extract_strided_slice %14 {offsets = [0, 2, 0], sizes = [2, 1, 32], strides = [1, 1, 1]} : vector<2x8x32xf32> to vector<2x1x32xf32>
    %106 = vector.shape_cast %105 : vector<2x1x32xf32> to vector<2x32xf32>
    %107 = arith.addf %106, %93 : vector<2x32xf32>
    %108 = arith.negf %107 : vector<2x32xf32>
    %109 = math.exp %108 : vector<2x32xf32>
    %cst_41 = arith.constant 1.000000e+00 : f32
    %110 = vector.broadcast %cst_41 : f32 to vector<2x32xf32>
    %111 = arith.addf %110, %109 : vector<2x32xf32>
    %112 = arith.divf %110, %111 : vector<2x32xf32>
    %113 = vector.extract_strided_slice %21 {offsets = [0, 2, 0], sizes = [2, 1, 32], strides = [1, 1, 1]} : vector<2x8x32xf32> to vector<2x1x32xf32>
    %114 = vector.shape_cast %113 : vector<2x1x32xf32> to vector<2x32xf32>
    %115 = arith.mulf %104, %96 : vector<2x32xf32>
    %116 = arith.addf %114, %115 : vector<2x32xf32>
    %117 = math.tanh %116 : vector<2x32xf32>
    %cst_42 = arith.constant 1.000000e+00 : f32
    %118 = vector.broadcast %cst_42 : f32 to vector<2x32xf32>
    %119 = arith.subf %118, %112 : vector<2x32xf32>
    %120 = arith.mulf %119, %117 : vector<2x32xf32>
    %121 = arith.mulf %112, %91 : vector<2x32xf32>
    %122 = arith.addf %120, %121 : vector<2x32xf32>
    %cst_43 = arith.constant dense<0.000000e+00> : vector<2x32xf32>
    %123 = tpu.matmul %122, %23, %cst_43 {dimension_numbers = #tpu.dot_dimension_numbers<[1], [0], [0], [1], [0, 0, 1, 1], [], []>} : vector<2x32xf32>, vector<32x32xf32>, vector<2x32xf32> -> vector<2x32xf32>
    %cst_44 = arith.constant dense<0.000000e+00> : vector<2x32xf32>
    %124 = tpu.matmul %122, %25, %cst_44 {dimension_numbers = #tpu.dot_dimension_numbers<[1], [0], [0], [1], [0, 0, 1, 1], [], []>} : vector<2x32xf32>, vector<32x32xf32>, vector<2x32xf32> -> vector<2x32xf32>
    %cst_45 = arith.constant dense<0.000000e+00> : vector<2x32xf32>
    %125 = tpu.matmul %122, %27, %cst_45 {dimension_numbers = #tpu.dot_dimension_numbers<[1], [0], [0], [1], [0, 0, 1, 1], [], []>} : vector<2x32xf32>, vector<32x32xf32>, vector<2x32xf32> -> vector<2x32xf32>
    %126 = vector.broadcast %28 : vector<1x32xf32> to vector<2x32xf32>
    %127 = arith.addf %125, %126 : vector<2x32xf32>
    %128 = vector.extract_strided_slice %7 {offsets = [0, 3, 0], sizes = [2, 1, 32], strides = [1, 1, 1]} : vector<2x8x32xf32> to vector<2x1x32xf32>
    %129 = vector.shape_cast %128 : vector<2x1x32xf32> to vector<2x32xf32>
    %130 = arith.addf %129, %123 : vector<2x32xf32>
    %131 = arith.negf %130 : vector<2x32xf32>
    %132 = math.exp %131 : vector<2x32xf32>
    %cst_46 = arith.constant 1.000000e+00 : f32
    %133 = vector.broadcast %cst_46 : f32 to vector<2x32xf32>
    %134 = arith.addf %133, %132 : vector<2x32xf32>
    %135 = arith.divf %133, %134 : vector<2x32xf32>
    %136 = vector.extract_strided_slice %14 {offsets = [0, 3, 0], sizes = [2, 1, 32], strides = [1, 1, 1]} : vector<2x8x32xf32> to vector<2x1x32xf32>
    %137 = vector.shape_cast %136 : vector<2x1x32xf32> to vector<2x32xf32>
    %138 = arith.addf %137, %124 : vector<2x32xf32>
    %139 = arith.negf %138 : vector<2x32xf32>
    %140 = math.exp %139 : vector<2x32xf32>
    %cst_47 = arith.constant 1.000000e+00 : f32
    %141 = vector.broadcast %cst_47 : f32 to vector<2x32xf32>
    %142 = arith.addf %141, %140 : vector<2x32xf32>
    %143 = arith.divf %141, %142 : vector<2x32xf32>
    %144 = vector.extract_strided_slice %21 {offsets = [0, 3, 0], sizes = [2, 1, 32], strides = [1, 1, 1]} : vector<2x8x32xf32> to vector<2x1x32xf32>
    %145 = vector.shape_cast %144 : vector<2x1x32xf32> to vector<2x32xf32>
    %146 = arith.mulf %135, %127 : vector<2x32xf32>
    %147 = arith.addf %145, %146 : vector<2x32xf32>
    %148 = math.tanh %147 : vector<2x32xf32>
    %cst_48 = arith.constant 1.000000e+00 : f32
    %149 = vector.broadcast %cst_48 : f32 to vector<2x32xf32>
    %150 = arith.subf %149, %143 : vector<2x32xf32>
    %151 = arith.mulf %150, %148 : vector<2x32xf32>
    %152 = arith.mulf %143, %122 : vector<2x32xf32>
    %153 = arith.addf %151, %152 : vector<2x32xf32>
    %cst_49 = arith.constant dense<0.000000e+00> : vector<2x32xf32>
    %154 = tpu.matmul %153, %23, %cst_49 {dimension_numbers = #tpu.dot_dimension_numbers<[1], [0], [0], [1], [0, 0, 1, 1], [], []>} : vector<2x32xf32>, vector<32x32xf32>, vector<2x32xf32> -> vector<2x32xf32>
    %cst_50 = arith.constant dense<0.000000e+00> : vector<2x32xf32>
    %155 = tpu.matmul %153, %25, %cst_50 {dimension_numbers = #tpu.dot_dimension_numbers<[1], [0], [0], [1], [0, 0, 1, 1], [], []>} : vector<2x32xf32>, vector<32x32xf32>, vector<2x32xf32> -> vector<2x32xf32>
    %cst_51 = arith.constant dense<0.000000e+00> : vector<2x32xf32>
    %156 = tpu.matmul %153, %27, %cst_51 {dimension_numbers = #tpu.dot_dimension_numbers<[1], [0], [0], [1], [0, 0, 1, 1], [], []>} : vector<2x32xf32>, vector<32x32xf32>, vector<2x32xf32> -> vector<2x32xf32>
    %157 = vector.broadcast %28 : vector<1x32xf32> to vector<2x32xf32>
    %158 = arith.addf %156, %157 : vector<2x32xf32>
    %159 = vector.extract_strided_slice %7 {offsets = [0, 4, 0], sizes = [2, 1, 32], strides = [1, 1, 1]} : vector<2x8x32xf32> to vector<2x1x32xf32>
    %160 = vector.shape_cast %159 : vector<2x1x32xf32> to vector<2x32xf32>
    %161 = arith.addf %160, %154 : vector<2x32xf32>
    %162 = arith.negf %161 : vector<2x32xf32>
    %163 = math.exp %162 : vector<2x32xf32>
    %cst_52 = arith.constant 1.000000e+00 : f32
    %164 = vector.broadcast %cst_52 : f32 to vector<2x32xf32>
    %165 = arith.addf %164, %163 : vector<2x32xf32>
    %166 = arith.divf %164, %165 : vector<2x32xf32>
    %167 = vector.extract_strided_slice %14 {offsets = [0, 4, 0], sizes = [2, 1, 32], strides = [1, 1, 1]} : vector<2x8x32xf32> to vector<2x1x32xf32>
    %168 = vector.shape_cast %167 : vector<2x1x32xf32> to vector<2x32xf32>
    %169 = arith.addf %168, %155 : vector<2x32xf32>
    %170 = arith.negf %169 : vector<2x32xf32>
    %171 = math.exp %170 : vector<2x32xf32>
    %cst_53 = arith.constant 1.000000e+00 : f32
    %172 = vector.broadcast %cst_53 : f32 to vector<2x32xf32>
    %173 = arith.addf %172, %171 : vector<2x32xf32>
    %174 = arith.divf %172, %173 : vector<2x32xf32>
    %175 = vector.extract_strided_slice %21 {offsets = [0, 4, 0], sizes = [2, 1, 32], strides = [1, 1, 1]} : vector<2x8x32xf32> to vector<2x1x32xf32>
    %176 = vector.shape_cast %175 : vector<2x1x32xf32> to vector<2x32xf32>
    %177 = arith.mulf %166, %158 : vector<2x32xf32>
    %178 = arith.addf %176, %177 : vector<2x32xf32>
    %179 = math.tanh %178 : vector<2x32xf32>
    %cst_54 = arith.constant 1.000000e+00 : f32
    %180 = vector.broadcast %cst_54 : f32 to vector<2x32xf32>
    %181 = arith.subf %180, %174 : vector<2x32xf32>
    %182 = arith.mulf %181, %179 : vector<2x32xf32>
    %183 = arith.mulf %174, %153 : vector<2x32xf32>
    %184 = arith.addf %182, %183 : vector<2x32xf32>
    %cst_55 = arith.constant dense<0.000000e+00> : vector<2x32xf32>
    %185 = tpu.matmul %184, %23, %cst_55 {dimension_numbers = #tpu.dot_dimension_numbers<[1], [0], [0], [1], [0, 0, 1, 1], [], []>} : vector<2x32xf32>, vector<32x32xf32>, vector<2x32xf32> -> vector<2x32xf32>
    %cst_56 = arith.constant dense<0.000000e+00> : vector<2x32xf32>
    %186 = tpu.matmul %184, %25, %cst_56 {dimension_numbers = #tpu.dot_dimension_numbers<[1], [0], [0], [1], [0, 0, 1, 1], [], []>} : vector<2x32xf32>, vector<32x32xf32>, vector<2x32xf32> -> vector<2x32xf32>
    %cst_57 = arith.constant dense<0.000000e+00> : vector<2x32xf32>
    %187 = tpu.matmul %184, %27, %cst_57 {dimension_numbers = #tpu.dot_dimension_numbers<[1], [0], [0], [1], [0, 0, 1, 1], [], []>} : vector<2x32xf32>, vector<32x32xf32>, vector<2x32xf32> -> vector<2x32xf32>
    %188 = vector.broadcast %28 : vector<1x32xf32> to vector<2x32xf32>
    %189 = arith.addf %187, %188 : vector<2x32xf32>
    %190 = vector.extract_strided_slice %7 {offsets = [0, 5, 0], sizes = [2, 1, 32], strides = [1, 1, 1]} : vector<2x8x32xf32> to vector<2x1x32xf32>
    %191 = vector.shape_cast %190 : vector<2x1x32xf32> to vector<2x32xf32>
    %192 = arith.addf %191, %185 : vector<2x32xf32>
    %193 = arith.negf %192 : vector<2x32xf32>
    %194 = math.exp %193 : vector<2x32xf32>
    %cst_58 = arith.constant 1.000000e+00 : f32
    %195 = vector.broadcast %cst_58 : f32 to vector<2x32xf32>
    %196 = arith.addf %195, %194 : vector<2x32xf32>
    %197 = arith.divf %195, %196 : vector<2x32xf32>
    %198 = vector.extract_strided_slice %14 {offsets = [0, 5, 0], sizes = [2, 1, 32], strides = [1, 1, 1]} : vector<2x8x32xf32> to vector<2x1x32xf32>
    %199 = vector.shape_cast %198 : vector<2x1x32xf32> to vector<2x32xf32>
    %200 = arith.addf %199, %186 : vector<2x32xf32>
    %201 = arith.negf %200 : vector<2x32xf32>
    %202 = math.exp %201 : vector<2x32xf32>
    %cst_59 = arith.constant 1.000000e+00 : f32
    %203 = vector.broadcast %cst_59 : f32 to vector<2x32xf32>
    %204 = arith.addf %203, %202 : vector<2x32xf32>
    %205 = arith.divf %203, %204 : vector<2x32xf32>
    %206 = vector.extract_strided_slice %21 {offsets = [0, 5, 0], sizes = [2, 1, 32], strides = [1, 1, 1]} : vector<2x8x32xf32> to vector<2x1x32xf32>
    %207 = vector.shape_cast %206 : vector<2x1x32xf32> to vector<2x32xf32>
    %208 = arith.mulf %197, %189 : vector<2x32xf32>
    %209 = arith.addf %207, %208 : vector<2x32xf32>
    %210 = math.tanh %209 : vector<2x32xf32>
    %cst_60 = arith.constant 1.000000e+00 : f32
    %211 = vector.broadcast %cst_60 : f32 to vector<2x32xf32>
    %212 = arith.subf %211, %205 : vector<2x32xf32>
    %213 = arith.mulf %212, %210 : vector<2x32xf32>
    %214 = arith.mulf %205, %184 : vector<2x32xf32>
    %215 = arith.addf %213, %214 : vector<2x32xf32>
    %cst_61 = arith.constant dense<0.000000e+00> : vector<2x32xf32>
    %216 = tpu.matmul %215, %23, %cst_61 {dimension_numbers = #tpu.dot_dimension_numbers<[1], [0], [0], [1], [0, 0, 1, 1], [], []>} : vector<2x32xf32>, vector<32x32xf32>, vector<2x32xf32> -> vector<2x32xf32>
    %cst_62 = arith.constant dense<0.000000e+00> : vector<2x32xf32>
    %217 = tpu.matmul %215, %25, %cst_62 {dimension_numbers = #tpu.dot_dimension_numbers<[1], [0], [0], [1], [0, 0, 1, 1], [], []>} : vector<2x32xf32>, vector<32x32xf32>, vector<2x32xf32> -> vector<2x32xf32>
    %cst_63 = arith.constant dense<0.000000e+00> : vector<2x32xf32>
    %218 = tpu.matmul %215, %27, %cst_63 {dimension_numbers = #tpu.dot_dimension_numbers<[1], [0], [0], [1], [0, 0, 1, 1], [], []>} : vector<2x32xf32>, vector<32x32xf32>, vector<2x32xf32> -> vector<2x32xf32>
    %219 = vector.broadcast %28 : vector<1x32xf32> to vector<2x32xf32>
    %220 = arith.addf %218, %219 : vector<2x32xf32>
    %221 = vector.extract_strided_slice %7 {offsets = [0, 6, 0], sizes = [2, 1, 32], strides = [1, 1, 1]} : vector<2x8x32xf32> to vector<2x1x32xf32>
    %222 = vector.shape_cast %221 : vector<2x1x32xf32> to vector<2x32xf32>
    %223 = arith.addf %222, %216 : vector<2x32xf32>
    %224 = arith.negf %223 : vector<2x32xf32>
    %225 = math.exp %224 : vector<2x32xf32>
    %cst_64 = arith.constant 1.000000e+00 : f32
    %226 = vector.broadcast %cst_64 : f32 to vector<2x32xf32>
    %227 = arith.addf %226, %225 : vector<2x32xf32>
    %228 = arith.divf %226, %227 : vector<2x32xf32>
    %229 = vector.extract_strided_slice %14 {offsets = [0, 6, 0], sizes = [2, 1, 32], strides = [1, 1, 1]} : vector<2x8x32xf32> to vector<2x1x32xf32>
    %230 = vector.shape_cast %229 : vector<2x1x32xf32> to vector<2x32xf32>
    %231 = arith.addf %230, %217 : vector<2x32xf32>
    %232 = arith.negf %231 : vector<2x32xf32>
    %233 = math.exp %232 : vector<2x32xf32>
    %cst_65 = arith.constant 1.000000e+00 : f32
    %234 = vector.broadcast %cst_65 : f32 to vector<2x32xf32>
    %235 = arith.addf %234, %233 : vector<2x32xf32>
    %236 = arith.divf %234, %235 : vector<2x32xf32>
    %237 = vector.extract_strided_slice %21 {offsets = [0, 6, 0], sizes = [2, 1, 32], strides = [1, 1, 1]} : vector<2x8x32xf32> to vector<2x1x32xf32>
    %238 = vector.shape_cast %237 : vector<2x1x32xf32> to vector<2x32xf32>
    %239 = arith.mulf %228, %220 : vector<2x32xf32>
    %240 = arith.addf %238, %239 : vector<2x32xf32>
    %241 = math.tanh %240 : vector<2x32xf32>
    %cst_66 = arith.constant 1.000000e+00 : f32
    %242 = vector.broadcast %cst_66 : f32 to vector<2x32xf32>
    %243 = arith.subf %242, %236 : vector<2x32xf32>
    %244 = arith.mulf %243, %241 : vector<2x32xf32>
    %245 = arith.mulf %236, %215 : vector<2x32xf32>
    %246 = arith.addf %244, %245 : vector<2x32xf32>
    %cst_67 = arith.constant dense<0.000000e+00> : vector<2x32xf32>
    %247 = tpu.matmul %246, %23, %cst_67 {dimension_numbers = #tpu.dot_dimension_numbers<[1], [0], [0], [1], [0, 0, 1, 1], [], []>} : vector<2x32xf32>, vector<32x32xf32>, vector<2x32xf32> -> vector<2x32xf32>
    %cst_68 = arith.constant dense<0.000000e+00> : vector<2x32xf32>
    %248 = tpu.matmul %246, %25, %cst_68 {dimension_numbers = #tpu.dot_dimension_numbers<[1], [0], [0], [1], [0, 0, 1, 1], [], []>} : vector<2x32xf32>, vector<32x32xf32>, vector<2x32xf32> -> vector<2x32xf32>
    %cst_69 = arith.constant dense<0.000000e+00> : vector<2x32xf32>
    %249 = tpu.matmul %246, %27, %cst_69 {dimension_numbers = #tpu.dot_dimension_numbers<[1], [0], [0], [1], [0, 0, 1, 1], [], []>} : vector<2x32xf32>, vector<32x32xf32>, vector<2x32xf32> -> vector<2x32xf32>
    %250 = vector.broadcast %28 : vector<1x32xf32> to vector<2x32xf32>
    %251 = arith.addf %249, %250 : vector<2x32xf32>
    %252 = vector.extract_strided_slice %7 {offsets = [0, 7, 0], sizes = [2, 1, 32], strides = [1, 1, 1]} : vector<2x8x32xf32> to vector<2x1x32xf32>
    %253 = vector.shape_cast %252 : vector<2x1x32xf32> to vector<2x32xf32>
    %254 = arith.addf %253, %247 : vector<2x32xf32>
    %255 = arith.negf %254 : vector<2x32xf32>
    %256 = math.exp %255 : vector<2x32xf32>
    %cst_70 = arith.constant 1.000000e+00 : f32
    %257 = vector.broadcast %cst_70 : f32 to vector<2x32xf32>
    %258 = arith.addf %257, %256 : vector<2x32xf32>
    %259 = arith.divf %257, %258 : vector<2x32xf32>
    %260 = vector.extract_strided_slice %14 {offsets = [0, 7, 0], sizes = [2, 1, 32], strides = [1, 1, 1]} : vector<2x8x32xf32> to vector<2x1x32xf32>
    %261 = vector.shape_cast %260 : vector<2x1x32xf32> to vector<2x32xf32>
    %262 = arith.addf %261, %248 : vector<2x32xf32>
    %263 = arith.negf %262 : vector<2x32xf32>
    %264 = math.exp %263 : vector<2x32xf32>
    %cst_71 = arith.constant 1.000000e+00 : f32
    %265 = vector.broadcast %cst_71 : f32 to vector<2x32xf32>
    %266 = arith.addf %265, %264 : vector<2x32xf32>
    %267 = arith.divf %265, %266 : vector<2x32xf32>
    %268 = vector.extract_strided_slice %21 {offsets = [0, 7, 0], sizes = [2, 1, 32], strides = [1, 1, 1]} : vector<2x8x32xf32> to vector<2x1x32xf32>
    %269 = vector.shape_cast %268 : vector<2x1x32xf32> to vector<2x32xf32>
    %270 = arith.mulf %259, %251 : vector<2x32xf32>
    %271 = arith.addf %269, %270 : vector<2x32xf32>
    %272 = math.tanh %271 : vector<2x32xf32>
    %cst_72 = arith.constant 1.000000e+00 : f32
    %273 = vector.broadcast %cst_72 : f32 to vector<2x32xf32>
    %274 = arith.subf %273, %267 : vector<2x32xf32>
    %275 = arith.mulf %274, %272 : vector<2x32xf32>
    %276 = arith.mulf %267, %246 : vector<2x32xf32>
    %277 = arith.addf %275, %276 : vector<2x32xf32>
    %c0_73 = arith.constant 0 : index
    %c0_74 = arith.constant 0 : index
    %278 = vector.load %arg5[%c0_73, %c0_74] : memref<2x32xf32, #tpu.memory_space<vmem>>, vector<2x32xf32>
    tpu.vector_store %arg5[%c0_73, %c0_74], %277 {strides = array<i32>} : memref<2x32xf32, #tpu.memory_space<vmem>>, vector<2x32xf32>,
    %279 = tpu.iota {dimensions = array<i32: 1>} : vector<2x8x32xi32>
    %cst_75 = arith.constant 0.000000e+00 : f32
    %280 = vector.broadcast %cst_75 : f32 to vector<2x8x32xf32>
    %c0_i32 = arith.constant 0 : i32
    %281 = vector.broadcast %c0_i32 : i32 to vector<2x8x32xi32>
    %282 = arith.cmpi eq, %279, %281 : vector<2x8x32xi32>
    %283 = vector.shape_cast %60 : vector<2x32xf32> to vector<2x1x32xf32>
    %284 = vector.shape_cast %283 : vector<2x1x32xf32> to vector<2x1x32xf32>
    %285 = vector.broadcast %284 : vector<2x1x32xf32> to vector<2x8x32xf32>
    %286 = arith.select %282, %285, %280 : vector<2x8x32xi1>, vector<2x8x32xf32>
    %c1_i32 = arith.constant 1 : i32
    %287 = vector.broadcast %c1_i32 : i32 to vector<2x8x32xi32>
    %288 = arith.cmpi eq, %279, %287 : vector<2x8x32xi32>
    %289 = vector.shape_cast %91 : vector<2x32xf32> to vector<2x1x32xf32>
    %290 = vector.shape_cast %289 : vector<2x1x32xf32> to vector<2x1x32xf32>
    %291 = vector.broadcast %290 : vector<2x1x32xf32> to vector<2x8x32xf32>
    %292 = arith.select %288, %291, %286 : vector<2x8x32xi1>, vector<2x8x32xf32>
    %c2_i32 = arith.constant 2 : i32
    %293 = vector.broadcast %c2_i32 : i32 to vector<2x8x32xi32>
    %294 = arith.cmpi eq, %279, %293 : vector<2x8x32xi32>
    %295 = vector.shape_cast %122 : vector<2x32xf32> to vector<2x1x32xf32>
    %296 = vector.shape_cast %295 : vector<2x1x32xf32> to vector<2x1x32xf32>
    %297 = vector.broadcast %296 : vector<2x1x32xf32> to vector<2x8x32xf32>
    %298 = arith.select %294, %297, %292 : vector<2x8x32xi1>, vector<2x8x32xf32>
    %c3_i32 = arith.constant 3 : i32
    %299 = vector.broadcast %c3_i32 : i32 to vector<2x8x32xi32>
    %300 = arith.cmpi eq, %279, %299 : vector<2x8x32xi32>
    %301 = vector.shape_cast %153 : vector<2x32xf32> to vector<2x1x32xf32>
    %302 = vector.shape_cast %301 : vector<2x1x32xf32> to vector<2x1x32xf32>
    %303 = vector.broadcast %302 : vector<2x1x32xf32> to vector<2x8x32xf32>
    %304 = arith.select %300, %303, %298 : vector<2x8x32xi1>, vector<2x8x32xf32>
    %c4_i32 = arith.constant 4 : i32
    %305 = vector.broadcast %c4_i32 : i32 to vector<2x8x32xi32>
    %306 = arith.cmpi eq, %279, %305 : vector<2x8x32xi32>
    %307 = vector.shape_cast %184 : vector<2x32xf32> to vector<2x1x32xf32>
    %308 = vector.shape_cast %307 : vector<2x1x32xf32> to vector<2x1x32xf32>
    %309 = vector.broadcast %308 : vector<2x1x32xf32> to vector<2x8x32xf32>
    %310 = arith.select %306, %309, %304 : vector<2x8x32xi1>, vector<2x8x32xf32>
    %c5_i32 = arith.constant 5 : i32
    %311 = vector.broadcast %c5_i32 : i32 to vector<2x8x32xi32>
    %312 = arith.cmpi eq, %279, %311 : vector<2x8x32xi32>
    %313 = vector.shape_cast %215 : vector<2x32xf32> to vector<2x1x32xf32>
    %314 = vector.shape_cast %313 : vector<2x1x32xf32> to vector<2x1x32xf32>
    %315 = vector.broadcast %314 : vector<2x1x32xf32> to vector<2x8x32xf32>
    %316 = arith.select %312, %315, %310 : vector<2x8x32xi1>, vector<2x8x32xf32>
    %c6_i32 = arith.constant 6 : i32
    %317 = vector.broadcast %c6_i32 : i32 to vector<2x8x32xi32>
    %318 = arith.cmpi eq, %279, %317 : vector<2x8x32xi32>
    %319 = vector.shape_cast %246 : vector<2x32xf32> to vector<2x1x32xf32>
    %320 = vector.shape_cast %319 : vector<2x1x32xf32> to vector<2x1x32xf32>
    %321 = vector.broadcast %320 : vector<2x1x32xf32> to vector<2x8x32xf32>
    %322 = arith.select %318, %321, %316 : vector<2x8x32xi1>, vector<2x8x32xf32>
    %c7_i32 = arith.constant 7 : i32
    %323 = vector.broadcast %c7_i32 : i32 to vector<2x8x32xi32>
    %324 = arith.cmpi eq, %279, %323 : vector<2x8x32xi32>
    %325 = vector.shape_cast %277 : vector<2x32xf32> to vector<2x1x32xf32>
    %326 = vector.shape_cast %325 : vector<2x1x32xf32> to vector<2x1x32xf32>
    %327 = vector.broadcast %326 : vector<2x1x32xf32> to vector<2x8x32xf32>
    %328 = arith.select %324, %327, %322 : vector<2x8x32xi1>, vector<2x8x32xf32>
    %329 = vector.shape_cast %328 : vector<2x8x32xf32> to vector<16x32xf32>
    %c0_76 = arith.constant 0 : index
    %c0_77 = arith.constant 0 : index
    %330 = vector.load %arg3[%c0_76, %c0_77] : memref<33x16xf32, #tpu.memory_space<vmem>>, vector<32x16xf32>
    %cst_78 = arith.constant dense<0.000000e+00> : vector<16x16xf32>
    %331 = tpu.matmul %329, %330, %cst_78 {dimension_numbers = #tpu.dot_dimension_numbers<[1], [0], [0], [1], [0, 0, 1, 1], [], []>} : vector<16x32xf32>, vector<32x16xf32>, vector<16x16xf32> -> vector<16x16xf32>
    %c32 = arith.constant 32 : index
    %c0_79 = arith.constant 0 : index
    %332 = vector.load %arg3[%c32, %c0_79] : memref<33x16xf32, #tpu.memory_space<vmem>>, vector<1x16xf32>
    %333 = vector.broadcast %332 : vector<1x16xf32> to vector<16x16xf32>
    %334 = arith.addf %331, %333 : vector<16x16xf32>
    %c0_80 = arith.constant 0 : index
    %c0_81 = arith.constant 0 : index
    %335 = vector.load %arg4[%c0_80, %c0_81] : memref<16x16xf32, #tpu.memory_space<vmem>>, vector<16x16xf32>
    tpu.vector_store %arg4[%c0_80, %c0_81], %334 {strides = array<i32>} : memref<16x16xf32, #tpu.memory_space<vmem>>, vector<16x16xf32>,
    return
  }
}

</mosaic_0001>

<llo_original>
// kernel: decoder_rnn_forward.1
$region0: #{decoder_rnn_forward.1}
  #allocation0 [shape = 'u32[]', space=smem, size = 0x4, offset = 0x4, fixed_abs, tag = 'smem constant byte address 0x4 - core index']
  #allocation1 [shape = 'u32[144,128]{1,0:T(1,128)}', space=vmem, size = 0x12000, scoped, tag = 'internal scratch']
  %s0 = inlined_call_operand.vmem [shape: f32[16,32], index: 0, kind: input, shape index: {}]
  %s1 = inlined_call_operand.hbm [shape: f32[6,32,32], index: 1, kind: input, shape index: {}]
  %s2 = inlined_call_operand.vmem [shape: f32[4,32], index: 2, kind: input, shape index: {}]
  %s3 = inlined_call_operand.vmem [shape: f32[33,16], index: 3, kind: input, shape index: {}]
  %s4 = inlined_call_operand.hbm [shape: f32[16,16], index: 4, kind: output, shape index: {0}]
  %s5 = inlined_call_operand.hbm [shape: f32[2,32], index: 5, kind: output, shape index: {1}]
  %6 = xla_tuple %s4, %s5
  %s7 = sld [smem:[#allocation0]]
  $region38: #{decoder_rnn_forward.1} parent=0
    _
  %s9 = ssub.s32 1, %s7
  %s10 = scalar_select 0, %s9, %s7
  $region1: #{decoder_rnn_forward.1} parent=0
    #allocation2 [shape = 'u8[98304]{0}', space=vmem, size = 0x18000, scoped, tag = 'input window, operand 1, single buffered']
    #allocation3 [shape = 's32[1]{0}', space=sflag, size = 0x4, scoped, tag = 'scoped memory for decoder_rnn_forward.1']
    #allocation4 [shape = 's32[1]{0}', space=sflag, size = 0x4, scoped, tag = 'scoped memory for decoder_rnn_forward.1']
    #allocation5 [shape = 'u8[8192]{0}', space=vmem, size = 0x2000, scoped, tag = 'output window, operand 0, single buffered']
    #allocation6 [shape = 'u8[1024]{0}', space=vmem, size = 0x400, scoped, tag = 'output window, operand 1, single buffered']
    #allocation7 [shape = 's32[1]{0}', space=sflag, size = 0x4, scoped, tag = 'scoped memory for decoder_rnn_forward.1']
    %11 = vsyncpa [#allocation3], 0
    %12 = vsyncpa [#allocation4], 0
    %13 = vsyncpa [#allocation7], 0
    // Predicated region
    $region2: #{decoder_rnn_forward.1} parent=1 // pred_check
      _
    $region3: #{decoder_rnn_forward.1} parent=1 // pred_check_branch
      %15 = sbr.rel (0) target = $region5
    $region4: #{decoder_rnn_forward.1} parent=1 // pred_region
      _
    $region5: #{decoder_rnn_forward.1} parent=1 // pred_fallthru
      _
    // Predicated region
    $region6: #{decoder_rnn_forward.1} parent=1 // pred_check
      _
    $region7: #{decoder_rnn_forward.1} parent=1 // pred_check_branch
      %17 = sbr.rel (0) target = $region9
    $region8: #{decoder_rnn_forward.1} parent=1 // pred_region
      %s19 = ssub.s32 3072, 3072
      %20 = vsyncadd [#allocation3], %s19
      %s21 = sshll.u32 [#allocation2], 4
      %s22 = int_to_ptr.vmem [resolvable:$true] %s21
      %27 = dma.hbm_to_vmem [thread:$0]  %s1, 3072, %s22, [#allocation3], 128, 128, 8
    $region9: #{decoder_rnn_forward.1} parent=1 // pred_fallthru
      _
    // Predicated region
    $region10: #{decoder_rnn_forward.1} parent=1 // pred_check
      _
    $region11: #{decoder_rnn_forward.1} parent=1 // pred_check_branch
      %29 = sbr.rel (0) target = $region13
    $region12: #{decoder_rnn_forward.1} parent=1 // pred_region
      _
    $region13: #{decoder_rnn_forward.1} parent=1 // pred_fallthru
      _
    // Predicated region
    $region14: #{decoder_rnn_forward.1} parent=1 // pred_check
      _
    $region15: #{decoder_rnn_forward.1} parent=1 // pred_check_branch
      %31 = sbr.rel (0) target = $region17
    $region16: #{decoder_rnn_forward.1} parent=1 // pred_region
      _
    $region17: #{decoder_rnn_forward.1} parent=1 // pred_fallthru
      _
    // Predicated region
    $region18: #{decoder_rnn_forward.1} parent=1 // pred_check
      _
    $region19: #{decoder_rnn_forward.1} parent=1 // pred_check_branch
      %33 = sbr.rel (0) target = $region21
    $region20: #{decoder_rnn_forward.1} parent=1 // pred_region
      %34 = dma.done [#allocation3], 3072
    $region21: #{decoder_rnn_forward.1} parent=1 // pred_fallthru
      _
    %v35 = vld [vmem:[%s0] sm:$0xff]
    %v36 = vld [vmem:[%s0 + $0x8] sm:$0xff]
    %v37 = vld [vmem:[#allocation2] sm:$0xff]
    %v38 = vld [vmem:[#allocation2 + $0x8] sm:$0xff]
    %v39 = vld [vmem:[#allocation2 + $0x10] sm:$0xff]
    %v40 = vld [vmem:[#allocation2 + $0x18] sm:$0xff]
    %v41 = vld [vmem:[%s2] sm:$0x1]
    %v42 = vlaneseq
    %v43 = vshrl.u32 %v42, 7
    %v44 = vsub.s32 0, %v43
    %v45 = vrot.slane %v41, %v44
    %vm46 = vcmask 261120
    %v48 = vsel %vm46, %v35, 0
    %v51 = vsel %vm46, %v36, 0
    %53 = vmatprep.subr.mxu0 0.0
    %54 = vmatpush1.msra.mxu0 0.0
    %55 = vmatprep.subr.mxu0 0.0
    %56 = vmatpush1.msra.mxu0 0.0
    %57 = vmatprep.subr.mxu0 0.0
    %58 = vmatpush1.msra.mxu0 0.0
    %59 = vmatprep.subr.mxu0 0.0
    %60 = vmatpush1.msra.mxu0 0.0
    %61 = vmatprep.subr.mxu0 0.0
    %62 = vmatpush1.msra.mxu0 0.0
    %63 = vmatprep.subr.mxu0 0.0
    %64 = vmatpush1.msra.mxu0 0.0
    %65 = vmatprep.subr.mxu0 0.0
    %66 = vmatpush1.msra.mxu0 0.0
    %67 = vmatprep.subr.mxu0 0.0
    %68 = vmatpush1.msra.mxu0 0.0
    %69 = vmatprep.subr.mxu0 0.0
    %70 = vmatpush1.msra.mxu0 0.0
    %71 = vmatprep.subr.mxu0 0.0
    %72 = vmatpush1.msra.mxu0 0.0
    %73 = vmatprep.subr.mxu0 0.0
    %74 = vmatpush1.msra.mxu0 0.0
    %75 = vmatprep.subr.mxu0 0.0
    %76 = vmatpush1.msra.mxu0 0.0
    %77 = vmatprep.subr.mxu0 0.0
    %78 = vmatpush1.msra.mxu0 %v40
    %79 = vmatprep.subr.mxu0 0.0
    %80 = vmatpush1.msra.mxu0 %v39
    %81 = vmatprep.subr.mxu0 0.0
    %82 = vmatpush1.msra.mxu0 %v38
    %83 = vmatprep.subr.mxu0 0.0
    %84 = vmatpush1.msra.mxu0 %v37
    %85 = vmatprep.subr.mxu0 0.0
    %86 = vmatpush2.msra.mxu0 0.0
    %87 = vmatprep.subr.mxu0 0.0
    %88 = vmatpush2.msra.mxu0 0.0
    %89 = vmatprep.subr.mxu0 0.0
    %90 = vmatpush2.msra.mxu0 0.0
    %91 = vmatprep.subr.mxu0 0.0
    %92 = vmatpush2.msra.mxu0 0.0
    %93 = vmatprep.subr.mxu0 0.0
    %94 = vmatpush2.msra.mxu0 0.0
    %95 = vmatprep.subr.mxu0 0.0
    %96 = vmatpush2.msra.mxu0 0.0
    %97 = vmatprep.subr.mxu0 0.0
    %98 = vmatpush2.msra.mxu0 0.0
    %99 = vmatprep.subr.mxu0 0.0
    %100 = vmatpush2.msra.mxu0 0.0
    %101 = vmatprep.subr.mxu0 0.0
    %102 = vmatpush2.msra.mxu0 0.0
    %103 = vmatprep.subr.mxu0 0.0
    %104 = vmatpush2.msra.mxu0 0.0
    %105 = vmatprep.subr.mxu0 0.0
    %106 = vmatpush2.msra.mxu0 0.0
    %107 = vmatprep.subr.mxu0 0.0
    %108 = vmatpush2.msra.mxu0 0.0
    %109 = vmatprep.subr.mxu0 0.0
    %110 = vmatpush2.msra.mxu0 0.0
    %111 = vmatprep.subr.mxu0 0.0
    %112 = vmatpush2.msra.mxu0 0.0
    %113 = vmatprep.subr.mxu0 0.0
    %114 = vmatpush2.msra.mxu0 0.0
    %115 = vmatprep.subr.mxu0 0.0
    %116 = vmatpush2.msra.mxu0 0.0
    %117 = vmatprep.mubr.f32.mxu0 0.0
    %118 = vmatmul.mubr.f32.gmra.mxu0 %v48
    %v119 = vpop.f32.mrf.mxu0
    %v120 = vadd.f32 %v45, %v119
    %v121 = vpop.f32.mrf.mxu0
    %122 = vmatprep.mubr.f32.mxu0 0.0
    %123 = vmatmul.mubr.f32.gmra.mxu0 %v51
    %v124 = vpop.f32.mrf.mxu0
    %v125 = vadd.f32 %v45, %v124
    %v126 = vpop.f32.mrf.mxu0
    %127 = vdwg.mxu0
    %s128 = scalar_lea.vmem [#allocation2], 32
    %v129 = vld [vmem:[%s128] sm:$0xff]
    %v130 = vld [vmem:[%s128 + $0x8] sm:$0xff]
    %v131 = vld [vmem:[%s128 + $0x10] sm:$0xff]
    %v132 = vld [vmem:[%s128 + $0x18] sm:$0xff]
    %v133 = vld [vmem:[%s2 + $0x1] sm:$0x1]
    %v134 = vlaneseq
    %v135 = vshrl.u32 %v134, 7
    %v136 = vsub.s32 0, %v135
    %v137 = vrot.slane %v133, %v136
    %138 = vmatprep.subr.mxu0 0.0
    %139 = vmatpush1.msra.mxu0 0.0
    %140 = vmatprep.subr.mxu0 0.0
    %141 = vmatpush1.msra.mxu0 0.0
    %142 = vmatprep.subr.mxu0 0.0
    %143 = vmatpush1.msra.mxu0 0.0
    %144 = vmatprep.subr.mxu0 0.0
    %145 = vmatpush1.msra.mxu0 0.0
    %146 = vmatprep.subr.mxu0 0.0
    %147 = vmatpush1.msra.mxu0 0.0
    %148 = vmatprep.subr.mxu0 0.0
    %149 = vmatpush1.msra.mxu0 0.0
    %150 = vmatprep.subr.mxu0 0.0
    %151 = vmatpush1.msra.mxu0 0.0
    %152 = vmatprep.subr.mxu0 0.0
    %153 = vmatpush1.msra.mxu0 0.0
    %154 = vmatprep.subr.mxu0 0.0
    %155 = vmatpush1.msra.mxu0 0.0
    %156 = vmatprep.subr.mxu0 0.0
    %157 = vmatpush1.msra.mxu0 0.0
    %158 = vmatprep.subr.mxu0 0.0
    %159 = vmatpush1.msra.mxu0 0.0
    %160 = vmatprep.subr.mxu0 0.0
    %161 = vmatpush1.msra.mxu0 0.0
    %162 = vmatprep.subr.mxu0 0.0
    %163 = vmatpush1.msra.mxu0 %v132
    %164 = vmatprep.subr.mxu0 0.0
    %165 = vmatpush1.msra.mxu0 %v131
    %166 = vmatprep.subr.mxu0 0.0
    %167 = vmatpush1.msra.mxu0 %v130
    %168 = vmatprep.subr.mxu0 0.0
    %169 = vmatpush1.msra.mxu0 %v129
    %170 = vmatprep.subr.mxu0 0.0
    %171 = vmatpush2.msra.mxu0 0.0
    %172 = vmatprep.subr.mxu0 0.0
    %173 = vmatpush2.msra.mxu0 0.0
    %174 = vmatprep.subr.mxu0 0.0
    %175 = vmatpush2.msra.mxu0 0.0
    %176 = vmatprep.subr.mxu0 0.0
    %177 = vmatpush2.msra.mxu0 0.0
    %178 = vmatprep.subr.mxu0 0.0
    %179 = vmatpush2.msra.mxu0 0.0
    %180 = vmatprep.subr.mxu0 0.0
    %181 = vmatpush2.msra.mxu0 0.0
    %182 = vmatprep.subr.mxu0 0.0
    %183 = vmatpush2.msra.mxu0 0.0
    %184 = vmatprep.subr.mxu0 0.0
    %185 = vmatpush2.msra.mxu0 0.0
    %186 = vmatprep.subr.mxu0 0.0
    %187 = vmatpush2.msra.mxu0 0.0
    %188 = vmatprep.subr.mxu0 0.0
    %189 = vmatpush2.msra.mxu0 0.0
    %190 = vmatprep.subr.mxu0 0.0
    %191 = vmatpush2.msra.mxu0 0.0
    %192 = vmatprep.subr.mxu0 0.0
    %193 = vmatpush2.msra.mxu0 0.0
    %194 = vmatprep.subr.mxu0 0.0
    %195 = vmatpush2.msra.mxu0 0.0
    %196 = vmatprep.subr.mxu0 0.0
    %197 = vmatpush2.msra.mxu0 0.0
    %198 = vmatprep.subr.mxu0 0.0
    %199 = vmatpush2.msra.mxu0 0.0
    %200 = vmatprep.subr.mxu0 0.0
    %201 = vmatpush2.msra.mxu0 0.0
    %202 = vmatprep.mubr.f32.mxu0 0.0
    %203 = vmatmul.mubr.f32.gmra.mxu0 %v48
    %v204 = vpop.f32.mrf.mxu0
    %v205 = vadd.f32 %v137, %v204
    %v206 = vpop.f32.mrf.mxu0
    %207 = vmatprep.mubr.f32.mxu0 0.0
    %208 = vmatmul.mubr.f32.gmra.mxu0 %v51
    %v209 = vpop.f32.mrf.mxu0
    %v210 = vadd.f32 %v137, %v209
    %v211 = vpop.f32.mrf.mxu0
    %212 = vdwg.mxu0
    %s213 = scalar_lea.vmem [#allocation2], 64
    %v214 = vld [vmem:[%s213] sm:$0xff]
    %v215 = vld [vmem:[%s213 + $0x8] sm:$0xff]
    %v216 = vld [vmem:[%s213 + $0x10] sm:$0xff]
    %v217 = vld [vmem:[%s213 + $0x18] sm:$0xff]
    %v218 = vld [vmem:[%s2 + $0x2] sm:$0x1]
    %v219 = vlaneseq
    %v220 = vshrl.u32 %v219, 7
    %v221 = vsub.s32 0, %v220
    %v222 = vrot.slane %v218, %v221
    %223 = vmatprep.subr.mxu0 0.0
    %224 = vmatpush1.msra.mxu0 0.0
    %225 = vmatprep.subr.mxu0 0.0
    %226 = vmatpush1.msra.mxu0 0.0
    %227 = vmatprep.subr.mxu0 0.0
    %228 = vmatpush1.msra.mxu0 0.0
    %229 = vmatprep.subr.mxu0 0.0
    %230 = vmatpush1.msra.mxu0 0.0
    %231 = vmatprep.subr.mxu0 0.0
    %232 = vmatpush1.msra.mxu0 0.0
    %233 = vmatprep.subr.mxu0 0.0
    %234 = vmatpush1.msra.mxu0 0.0
    %235 = vmatprep.subr.mxu0 0.0
    %236 = vmatpush1.msra.mxu0 0.0
    %237 = vmatprep.subr.mxu0 0.0
    %238 = vmatpush1.msra.mxu0 0.0
    %239 = vmatprep.subr.mxu0 0.0
    %240 = vmatpush1.msra.mxu0 0.0
    %241 = vmatprep.subr.mxu0 0.0
    %242 = vmatpush1.msra.mxu0 0.0
    %243 = vmatprep.subr.mxu0 0.0
    %244 = vmatpush1.msra.mxu0 0.0
    %245 = vmatprep.subr.mxu0 0.0
    %246 = vmatpush1.msra.mxu0 0.0
    %247 = vmatprep.subr.mxu0 0.0
    %248 = vmatpush1.msra.mxu0 %v217
    %249 = vmatprep.subr.mxu0 0.0
    %250 = vmatpush1.msra.mxu0 %v216
    %251 = vmatprep.subr.mxu0 0.0
    %252 = vmatpush1.msra.mxu0 %v215
    %253 = vmatprep.subr.mxu0 0.0
    %254 = vmatpush1.msra.mxu0 %v214
    %255 = vmatprep.subr.mxu0 0.0
    %256 = vmatpush2.msra.mxu0 0.0
    %257 = vmatprep.subr.mxu0 0.0
    %258 = vmatpush2.msra.mxu0 0.0
    %259 = vmatprep.subr.mxu0 0.0
    %260 = vmatpush2.msra.mxu0 0.0
    %261 = vmatprep.subr.mxu0 0.0
    %262 = vmatpush2.msra.mxu0 0.0
    %263 = vmatprep.subr.mxu0 0.0
    %264 = vmatpush2.msra.mxu0 0.0
    %265 = vmatprep.subr.mxu0 0.0
    %266 = vmatpush2.msra.mxu0 0.0
    %267 = vmatprep.subr.mxu0 0.0
    %268 = vmatpush2.msra.mxu0 0.0
    %269 = vmatprep.subr.mxu0 0.0
    %270 = vmatpush2.msra.mxu0 0.0
    %271 = vmatprep.subr.mxu0 0.0
    %272 = vmatpush2.msra.mxu0 0.0
    %273 = vmatprep.subr.mxu0 0.0
    %274 = vmatpush2.msra.mxu0 0.0
    %275 = vmatprep.subr.mxu0 0.0
    %276 = vmatpush2.msra.mxu0 0.0
    %277 = vmatprep.subr.mxu0 0.0
    %278 = vmatpush2.msra.mxu0 0.0
    %279 = vmatprep.subr.mxu0 0.0
    %280 = vmatpush2.msra.mxu0 0.0
    %281 = vmatprep.subr.mxu0 0.0
    %282 = vmatpush2.msra.mxu0 0.0
    %283 = vmatprep.subr.mxu0 0.0
    %284 = vmatpush2.msra.mxu0 0.0
    %285 = vmatprep.subr.mxu0 0.0
    %286 = vmatpush2.msra.mxu0 0.0
    %287 = vmatprep.mubr.f32.mxu0 0.0
    %288 = vmatmul.mubr.f32.gmra.mxu0 %v48
    %v289 = vpop.f32.mrf.mxu0
    %v290 = vadd.f32 %v222, %v289
    %v291 = vpop.f32.mrf.mxu0
    %292 = vmatprep.mubr.f32.mxu0 0.0
    %293 = vmatmul.mubr.f32.gmra.mxu0 %v51
    %v294 = vpop.f32.mrf.mxu0
    %v295 = vadd.f32 %v222, %v294
    %v296 = vpop.f32.mrf.mxu0
    %297 = vdwg.mxu0
    %s298 = scalar_lea.vmem [#allocation2], 96
    %v299 = vld [vmem:[%s298] sm:$0xff]
    %v300 = vld [vmem:[%s298 + $0x8] sm:$0xff]
    %v301 = vld [vmem:[%s298 + $0x10] sm:$0xff]
    %v302 = vld [vmem:[%s298 + $0x18] sm:$0xff]
    %s303 = scalar_lea.vmem [#allocation2], 128
    %v304 = vld [vmem:[%s303] sm:$0xff]
    %v305 = vld [vmem:[%s303 + $0x8] sm:$0xff]
    %v306 = vld [vmem:[%s303 + $0x10] sm:$0xff]
    %v307 = vld [vmem:[%s303 + $0x18] sm:$0xff]
    %s308 = scalar_lea.vmem [#allocation2], 160
    %v309 = vld [vmem:[%s308] sm:$0xff]
    %v310 = vld [vmem:[%s308 + $0x8] sm:$0xff]
    %v311 = vld [vmem:[%s308 + $0x10] sm:$0xff]
    %v312 = vld [vmem:[%s308 + $0x18] sm:$0xff]
    %v313 = vld [vmem:[%s2 + $0x3] sm:$0x1]
    %v315 = vsel %vm46, 0.0, 0
    %317 = vmatprep.subr.mxu0 0.0
    %318 = vmatpush1.msra.mxu0 0.0
    %319 = vmatprep.subr.mxu0 0.0
    %320 = vmatpush1.msra.mxu0 0.0
    %321 = vmatprep.subr.mxu0 0.0
    %322 = vmatpush1.msra.mxu0 0.0
    %323 = vmatprep.subr.mxu0 0.0
    %324 = vmatpush1.msra.mxu0 0.0
    %325 = vmatprep.subr.mxu0 0.0
    %326 = vmatpush1.msra.mxu0 0.0
    %327 = vmatprep.subr.mxu0 0.0
    %328 = vmatpush1.msra.mxu0 0.0
    %329 = vmatprep.subr.mxu0 0.0
    %330 = vmatpush1.msra.mxu0 0.0
    %331 = vmatprep.subr.mxu0 0.0
    %332 = vmatpush1.msra.mxu0 0.0
    %333 = vmatprep.subr.mxu0 0.0
    %334 = vmatpush1.msra.mxu0 0.0
    %335 = vmatprep.subr.mxu0 0.0
    %336 = vmatpush1.msra.mxu0 0.0
    %337 = vmatprep.subr.mxu0 0.0
    %338 = vmatpush1.msra.mxu0 0.0
    %339 = vmatprep.subr.mxu0 0.0
    %340 = vmatpush1.msra.mxu0 0.0
    %341 = vmatprep.subr.mxu0 0.0
    %342 = vmatpush1.msra.mxu0 %v302
    %343 = vmatprep.subr.mxu0 0.0
    %344 = vmatpush1.msra.mxu0 %v301
    %345 = vmatprep.subr.mxu0 0.0
    %346 = vmatpush1.msra.mxu0 %v300
    %347 = vmatprep.subr.mxu0 0.0
    %348 = vmatpush1.msra.mxu0 %v299
    %349 = vmatprep.subr.mxu0 0.0
    %350 = vmatpush2.msra.mxu0 0.0
    %351 = vmatprep.subr.mxu0 0.0
    %352 = vmatpush2.msra.mxu0 0.0
    %353 = vmatprep.subr.mxu0 0.0
    %354 = vmatpush2.msra.mxu0 0.0
    %355 = vmatprep.subr.mxu0 0.0
    %356 = vmatpush2.msra.mxu0 0.0
    %357 = vmatprep.subr.mxu0 0.0
    %358 = vmatpush2.msra.mxu0 0.0
    %359 = vmatprep.subr.mxu0 0.0
    %360 = vmatpush2.msra.mxu0 0.0
    %361 = vmatprep.subr.mxu0 0.0
    %362 = vmatpush2.msra.mxu0 0.0
    %363 = vmatprep.subr.mxu0 0.0
    %364 = vmatpush2.msra.mxu0 0.0
    %365 = vmatprep.subr.mxu0 0.0
    %366 = vmatpush2.msra.mxu0 0.0
    %367 = vmatprep.subr.mxu0 0.0
    %368 = vmatpush2.msra.mxu0 0.0
    %369 = vmatprep.subr.mxu0 0.0
    %370 = vmatpush2.msra.mxu0 0.0
    %371 = vmatprep.subr.mxu0 0.0
    %372 = vmatpush2.msra.mxu0 0.0
    %373 = vmatprep.subr.mxu0 0.0
    %374 = vmatpush2.msra.mxu0 0.0
    %375 = vmatprep.subr.mxu0 0.0
    %376 = vmatpush2.msra.mxu0 0.0
    %377 = vmatprep.subr.mxu0 0.0
    %378 = vmatpush2.msra.mxu0 0.0
    %379 = vmatprep.subr.mxu0 0.0
    %380 = vmatpush2.msra.mxu0 0.0
    %381 = vmatprep.mubr.f32.mxu0 0.0
    %382 = vmatmul.mubr.f32.gmra.mxu0 %v315
    %v383 = vpop.f32.mrf.mxu0
    %v384 = vadd.f32 0.0, %v383
    %v385 = vpop.f32.mrf.mxu0
    %386 = vdwg.mxu0
    %387 = vmatprep.subr.mxu0 0.0
    %388 = vmatpush1.msra.mxu0 0.0
    %389 = vmatprep.subr.mxu0 0.0
    %390 = vmatpush1.msra.mxu0 0.0
    %391 = vmatprep.subr.mxu0 0.0
    %392 = vmatpush1.msra.mxu0 0.0
    %393 = vmatprep.subr.mxu0 0.0
    %394 = vmatpush1.msra.mxu0 0.0
    %395 = vmatprep.subr.mxu0 0.0
    %396 = vmatpush1.msra.mxu0 0.0
    %397 = vmatprep.subr.mxu0 0.0
    %398 = vmatpush1.msra.mxu0 0.0
    %399 = vmatprep.subr.mxu0 0.0
    %400 = vmatpush1.msra.mxu0 0.0
    %401 = vmatprep.subr.mxu0 0.0
    %402 = vmatpush1.msra.mxu0 0.0
    %403 = vmatprep.subr.mxu0 0.0
    %404 = vmatpush1.msra.mxu0 0.0
    %405 = vmatprep.subr.mxu0 0.0
    %406 = vmatpush1.msra.mxu0 0.0
    %407 = vmatprep.subr.mxu0 0.0
    %408 = vmatpush1.msra.mxu0 0.0
    %409 = vmatprep.subr.mxu0 0.0
    %410 = vmatpush1.msra.mxu0 0.0
    %411 = vmatprep.subr.mxu0 0.0
    %412 = vmatpush1.msra.mxu0 %v307
    %413 = vmatprep.subr.mxu0 0.0
    %414 = vmatpush1.msra.mxu0 %v306
    %415 = vmatprep.subr.mxu0 0.0
    %416 = vmatpush1.msra.mxu0 %v305
    %417 = vmatprep.subr.mxu0 0.0
    %418 = vmatpush1.msra.mxu0 %v304
    %419 = vmatprep.subr.mxu0 0.0
    %420 = vmatpush2.msra.mxu0 0.0
    %421 = vmatprep.subr.mxu0 0.0
    %422 = vmatpush2.msra.mxu0 0.0
    %423 = vmatprep.subr.mxu0 0.0
    %424 = vmatpush2.msra.mxu0 0.0
    %425 = vmatprep.subr.mxu0 0.0
    %426 = vmatpush2.msra.mxu0 0.0
    %427 = vmatprep.subr.mxu0 0.0
    %428 = vmatpush2.msra.mxu0 0.0
    %429 = vmatprep.subr.mxu0 0.0
    %430 = vmatpush2.msra.mxu0 0.0
    %431 = vmatprep.subr.mxu0 0.0
    %432 = vmatpush2.msra.mxu0 0.0
    %433 = vmatprep.subr.mxu0 0.0
    %434 = vmatpush2.msra.mxu0 0.0
    %435 = vmatprep.subr.mxu0 0.0
    %436 = vmatpush2.msra.mxu0 0.0
    %437 = vmatprep.subr.mxu0 0.0
    %438 = vmatpush2.msra.mxu0 0.0
    %439 = vmatprep.subr.mxu0 0.0
    %440 = vmatpush2.msra.mxu0 0.0
    %441 = vmatprep.subr.mxu0 0.0
    %442 = vmatpush2.msra.mxu0 0.0
    %443 = vmatprep.subr.mxu0 0.0
    %444 = vmatpush2.msra.mxu0 0.0
    %445 = vmatprep.subr.mxu0 0.0
    %446 = vmatpush2.msra.mxu0 0.0
    %447 = vmatprep.subr.mxu0 0.0
    %448 = vmatpush2.msra.mxu0 0.0
    %449 = vmatprep.subr.mxu0 0.0
    %450 = vmatpush2.msra.mxu0 0.0
    %451 = vmatprep.mubr.f32.mxu0 0.0
    %452 = vmatmul.mubr.f32.gmra.mxu0 %v315
    %v453 = vpop.f32.mrf.mxu0
    %v454 = vadd.f32 0.0, %v453
    %v455 = vpop.f32.mrf.mxu0
    %456 = vdwg.mxu0
    %v457 = vlaneseq
    %v458 = vshrl.u32 %v457, 7
    %v459 = vsub.s32 0, %v458
    %v460 = vrot.slane %v313, %v459
    %461 = vmatprep.subr.mxu0 0.0
    %462 = vmatpush1.msra.mxu0 0.0
    %463 = vmatprep.subr.mxu0 0.0
    %464 = vmatpush1.msra.mxu0 0.0
    %465 = vmatprep.subr.mxu0 0.0
    %466 = vmatpush1.msra.mxu0 0.0
    %467 = vmatprep.subr.mxu0 0.0
    %468 = vmatpush1.msra.mxu0 0.0
    %469 = vmatprep.subr.mxu0 0.0
    %470 = vmatpush1.msra.mxu0 0.0
    %471 = vmatprep.subr.mxu0 0.0
    %472 = vmatpush1.msra.mxu0 0.0
    %473 = vmatprep.subr.mxu0 0.0
    %474 = vmatpush1.msra.mxu0 0.0
    %475 = vmatprep.subr.mxu0 0.0
    %476 = vmatpush1.msra.mxu0 0.0
    %477 = vmatprep.subr.mxu0 0.0
    %478 = vmatpush1.msra.mxu0 0.0
    %479 = vmatprep.subr.mxu0 0.0
    %480 = vmatpush1.msra.mxu0 0.0
    %481 = vmatprep.subr.mxu0 0.0
    %482 = vmatpush1.msra.mxu0 0.0
    %483 = vmatprep.subr.mxu0 0.0
    %484 = vmatpush1.msra.mxu0 0.0
    %485 = vmatprep.subr.mxu0 0.0
    %486 = vmatpush1.msra.mxu0 %v312
    %487 = vmatprep.subr.mxu0 0.0
    %488 = vmatpush1.msra.mxu0 %v311
    %489 = vmatprep.subr.mxu0 0.0
    %490 = vmatpush1.msra.mxu0 %v310
    %491 = vmatprep.subr.mxu0 0.0
    %492 = vmatpush1.msra.mxu0 %v309
    %493 = vmatprep.subr.mxu0 0.0
    %494 = vmatpush2.msra.mxu0 0.0
    %495 = vmatprep.subr.mxu0 0.0
    %496 = vmatpush2.msra.mxu0 0.0
    %497 = vmatprep.subr.mxu0 0.0
    %498 = vmatpush2.msra.mxu0 0.0
    %499 = vmatprep.subr.mxu0 0.0
    %500 = vmatpush2.msra.mxu0 0.0
    %501 = vmatprep.subr.mxu0 0.0
    %502 = vmatpush2.msra.mxu0 0.0
    %503 = vmatprep.subr.mxu0 0.0
    %504 = vmatpush2.msra.mxu0 0.0
    %505 = vmatprep.subr.mxu0 0.0
    %506 = vmatpush2.msra.mxu0 0.0
    %507 = vmatprep.subr.mxu0 0.0
    %508 = vmatpush2.msra.mxu0 0.0
    %509 = vmatprep.subr.mxu0 0.0
    %510 = vmatpush2.msra.mxu0 0.0
    %511 = vmatprep.subr.mxu0 0.0
    %512 = vmatpush2.msra.mxu0 0.0
    %513 = vmatprep.subr.mxu0 0.0
    %514 = vmatpush2.msra.mxu0 0.0
    %515 = vmatprep.subr.mxu0 0.0
    %516 = vmatpush2.msra.mxu0 0.0
    %517 = vmatprep.subr.mxu0 0.0
    %518 = vmatpush2.msra.mxu0 0.0
    %519 = vmatprep.subr.mxu0 0.0
    %520 = vmatpush2.msra.mxu0 0.0
    %521 = vmatprep.subr.mxu0 0.0
    %522 = vmatpush2.msra.mxu0 0.0
    %523 = vmatprep.subr.mxu0 0.0
    %524 = vmatpush2.msra.mxu0 0.0
    %525 = vmatprep.mubr.f32.mxu0 0.0
    %526 = vmatmul.mubr.f32.gmra.mxu0 %v315
    %v527 = vpop.f32.mrf.mxu0
    %v528 = vadd.f32 %v460, %v527
    %v529 = vpop.f32.mrf.mxu0
    %530 = vdwg.mxu0
    %v532 = vrot.slane %v384, 1
    %v535 = vadd.f32 %v120, %v384
    %v536 = vadd.f32 %v125, %v532
    %v537 = vxor.u32 %v535, 2147483648
    %v538 = vxor.u32 %v536, 2147483648
    %v539 = vmul.f32 %v537, 1.442695
    %v540 = vpow.pop %v539
    %v541 = vmul.f32 %v538, 1.442695
    %v542 = vpow.pop %v541
    %v543 = vadd.f32 %v540, 1.0
    %v544 = vadd.f32 %v542, 1.0
    %v545 = vrcp.pop %v543
    %v546 = vmul.f32 1.0, %v545
    %v547 = vrcp.pop %v544
    %v548 = vmul.f32 1.0, %v547
    %v550 = vrot.slane %v454, 1
    %v553 = vadd.f32 %v205, %v454
    %v554 = vadd.f32 %v210, %v550
    %v555 = vxor.u32 %v553, 2147483648
    %v556 = vxor.u32 %v554, 2147483648
    %v557 = vmul.f32 %v555, 1.442695
    %v558 = vpow.pop %v557
    %v559 = vmul.f32 %v556, 1.442695
    %v560 = vpow.pop %v559
    %v561 = vadd.f32 %v558, 1.0
    %v562 = vadd.f32 %v560, 1.0
    %v563 = vrcp.pop %v561
    %v564 = vmul.f32 1.0, %v563
    %v565 = vrcp.pop %v562
    %v566 = vmul.f32 1.0, %v565
    %v568 = vrot.slane %v528, 1
    %v571 = vmul.f32 %v546, %v528
    %v572 = vmul.f32 %v548, %v568
    %v573 = vadd.f32 %v290, %v571
    %v574 = vadd.f32 %v295, %v572
    %v575 = vtanh.pop %v573
    %v576 = vtanh.pop %v574
    %v577 = vsub.f32 1.0, %v564
    %v578 = vsub.f32 1.0, %v566
    %v579 = vmul.f32 %v577, %v575
    %v580 = vmul.f32 %v578, %v576
    %v581 = vmul.f32 %v564, 0.0
    %v582 = vmul.f32 %v566, 0.0
    %v583 = vadd.f32 %v579, %v581
    %v584 = vadd.f32 %v580, %v582
    %v587 = vrot.slane %v584, 7
    %vm588 = vcmask 1041409
    %v589 = vsel %vm588, %v587, %v583
    %v590 = vsel %vm46, %v589, 0
    %592 = vmatprep.subr.mxu0 0.0
    %593 = vmatpush1.msra.mxu0 0.0
    %594 = vmatprep.subr.mxu0 0.0
    %595 = vmatpush1.msra.mxu0 0.0
    %596 = vmatprep.subr.mxu0 0.0
    %597 = vmatpush1.msra.mxu0 0.0
    %598 = vmatprep.subr.mxu0 0.0
    %599 = vmatpush1.msra.mxu0 0.0
    %600 = vmatprep.subr.mxu0 0.0
    %601 = vmatpush1.msra.mxu0 0.0
    %602 = vmatprep.subr.mxu0 0.0
    %603 = vmatpush1.msra.mxu0 0.0
    %604 = vmatprep.subr.mxu0 0.0
    %605 = vmatpush1.msra.mxu0 0.0
    %606 = vmatprep.subr.mxu0 0.0
    %607 = vmatpush1.msra.mxu0 0.0
    %608 = vmatprep.subr.mxu0 0.0
    %609 = vmatpush1.msra.mxu0 0.0
    %610 = vmatprep.subr.mxu0 0.0
    %611 = vmatpush1.msra.mxu0 0.0
    %612 = vmatprep.subr.mxu0 0.0
    %613 = vmatpush1.msra.mxu0 0.0
    %614 = vmatprep.subr.mxu0 0.0
    %615 = vmatpush1.msra.mxu0 0.0
    %616 = vmatprep.subr.mxu0 0.0
    %617 = vmatpush1.msra.mxu0 %v302
    %618 = vmatprep.subr.mxu0 0.0
    %619 = vmatpush1.msra.mxu0 %v301
    %620 = vmatprep.subr.mxu0 0.0
    %621 = vmatpush1.msra.mxu0 %v300
    %622 = vmatprep.subr.mxu0 0.0
    %623 = vmatpush1.msra.mxu0 %v299
    %624 = vmatprep.subr.mxu0 0.0
    %625 = vmatpush2.msra.mxu0 0.0
    %626 = vmatprep.subr.mxu0 0.0
    %627 = vmatpush2.msra.mxu0 0.0
    %628 = vmatprep.subr.mxu0 0.0
    %629 = vmatpush2.msra.mxu0 0.0
    %630 = vmatprep.subr.mxu0 0.0
    %631 = vmatpush2.msra.mxu0 0.0
    %632 = vmatprep.subr.mxu0 0.0
    %633 = vmatpush2.msra.mxu0 0.0
    %634 = vmatprep.subr.mxu0 0.0
    %635 = vmatpush2.msra.mxu0 0.0
    %636 = vmatprep.subr.mxu0 0.0
    %637 = vmatpush2.msra.mxu0 0.0
    %638 = vmatprep.subr.mxu0 0.0
    %639 = vmatpush2.msra.mxu0 0.0
    %640 = vmatprep.subr.mxu0 0.0
    %641 = vmatpush2.msra.mxu0 0.0
    %642 = vmatprep.subr.mxu0 0.0
    %643 = vmatpush2.msra.mxu0 0.0
    %644 = vmatprep.subr.mxu0 0.0
    %645 = vmatpush2.msra.mxu0 0.0
    %646 = vmatprep.subr.mxu0 0.0
    %647 = vmatpush2.msra.mxu0 0.0
    %648 = vmatprep.subr.mxu0 0.0
    %649 = vmatpush2.msra.mxu0 0.0
    %650 = vmatprep.subr.mxu0 0.0
    %651 = vmatpush2.msra.mxu0 0.0
    %652 = vmatprep.subr.mxu0 0.0
    %653 = vmatpush2.msra.mxu0 0.0
    %654 = vmatprep.subr.mxu0 0.0
    %655 = vmatpush2.msra.mxu0 0.0
    %656 = vmatprep.mubr.f32.mxu0 0.0
    %657 = vmatmul.mubr.f32.gmra.mxu0 %v590
    %v658 = vpop.f32.mrf.mxu0
    %v659 = vadd.f32 0.0, %v658
    %v660 = vpop.f32.mrf.mxu0
    %661 = vdwg.mxu0
    %662 = vmatprep.subr.mxu0 0.0
    %663 = vmatpush1.msra.mxu0 0.0
    %664 = vmatprep.subr.mxu0 0.0
    %665 = vmatpush1.msra.mxu0 0.0
    %666 = vmatprep.subr.mxu0 0.0
    %667 = vmatpush1.msra.mxu0 0.0
    %668 = vmatprep.subr.mxu0 0.0
    %669 = vmatpush1.msra.mxu0 0.0
    %670 = vmatprep.subr.mxu0 0.0
    %671 = vmatpush1.msra.mxu0 0.0
    %672 = vmatprep.subr.mxu0 0.0
    %673 = vmatpush1.msra.mxu0 0.0
    %674 = vmatprep.subr.mxu0 0.0
    %675 = vmatpush1.msra.mxu0 0.0
    %676 = vmatprep.subr.mxu0 0.0
    %677 = vmatpush1.msra.mxu0 0.0
    %678 = vmatprep.subr.mxu0 0.0
    %679 = vmatpush1.msra.mxu0 0.0
    %680 = vmatprep.subr.mxu0 0.0
    %681 = vmatpush1.msra.mxu0 0.0
    %682 = vmatprep.subr.mxu0 0.0
    %683 = vmatpush1.msra.mxu0 0.0
    %684 = vmatprep.subr.mxu0 0.0
    %685 = vmatpush1.msra.mxu0 0.0
    %686 = vmatprep.subr.mxu0 0.0
    %687 = vmatpush1.msra.mxu0 %v307
    %688 = vmatprep.subr.mxu0 0.0
    %689 = vmatpush1.msra.mxu0 %v306
    %690 = vmatprep.subr.mxu0 0.0
    %691 = vmatpush1.msra.mxu0 %v305
    %692 = vmatprep.subr.mxu0 0.0
    %693 = vmatpush1.msra.mxu0 %v304
    %694 = vmatprep.subr.mxu0 0.0
    %695 = vmatpush2.msra.mxu0 0.0
    %696 = vmatprep.subr.mxu0 0.0
    %697 = vmatpush2.msra.mxu0 0.0
    %698 = vmatprep.subr.mxu0 0.0
    %699 = vmatpush2.msra.mxu0 0.0
    %700 = vmatprep.subr.mxu0 0.0
    %701 = vmatpush2.msra.mxu0 0.0
    %702 = vmatprep.subr.mxu0 0.0
    %703 = vmatpush2.msra.mxu0 0.0
    %704 = vmatprep.subr.mxu0 0.0
    %705 = vmatpush2.msra.mxu0 0.0
    %706 = vmatprep.subr.mxu0 0.0
    %707 = vmatpush2.msra.mxu0 0.0
    %708 = vmatprep.subr.mxu0 0.0
    %709 = vmatpush2.msra.mxu0 0.0
    %710 = vmatprep.subr.mxu0 0.0
    %711 = vmatpush2.msra.mxu0 0.0
    %712 = vmatprep.subr.mxu0 0.0
    %713 = vmatpush2.msra.mxu0 0.0
    %714 = vmatprep.subr.mxu0 0.0
    %715 = vmatpush2.msra.mxu0 0.0
    %716 = vmatprep.subr.mxu0 0.0
    %717 = vmatpush2.msra.mxu0 0.0
    %718 = vmatprep.subr.mxu0 0.0
    %719 = vmatpush2.msra.mxu0 0.0
    %720 = vmatprep.subr.mxu0 0.0
    %721 = vmatpush2.msra.mxu0 0.0
    %722 = vmatprep.subr.mxu0 0.0
    %723 = vmatpush2.msra.mxu0 0.0
    %724 = vmatprep.subr.mxu0 0.0
    %725 = vmatpush2.msra.mxu0 0.0
    %726 = vmatprep.mubr.f32.mxu0 0.0
    %727 = vmatmul.mubr.f32.gmra.mxu0 %v590
    %v728 = vpop.f32.mrf.mxu0
    %v729 = vadd.f32 0.0, %v728
    %v730 = vpop.f32.mrf.mxu0
    %731 = vdwg.mxu0
    %732 = vmatprep.subr.mxu0 0.0
    %733 = vmatpush1.msra.mxu0 0.0
    %734 = vmatprep.subr.mxu0 0.0
    %735 = vmatpush1.msra.mxu0 0.0
    %736 = vmatprep.subr.mxu0 0.0
    %737 = vmatpush1.msra.mxu0 0.0
    %738 = vmatprep.subr.mxu0 0.0
    %739 = vmatpush1.msra.mxu0 0.0
    %740 = vmatprep.subr.mxu0 0.0
    %741 = vmatpush1.msra.mxu0 0.0
    %742 = vmatprep.subr.mxu0 0.0
    %743 = vmatpush1.msra.mxu0 0.0
    %744 = vmatprep.subr.mxu0 0.0
    %745 = vmatpush1.msra.mxu0 0.0
    %746 = vmatprep.subr.mxu0 0.0
    %747 = vmatpush1.msra.mxu0 0.0
    %748 = vmatprep.subr.mxu0 0.0
    %749 = vmatpush1.msra.mxu0 0.0
    %750 = vmatprep.subr.mxu0 0.0
    %751 = vmatpush1.msra.mxu0 0.0
    %752 = vmatprep.subr.mxu0 0.0
    %753 = vmatpush1.msra.mxu0 0.0
    %754 = vmatprep.subr.mxu0 0.0
    %755 = vmatpush1.msra.mxu0 0.0
    %756 = vmatprep.subr.mxu0 0.0
    %757 = vmatpush1.msra.mxu0 %v312
    %758 = vmatprep.subr.mxu0 0.0
    %759 = vmatpush1.msra.mxu0 %v311
    %760 = vmatprep.subr.mxu0 0.0
    %761 = vmatpush1.msra.mxu0 %v310
    %762 = vmatprep.subr.mxu0 0.0
    %763 = vmatpush1.msra.mxu0 %v309
    %764 = vmatprep.subr.mxu0 0.0
    %765 = vmatpush2.msra.mxu0 0.0
    %766 = vmatprep.subr.mxu0 0.0
    %767 = vmatpush2.msra.mxu0 0.0
    %768 = vmatprep.subr.mxu0 0.0
    %769 = vmatpush2.msra.mxu0 0.0
    %770 = vmatprep.subr.mxu0 0.0
    %771 = vmatpush2.msra.mxu0 0.0
    %772 = vmatprep.subr.mxu0 0.0
    %773 = vmatpush2.msra.mxu0 0.0
    %774 = vmatprep.subr.mxu0 0.0
    %775 = vmatpush2.msra.mxu0 0.0
    %776 = vmatprep.subr.mxu0 0.0
    %777 = vmatpush2.msra.mxu0 0.0
    %778 = vmatprep.subr.mxu0 0.0
    %779 = vmatpush2.msra.mxu0 0.0
    %780 = vmatprep.subr.mxu0 0.0
    %781 = vmatpush2.msra.mxu0 0.0
    %782 = vmatprep.subr.mxu0 0.0
    %783 = vmatpush2.msra.mxu0 0.0
    %784 = vmatprep.subr.mxu0 0.0
    %785 = vmatpush2.msra.mxu0 0.0
    %786 = vmatprep.subr.mxu0 0.0
    %787 = vmatpush2.msra.mxu0 0.0
    %788 = vmatprep.subr.mxu0 0.0
    %789 = vmatpush2.msra.mxu0 0.0
    %790 = vmatprep.subr.mxu0 0.0
    %791 = vmatpush2.msra.mxu0 0.0
    %792 = vmatprep.subr.mxu0 0.0
    %793 = vmatpush2.msra.mxu0 0.0
    %794 = vmatprep.subr.mxu0 0.0
    %795 = vmatpush2.msra.mxu0 0.0
    %796 = vmatprep.mubr.f32.mxu0 0.0
    %797 = vmatmul.mubr.f32.gmra.mxu0 %v590
    %v798 = vpop.f32.mrf.mxu0
    %v799 = vadd.f32 %v460, %v798
    %v800 = vpop.f32.mrf.mxu0
    %801 = vdwg.mxu0
    %v803 = vrot.slane %v659, 7
    %v806 = vadd.f32 %v120, %v803
    %v807 = vadd.f32 %v125, %v659
    %v808 = vxor.u32 %v806, 2147483648
    %v809 = vxor.u32 %v807, 2147483648
    %v810 = vmul.f32 %v808, 1.442695
    %v811 = vpow.pop %v810
    %v812 = vmul.f32 %v809, 1.442695
    %v813 = vpow.pop %v812
    %v814 = vadd.f32 %v811, 1.0
    %v815 = vadd.f32 %v813, 1.0
    %v816 = vrcp.pop %v814
    %v817 = vmul.f32 1.0, %v816
    %v818 = vrcp.pop %v815
    %v819 = vmul.f32 1.0, %v818
    %v821 = vrot.slane %v729, 7
    %v824 = vadd.f32 %v205, %v821
    %v825 = vadd.f32 %v210, %v729
    %v826 = vxor.u32 %v824, 2147483648
    %v827 = vxor.u32 %v825, 2147483648
    %v828 = vmul.f32 %v826, 1.442695
    %v829 = vpow.pop %v828
    %v830 = vmul.f32 %v827, 1.442695
    %v831 = vpow.pop %v830
    %v832 = vadd.f32 %v829, 1.0
    %v833 = vadd.f32 %v831, 1.0
    %v834 = vrcp.pop %v832
    %v835 = vmul.f32 1.0, %v834
    %v836 = vrcp.pop %v833
    %v837 = vmul.f32 1.0, %v836
    %v839 = vrot.slane %v799, 7
    %v842 = vmul.f32 %v817, %v839
    %v843 = vmul.f32 %v819, %v799
    %v844 = vadd.f32 %v290, %v842
    %v845 = vadd.f32 %v295, %v843
    %v846 = vtanh.pop %v844
    %v847 = vtanh.pop %v845
    %v848 = vsub.f32 1.0, %v835
    %v849 = vsub.f32 1.0, %v837
    %v850 = vmul.f32 %v848, %v846
    %v851 = vmul.f32 %v849, %v847
    %v852 = vrot.slane %v583, 7
    %v855 = vmul.f32 %v835, %v852
    %v856 = vmul.f32 %v837, %v587
    %v857 = vadd.f32 %v850, %v855
    %v858 = vadd.f32 %v851, %v856
    %v861 = vrot.slane %v857, 1
    %v862 = vsel %vm588, %v858, %v861
    %v863 = vsel %vm46, %v862, 0
    %865 = vmatprep.subr.mxu0 0.0
    %866 = vmatpush1.msra.mxu0 0.0
    %867 = vmatprep.subr.mxu0 0.0
    %868 = vmatpush1.msra.mxu0 0.0
    %869 = vmatprep.subr.mxu0 0.0
    %870 = vmatpush1.msra.mxu0 0.0
    %871 = vmatprep.subr.mxu0 0.0
    %872 = vmatpush1.msra.mxu0 0.0
    %873 = vmatprep.subr.mxu0 0.0
    %874 = vmatpush1.msra.mxu0 0.0
    %875 = vmatprep.subr.mxu0 0.0
    %876 = vmatpush1.msra.mxu0 0.0
    %877 = vmatprep.subr.mxu0 0.0
    %878 = vmatpush1.msra.mxu0 0.0
    %879 = vmatprep.subr.mxu0 0.0
    %880 = vmatpush1.msra.mxu0 0.0
    %881 = vmatprep.subr.mxu0 0.0
    %882 = vmatpush1.msra.mxu0 0.0
    %883 = vmatprep.subr.mxu0 0.0
    %884 = vmatpush1.msra.mxu0 0.0
    %885 = vmatprep.subr.mxu0 0.0
    %886 = vmatpush1.msra.mxu0 0.0
    %887 = vmatprep.subr.mxu0 0.0
    %888 = vmatpush1.msra.mxu0 0.0
    %889 = vmatprep.subr.mxu0 0.0
    %890 = vmatpush1.msra.mxu0 %v302
    %891 = vmatprep.subr.mxu0 0.0
    %892 = vmatpush1.msra.mxu0 %v301
    %893 = vmatprep.subr.mxu0 0.0
    %894 = vmatpush1.msra.mxu0 %v300
    %895 = vmatprep.subr.mxu0 0.0
    %896 = vmatpush1.msra.mxu0 %v299
    %897 = vmatprep.subr.mxu0 0.0
    %898 = vmatpush2.msra.mxu0 0.0
    %899 = vmatprep.subr.mxu0 0.0
    %900 = vmatpush2.msra.mxu0 0.0
    %901 = vmatprep.subr.mxu0 0.0
    %902 = vmatpush2.msra.mxu0 0.0
    %903 = vmatprep.subr.mxu0 0.0
    %904 = vmatpush2.msra.mxu0 0.0
    %905 = vmatprep.subr.mxu0 0.0
    %906 = vmatpush2.msra.mxu0 0.0
    %907 = vmatprep.subr.mxu0 0.0
    %908 = vmatpush2.msra.mxu0 0.0
    %909 = vmatprep.subr.mxu0 0.0
    %910 = vmatpush2.msra.mxu0 0.0
    %911 = vmatprep.subr.mxu0 0.0
    %912 = vmatpush2.msra.mxu0 0.0
    %913 = vmatprep.subr.mxu0 0.0
    %914 = vmatpush2.msra.mxu0 0.0
    %915 = vmatprep.subr.mxu0 0.0
    %916 = vmatpush2.msra.mxu0 0.0
    %917 = vmatprep.subr.mxu0 0.0
    %918 = vmatpush2.msra.mxu0 0.0
    %919 = vmatprep.subr.mxu0 0.0
    %920 = vmatpush2.msra.mxu0 0.0
    %921 = vmatprep.subr.mxu0 0.0
    %922 = vmatpush2.msra.mxu0 0.0
    %923 = vmatprep.subr.mxu0 0.0
    %924 = vmatpush2.msra.mxu0 0.0
    %925 = vmatprep.subr.mxu0 0.0
    %926 = vmatpush2.msra.mxu0 0.0
    %927 = vmatprep.subr.mxu0 0.0
    %928 = vmatpush2.msra.mxu0 0.0
    %929 = vmatprep.mubr.f32.mxu0 0.0
    %930 = vmatmul.mubr.f32.gmra.mxu0 %v863
    %v931 = vpop.f32.mrf.mxu0
    %v932 = vadd.f32 0.0, %v931
    %v933 = vpop.f32.mrf.mxu0
    %934 = vdwg.mxu0
    %935 = vmatprep.subr.mxu0 0.0
    %936 = vmatpush1.msra.mxu0 0.0
    %937 = vmatprep.subr.mxu0 0.0
    %938 = vmatpush1.msra.mxu0 0.0
    %939 = vmatprep.subr.mxu0 0.0
    %940 = vmatpush1.msra.mxu0 0.0
    %941 = vmatprep.subr.mxu0 0.0
    %942 = vmatpush1.msra.mxu0 0.0
    %943 = vmatprep.subr.mxu0 0.0
    %944 = vmatpush1.msra.mxu0 0.0
    %945 = vmatprep.subr.mxu0 0.0
    %946 = vmatpush1.msra.mxu0 0.0
    %947 = vmatprep.subr.mxu0 0.0
    %948 = vmatpush1.msra.mxu0 0.0
    %949 = vmatprep.subr.mxu0 0.0
    %950 = vmatpush1.msra.mxu0 0.0
    %951 = vmatprep.subr.mxu0 0.0
    %952 = vmatpush1.msra.mxu0 0.0
    %953 = vmatprep.subr.mxu0 0.0
    %954 = vmatpush1.msra.mxu0 0.0
    %955 = vmatprep.subr.mxu0 0.0
    %956 = vmatpush1.msra.mxu0 0.0
    %957 = vmatprep.subr.mxu0 0.0
    %958 = vmatpush1.msra.mxu0 0.0
    %959 = vmatprep.subr.mxu0 0.0
    %960 = vmatpush1.msra.mxu0 %v307
    %961 = vmatprep.subr.mxu0 0.0
    %962 = vmatpush1.msra.mxu0 %v306
    %963 = vmatprep.subr.mxu0 0.0
    %964 = vmatpush1.msra.mxu0 %v305
    %965 = vmatprep.subr.mxu0 0.0
    %966 = vmatpush1.msra.mxu0 %v304
    %967 = vmatprep.subr.mxu0 0.0
    %968 = vmatpush2.msra.mxu0 0.0
    %969 = vmatprep.subr.mxu0 0.0
    %970 = vmatpush2.msra.mxu0 0.0
    %971 = vmatprep.subr.mxu0 0.0
    %972 = vmatpush2.msra.mxu0 0.0
    %973 = vmatprep.subr.mxu0 0.0
    %974 = vmatpush2.msra.mxu0 0.0
    %975 = vmatprep.subr.mxu0 0.0
    %976 = vmatpush2.msra.mxu0 0.0
    %977 = vmatprep.subr.mxu0 0.0
    %978 = vmatpush2.msra.mxu0 0.0
    %979 = vmatprep.subr.mxu0 0.0
    %980 = vmatpush2.msra.mxu0 0.0
    %981 = vmatprep.subr.mxu0 0.0
    %982 = vmatpush2.msra.mxu0 0.0
    %983 = vmatprep.subr.mxu0 0.0
    %984 = vmatpush2.msra.mxu0 0.0
    %985 = vmatprep.subr.mxu0 0.0
    %986 = vmatpush2.msra.mxu0 0.0
    %987 = vmatprep.subr.mxu0 0.0
    %988 = vmatpush2.msra.mxu0 0.0
    %989 = vmatprep.subr.mxu0 0.0
    %990 = vmatpush2.msra.mxu0 0.0
    %991 = vmatprep.subr.mxu0 0.0
    %992 = vmatpush2.msra.mxu0 0.0
    %993 = vmatprep.subr.mxu0 0.0
    %994 = vmatpush2.msra.mxu0 0.0
    %995 = vmatprep.subr.mxu0 0.0
    %996 = vmatpush2.msra.mxu0 0.0
    %997 = vmatprep.subr.mxu0 0.0
    %998 = vmatpush2.msra.mxu0 0.0
    %999 = vmatprep.mubr.f32.mxu0 0.0
    %1000 = vmatmul.mubr.f32.gmra.mxu0 %v863
    %v1001 = vpop.f32.mrf.mxu0
    %v1002 = vadd.f32 0.0, %v1001
    %v1003 = vpop.f32.mrf.mxu0
    %1004 = vdwg.mxu0
    %1005 = vmatprep.subr.mxu0 0.0
    %1006 = vmatpush1.msra.mxu0 0.0
    %1007 = vmatprep.subr.mxu0 0.0
    %1008 = vmatpush1.msra.mxu0 0.0
    %1009 = vmatprep.subr.mxu0 0.0
    %1010 = vmatpush1.msra.mxu0 0.0
    %1011 = vmatprep.subr.mxu0 0.0
    %1012 = vmatpush1.msra.mxu0 0.0
    %1013 = vmatprep.subr.mxu0 0.0
    %1014 = vmatpush1.msra.mxu0 0.0
    %1015 = vmatprep.subr.mxu0 0.0
    %1016 = vmatpush1.msra.mxu0 0.0
    %1017 = vmatprep.subr.mxu0 0.0
    %1018 = vmatpush1.msra.mxu0 0.0
    %1019 = vmatprep.subr.mxu0 0.0
    %1020 = vmatpush1.msra.mxu0 0.0
    %1021 = vmatprep.subr.mxu0 0.0
    %1022 = vmatpush1.msra.mxu0 0.0
    %1023 = vmatprep.subr.mxu0 0.0
    %1024 = vmatpush1.msra.mxu0 0.0
    %1025 = vmatprep.subr.mxu0 0.0
    %1026 = vmatpush1.msra.mxu0 0.0
    %1027 = vmatprep.subr.mxu0 0.0
    %1028 = vmatpush1.msra.mxu0 0.0
    %1029 = vmatprep.subr.mxu0 0.0
    %1030 = vmatpush1.msra.mxu0 %v312
    %1031 = vmatprep.subr.mxu0 0.0
    %1032 = vmatpush1.msra.mxu0 %v311
    %1033 = vmatprep.subr.mxu0 0.0
    %1034 = vmatpush1.msra.mxu0 %v310
    %1035 = vmatprep.subr.mxu0 0.0
    %1036 = vmatpush1.msra.mxu0 %v309
    %1037 = vmatprep.subr.mxu0 0.0
    %1038 = vmatpush2.msra.mxu0 0.0
    %1039 = vmatprep.subr.mxu0 0.0
    %1040 = vmatpush2.msra.mxu0 0.0
    %1041 = vmatprep.subr.mxu0 0.0
    %1042 = vmatpush2.msra.mxu0 0.0
    %1043 = vmatprep.subr.mxu0 0.0
    %1044 = vmatpush2.msra.mxu0 0.0
    %1045 = vmatprep.subr.mxu0 0.0
    %1046 = vmatpush2.msra.mxu0 0.0
    %1047 = vmatprep.subr.mxu0 0.0
    %1048 = vmatpush2.msra.mxu0 0.0
    %1049 = vmatprep.subr.mxu0 0.0
    %1050 = vmatpush2.msra.mxu0 0.0
    %1051 = vmatprep.subr.mxu0 0.0
    %1052 = vmatpush2.msra.mxu0 0.0
    %1053 = vmatprep.subr.mxu0 0.0
    %1054 = vmatpush2.msra.mxu0 0.0
    %1055 = vmatprep.subr.mxu0 0.0
    %1056 = vmatpush2.msra.mxu0 0.0
    %1057 = vmatprep.subr.mxu0 0.0
    %1058 = vmatpush2.msra.mxu0 0.0
    %1059 = vmatprep.subr.mxu0 0.0
    %1060 = vmatpush2.msra.mxu0 0.0
    %1061 = vmatprep.subr.mxu0 0.0
    %1062 = vmatpush2.msra.mxu0 0.0
    %1063 = vmatprep.subr.mxu0 0.0
    %1064 = vmatpush2.msra.mxu0 0.0
    %1065 = vmatprep.subr.mxu0 0.0
    %1066 = vmatpush2.msra.mxu0 0.0
    %1067 = vmatprep.subr.mxu0 0.0
    %1068 = vmatpush2.msra.mxu0 0.0
    %1069 = vmatprep.mubr.f32.mxu0 0.0
    %1070 = vmatmul.mubr.f32.gmra.mxu0 %v863
    %v1071 = vpop.f32.mrf.mxu0
    %v1072 = vadd.f32 %v460, %v1071
    %v1073 = vpop.f32.mrf.mxu0
    %1074 = vdwg.mxu0
    %v1076 = vrot.slane %v932, 6
    %v1077 = vrot.slane %v932, 7
    %v1080 = vadd.f32 %v120, %v1076
    %v1081 = vadd.f32 %v125, %v1077
    %v1082 = vxor.u32 %v1080, 2147483648
    %v1083 = vxor.u32 %v1081, 2147483648
    %v1084 = vmul.f32 %v1082, 1.442695
    %v1085 = vpow.pop %v1084
    %v1086 = vmul.f32 %v1083, 1.442695
    %v1087 = vpow.pop %v1086
    %v1088 = vadd.f32 %v1085, 1.0
    %v1089 = vadd.f32 %v1087, 1.0
    %v1090 = vrcp.pop %v1088
    %v1091 = vmul.f32 1.0, %v1090
    %v1092 = vrcp.pop %v1089
    %v1093 = vmul.f32 1.0, %v1092
    %v1095 = vrot.slane %v1002, 6
    %v1096 = vrot.slane %v1002, 7
    %v1099 = vadd.f32 %v205, %v1095
    %v1100 = vadd.f32 %v210, %v1096
    %v1101 = vxor.u32 %v1099, 2147483648
    %v1102 = vxor.u32 %v1100, 2147483648
    %v1103 = vmul.f32 %v1101, 1.442695
    %v1104 = vpow.pop %v1103
    %v1105 = vmul.f32 %v1102, 1.442695
    %v1106 = vpow.pop %v1105
    %v1107 = vadd.f32 %v1104, 1.0
    %v1108 = vadd.f32 %v1106, 1.0
    %v1109 = vrcp.pop %v1107
    %v1110 = vmul.f32 1.0, %v1109
    %v1111 = vrcp.pop %v1108
    %v1112 = vmul.f32 1.0, %v1111
    %v1114 = vrot.slane %v1072, 6
    %v1115 = vrot.slane %v1072, 7
    %v1118 = vmul.f32 %v1091, %v1114
    %v1119 = vmul.f32 %v1093, %v1115
    %v1120 = vadd.f32 %v290, %v1118
    %v1121 = vadd.f32 %v295, %v1119
    %v1122 = vtanh.pop %v1120
    %v1123 = vtanh.pop %v1121
    %v1124 = vsub.f32 1.0, %v1110
    %v1125 = vsub.f32 1.0, %v1112
    %v1126 = vmul.f32 %v1124, %v1122
    %v1127 = vmul.f32 %v1125, %v1123
    %v1128 = vrot.slane %v857, 7
    %v1129 = vrot.slane %v858, 7
    %v1132 = vmul.f32 %v1110, %v1128
    %v1133 = vmul.f32 %v1112, %v1129
    %v1134 = vadd.f32 %v1126, %v1132
    %v1135 = vadd.f32 %v1127, %v1133
    %v1138 = vrot.slane %v1134, 2
    %v1139 = vrot.slane %v1135, 1
    %v1140 = vsel %vm588, %v1139, %v1138
    %v1141 = vsel %vm46, %v1140, 0
    %1143 = vmatprep.subr.mxu0 0.0
    %1144 = vmatpush1.msra.mxu0 0.0
    %1145 = vmatprep.subr.mxu0 0.0
    %1146 = vmatpush1.msra.mxu0 0.0
    %1147 = vmatprep.subr.mxu0 0.0
    %1148 = vmatpush1.msra.mxu0 0.0
    %1149 = vmatprep.subr.mxu0 0.0
    %1150 = vmatpush1.msra.mxu0 0.0
    %1151 = vmatprep.subr.mxu0 0.0
    %1152 = vmatpush1.msra.mxu0 0.0
    %1153 = vmatprep.subr.mxu0 0.0
    %1154 = vmatpush1.msra.mxu0 0.0
    %1155 = vmatprep.subr.mxu0 0.0
    %1156 = vmatpush1.msra.mxu0 0.0
    %1157 = vmatprep.subr.mxu0 0.0
    %1158 = vmatpush1.msra.mxu0 0.0
    %1159 = vmatprep.subr.mxu0 0.0
    %1160 = vmatpush1.msra.mxu0 0.0
    %1161 = vmatprep.subr.mxu0 0.0
    %1162 = vmatpush1.msra.mxu0 0.0
    %1163 = vmatprep.subr.mxu0 0.0
    %1164 = vmatpush1.msra.mxu0 0.0
    %1165 = vmatprep.subr.mxu0 0.0
    %1166 = vmatpush1.msra.mxu0 0.0
    %1167 = vmatprep.subr.mxu0 0.0
    %1168 = vmatpush1.msra.mxu0 %v302
    %1169 = vmatprep.subr.mxu0 0.0
    %1170 = vmatpush1.msra.mxu0 %v301
    %1171 = vmatprep.subr.mxu0 0.0
    %1172 = vmatpush1.msra.mxu0 %v300
    %1173 = vmatprep.subr.mxu0 0.0
    %1174 = vmatpush1.msra.mxu0 %v299
    %1175 = vmatprep.subr.mxu0 0.0
    %1176 = vmatpush2.msra.mxu0 0.0
    %1177 = vmatprep.subr.mxu0 0.0
    %1178 = vmatpush2.msra.mxu0 0.0
    %1179 = vmatprep.subr.mxu0 0.0
    %1180 = vmatpush2.msra.mxu0 0.0
    %1181 = vmatprep.subr.mxu0 0.0
    %1182 = vmatpush2.msra.mxu0 0.0
    %1183 = vmatprep.subr.mxu0 0.0
    %1184 = vmatpush2.msra.mxu0 0.0
    %1185 = vmatprep.subr.mxu0 0.0
    %1186 = vmatpush2.msra.mxu0 0.0
    %1187 = vmatprep.subr.mxu0 0.0
    %1188 = vmatpush2.msra.mxu0 0.0
    %1189 = vmatprep.subr.mxu0 0.0
    %1190 = vmatpush2.msra.mxu0 0.0
    %1191 = vmatprep.subr.mxu0 0.0
    %1192 = vmatpush2.msra.mxu0 0.0
    %1193 = vmatprep.subr.mxu0 0.0
    %1194 = vmatpush2.msra.mxu0 0.0
    %1195 = vmatprep.subr.mxu0 0.0
    %1196 = vmatpush2.msra.mxu0 0.0
    %1197 = vmatprep.subr.mxu0 0.0
    %1198 = vmatpush2.msra.mxu0 0.0
    %1199 = vmatprep.subr.mxu0 0.0
    %1200 = vmatpush2.msra.mxu0 0.0
    %1201 = vmatprep.subr.mxu0 0.0
    %1202 = vmatpush2.msra.mxu0 0.0
    %1203 = vmatprep.subr.mxu0 0.0
    %1204 = vmatpush2.msra.mxu0 0.0
    %1205 = vmatprep.subr.mxu0 0.0
    %1206 = vmatpush2.msra.mxu0 0.0
    %1207 = vmatprep.mubr.f32.mxu0 0.0
    %1208 = vmatmul.mubr.f32.gmra.mxu0 %v1141
    %v1209 = vpop.f32.mrf.mxu0
    %v1210 = vadd.f32 0.0, %v1209
    %v1211 = vpop.f32.mrf.mxu0
    %1212 = vdwg.mxu0
    %1213 = vmatprep.subr.mxu0 0.0
    %1214 = vmatpush1.msra.mxu0 0.0
    %1215 = vmatprep.subr.mxu0 0.0
    %1216 = vmatpush1.msra.mxu0 0.0
    %1217 = vmatprep.subr.mxu0 0.0
    %1218 = vmatpush1.msra.mxu0 0.0
    %1219 = vmatprep.subr.mxu0 0.0
    %1220 = vmatpush1.msra.mxu0 0.0
    %1221 = vmatprep.subr.mxu0 0.0
    %1222 = vmatpush1.msra.mxu0 0.0
    %1223 = vmatprep.subr.mxu0 0.0
    %1224 = vmatpush1.msra.mxu0 0.0
    %1225 = vmatprep.subr.mxu0 0.0
    %1226 = vmatpush1.msra.mxu0 0.0
    %1227 = vmatprep.subr.mxu0 0.0
    %1228 = vmatpush1.msra.mxu0 0.0
    %1229 = vmatprep.subr.mxu0 0.0
    %1230 = vmatpush1.msra.mxu0 0.0
    %1231 = vmatprep.subr.mxu0 0.0
    %1232 = vmatpush1.msra.mxu0 0.0
    %1233 = vmatprep.subr.mxu0 0.0
    %1234 = vmatpush1.msra.mxu0 0.0
    %1235 = vmatprep.subr.mxu0 0.0
    %1236 = vmatpush1.msra.mxu0 0.0
    %1237 = vmatprep.subr.mxu0 0.0
    %1238 = vmatpush1.msra.mxu0 %v307
    %1239 = vmatprep.subr.mxu0 0.0
    %1240 = vmatpush1.msra.mxu0 %v306
    %1241 = vmatprep.subr.mxu0 0.0
    %1242 = vmatpush1.msra.mxu0 %v305
    %1243 = vmatprep.subr.mxu0 0.0
    %1244 = vmatpush1.msra.mxu0 %v304
    %1245 = vmatprep.subr.mxu0 0.0
    %1246 = vmatpush2.msra.mxu0 0.0
    %1247 = vmatprep.subr.mxu0 0.0
    %1248 = vmatpush2.msra.mxu0 0.0
    %1249 = vmatprep.subr.mxu0 0.0
    %1250 = vmatpush2.msra.mxu0 0.0
    %1251 = vmatprep.subr.mxu0 0.0
    %1252 = vmatpush2.msra.mxu0 0.0
    %1253 = vmatprep.subr.mxu0 0.0
    %1254 = vmatpush2.msra.mxu0 0.0
    %1255 = vmatprep.subr.mxu0 0.0
    %1256 = vmatpush2.msra.mxu0 0.0
    %1257 = vmatprep.subr.mxu0 0.0
    %1258 = vmatpush2.msra.mxu0 0.0
    %1259 = vmatprep.subr.mxu0 0.0
    %1260 = vmatpush2.msra.mxu0 0.0
    %1261 = vmatprep.subr.mxu0 0.0
    %1262 = vmatpush2.msra.mxu0 0.0
    %1263 = vmatprep.subr.mxu0 0.0
    %1264 = vmatpush2.msra.mxu0 0.0
    %1265 = vmatprep.subr.mxu0 0.0
    %1266 = vmatpush2.msra.mxu0 0.0
    %1267 = vmatprep.subr.mxu0 0.0
    %1268 = vmatpush2.msra.mxu0 0.0
    %1269 = vmatprep.subr.mxu0 0.0
    %1270 = vmatpush2.msra.mxu0 0.0
    %1271 = vmatprep.subr.mxu0 0.0
    %1272 = vmatpush2.msra.mxu0 0.0
    %1273 = vmatprep.subr.mxu0 0.0
    %1274 = vmatpush2.msra.mxu0 0.0
    %1275 = vmatprep.subr.mxu0 0.0
    %1276 = vmatpush2.msra.mxu0 0.0
    %1277 = vmatprep.mubr.f32.mxu0 0.0
    %1278 = vmatmul.mubr.f32.gmra.mxu0 %v1141
    %v1279 = vpop.f32.mrf.mxu0
    %v1280 = vadd.f32 0.0, %v1279
    %v1281 = vpop.f32.mrf.mxu0
    %1282 = vdwg.mxu0
    %1283 = vmatprep.subr.mxu0 0.0
    %1284 = vmatpush1.msra.mxu0 0.0
    %1285 = vmatprep.subr.mxu0 0.0
    %1286 = vmatpush1.msra.mxu0 0.0
    %1287 = vmatprep.subr.mxu0 0.0
    %1288 = vmatpush1.msra.mxu0 0.0
    %1289 = vmatprep.subr.mxu0 0.0
    %1290 = vmatpush1.msra.mxu0 0.0
    %1291 = vmatprep.subr.mxu0 0.0
    %1292 = vmatpush1.msra.mxu0 0.0
    %1293 = vmatprep.subr.mxu0 0.0
    %1294 = vmatpush1.msra.mxu0 0.0
    %1295 = vmatprep.subr.mxu0 0.0
    %1296 = vmatpush1.msra.mxu0 0.0
    %1297 = vmatprep.subr.mxu0 0.0
    %1298 = vmatpush1.msra.mxu0 0.0
    %1299 = vmatprep.subr.mxu0 0.0
    %1300 = vmatpush1.msra.mxu0 0.0
    %1301 = vmatprep.subr.mxu0 0.0
    %1302 = vmatpush1.msra.mxu0 0.0
    %1303 = vmatprep.subr.mxu0 0.0
    %1304 = vmatpush1.msra.mxu0 0.0
    %1305 = vmatprep.subr.mxu0 0.0
    %1306 = vmatpush1.msra.mxu0 0.0
    %1307 = vmatprep.subr.mxu0 0.0
    %1308 = vmatpush1.msra.mxu0 %v312
    %1309 = vmatprep.subr.mxu0 0.0
    %1310 = vmatpush1.msra.mxu0 %v311
    %1311 = vmatprep.subr.mxu0 0.0
    %1312 = vmatpush1.msra.mxu0 %v310
    %1313 = vmatprep.subr.mxu0 0.0
    %1314 = vmatpush1.msra.mxu0 %v309
    %1315 = vmatprep.subr.mxu0 0.0
    %1316 = vmatpush2.msra.mxu0 0.0
    %1317 = vmatprep.subr.mxu0 0.0
    %1318 = vmatpush2.msra.mxu0 0.0
    %1319 = vmatprep.subr.mxu0 0.0
    %1320 = vmatpush2.msra.mxu0 0.0
    %1321 = vmatprep.subr.mxu0 0.0
    %1322 = vmatpush2.msra.mxu0 0.0
    %1323 = vmatprep.subr.mxu0 0.0
    %1324 = vmatpush2.msra.mxu0 0.0
    %1325 = vmatprep.subr.mxu0 0.0
    %1326 = vmatpush2.msra.mxu0 0.0
    %1327 = vmatprep.subr.mxu0 0.0
    %1328 = vmatpush2.msra.mxu0 0.0
    %1329 = vmatprep.subr.mxu0 0.0
    %1330 = vmatpush2.msra.mxu0 0.0
    %1331 = vmatprep.subr.mxu0 0.0
    %1332 = vmatpush2.msra.mxu0 0.0
    %1333 = vmatprep.subr.mxu0 0.0
    %1334 = vmatpush2.msra.mxu0 0.0
    %1335 = vmatprep.subr.mxu0 0.0
    %1336 = vmatpush2.msra.mxu0 0.0
    %1337 = vmatprep.subr.mxu0 0.0
    %1338 = vmatpush2.msra.mxu0 0.0
    %1339 = vmatprep.subr.mxu0 0.0
    %1340 = vmatpush2.msra.mxu0 0.0
    %1341 = vmatprep.subr.mxu0 0.0
    %1342 = vmatpush2.msra.mxu0 0.0
    %1343 = vmatprep.subr.mxu0 0.0
    %1344 = vmatpush2.msra.mxu0 0.0
    %1345 = vmatprep.subr.mxu0 0.0
    %1346 = vmatpush2.msra.mxu0 0.0
    %1347 = vmatprep.mubr.f32.mxu0 0.0
    %1348 = vmatmul.mubr.f32.gmra.mxu0 %v1141
    %v1349 = vpop.f32.mrf.mxu0
    %v1350 = vadd.f32 %v460, %v1349
    %v1351 = vpop.f32.mrf.mxu0
    %1352 = vdwg.mxu0
    %v1354 = vrot.slane %v1210, 5
    %v1355 = vrot.slane %v1210, 6
    %v1358 = vadd.f32 %v120, %v1354
    %v1359 = vadd.f32 %v125, %v1355
    %v1360 = vxor.u32 %v1358, 2147483648
    %v1361 = vxor.u32 %v1359, 2147483648
    %v1362 = vmul.f32 %v1360, 1.442695
    %v1363 = vpow.pop %v1362
    %v1364 = vmul.f32 %v1361, 1.442695
    %v1365 = vpow.pop %v1364
    %v1366 = vadd.f32 %v1363, 1.0
    %v1367 = vadd.f32 %v1365, 1.0
    %v1368 = vrcp.pop %v1366
    %v1369 = vmul.f32 1.0, %v1368
    %v1370 = vrcp.pop %v1367
    %v1371 = vmul.f32 1.0, %v1370
    %v1373 = vrot.slane %v1280, 5
    %v1374 = vrot.slane %v1280, 6
    %v1377 = vadd.f32 %v205, %v1373
    %v1378 = vadd.f32 %v210, %v1374
    %v1379 = vxor.u32 %v1377, 2147483648
    %v1380 = vxor.u32 %v1378, 2147483648
    %v1381 = vmul.f32 %v1379, 1.442695
    %v1382 = vpow.pop %v1381
    %v1383 = vmul.f32 %v1380, 1.442695
    %v1384 = vpow.pop %v1383
    %v1385 = vadd.f32 %v1382, 1.0
    %v1386 = vadd.f32 %v1384, 1.0
    %v1387 = vrcp.pop %v1385
    %v1388 = vmul.f32 1.0, %v1387
    %v1389 = vrcp.pop %v1386
    %v1390 = vmul.f32 1.0, %v1389
    %v1392 = vrot.slane %v1350, 5
    %v1393 = vrot.slane %v1350, 6
    %v1396 = vmul.f32 %v1369, %v1392
    %v1397 = vmul.f32 %v1371, %v1393
    %v1398 = vadd.f32 %v290, %v1396
    %v1399 = vadd.f32 %v295, %v1397
    %v1400 = vtanh.pop %v1398
    %v1401 = vtanh.pop %v1399
    %v1402 = vsub.f32 1.0, %v1388
    %v1403 = vsub.f32 1.0, %v1390
    %v1404 = vmul.f32 %v1402, %v1400
    %v1405 = vmul.f32 %v1403, %v1401
    %v1406 = vrot.slane %v1134, 7
    %v1407 = vrot.slane %v1135, 7
    %v1410 = vmul.f32 %v1388, %v1406
    %v1411 = vmul.f32 %v1390, %v1407
    %v1412 = vadd.f32 %v1404, %v1410
    %v1413 = vadd.f32 %v1405, %v1411
    %v1416 = vrot.slane %v1412, 3
    %v1417 = vrot.slane %v1413, 2
    %v1418 = vsel %vm588, %v1417, %v1416
    %v1419 = vsel %vm46, %v1418, 0
    %1421 = vmatprep.subr.mxu0 0.0
    %1422 = vmatpush1.msra.mxu0 0.0
    %1423 = vmatprep.subr.mxu0 0.0
    %1424 = vmatpush1.msra.mxu0 0.0
    %1425 = vmatprep.subr.mxu0 0.0
    %1426 = vmatpush1.msra.mxu0 0.0
    %1427 = vmatprep.subr.mxu0 0.0
    %1428 = vmatpush1.msra.mxu0 0.0
    %1429 = vmatprep.subr.mxu0 0.0
    %1430 = vmatpush1.msra.mxu0 0.0
    %1431 = vmatprep.subr.mxu0 0.0
    %1432 = vmatpush1.msra.mxu0 0.0
    %1433 = vmatprep.subr.mxu0 0.0
    %1434 = vmatpush1.msra.mxu0 0.0
    %1435 = vmatprep.subr.mxu0 0.0
    %1436 = vmatpush1.msra.mxu0 0.0
    %1437 = vmatprep.subr.mxu0 0.0
    %1438 = vmatpush1.msra.mxu0 0.0
    %1439 = vmatprep.subr.mxu0 0.0
    %1440 = vmatpush1.msra.mxu0 0.0
    %1441 = vmatprep.subr.mxu0 0.0
    %1442 = vmatpush1.msra.mxu0 0.0
    %1443 = vmatprep.subr.mxu0 0.0
    %1444 = vmatpush1.msra.mxu0 0.0
    %1445 = vmatprep.subr.mxu0 0.0
    %1446 = vmatpush1.msra.mxu0 %v302
    %1447 = vmatprep.subr.mxu0 0.0
    %1448 = vmatpush1.msra.mxu0 %v301
    %1449 = vmatprep.subr.mxu0 0.0
    %1450 = vmatpush1.msra.mxu0 %v300
    %1451 = vmatprep.subr.mxu0 0.0
    %1452 = vmatpush1.msra.mxu0 %v299
    %1453 = vmatprep.subr.mxu0 0.0
    %1454 = vmatpush2.msra.mxu0 0.0
    %1455 = vmatprep.subr.mxu0 0.0
    %1456 = vmatpush2.msra.mxu0 0.0
    %1457 = vmatprep.subr.mxu0 0.0
    %1458 = vmatpush2.msra.mxu0 0.0
    %1459 = vmatprep.subr.mxu0 0.0
    %1460 = vmatpush2.msra.mxu0 0.0
    %1461 = vmatprep.subr.mxu0 0.0
    %1462 = vmatpush2.msra.mxu0 0.0
    %1463 = vmatprep.subr.mxu0 0.0
    %1464 = vmatpush2.msra.mxu0 0.0
    %1465 = vmatprep.subr.mxu0 0.0
    %1466 = vmatpush2.msra.mxu0 0.0
    %1467 = vmatprep.subr.mxu0 0.0
    %1468 = vmatpush2.msra.mxu0 0.0
    %1469 = vmatprep.subr.mxu0 0.0
    %1470 = vmatpush2.msra.mxu0 0.0
    %1471 = vmatprep.subr.mxu0 0.0
    %1472 = vmatpush2.msra.mxu0 0.0
    %1473 = vmatprep.subr.mxu0 0.0
    %1474 = vmatpush2.msra.mxu0 0.0
    %1475 = vmatprep.subr.mxu0 0.0
    %1476 = vmatpush2.msra.mxu0 0.0
    %1477 = vmatprep.subr.mxu0 0.0
    %1478 = vmatpush2.msra.mxu0 0.0
    %1479 = vmatprep.subr.mxu0 0.0
    %1480 = vmatpush2.msra.mxu0 0.0
    %1481 = vmatprep.subr.mxu0 0.0
    %1482 = vmatpush2.msra.mxu0 0.0
    %1483 = vmatprep.subr.mxu0 0.0
    %1484 = vmatpush2.msra.mxu0 0.0
    %1485 = vmatprep.mubr.f32.mxu0 0.0
    %1486 = vmatmul.mubr.f32.gmra.mxu0 %v1419
    %v1487 = vpop.f32.mrf.mxu0
    %v1488 = vadd.f32 0.0, %v1487
    %v1489 = vpop.f32.mrf.mxu0
    %1490 = vdwg.mxu0
    %1491 = vmatprep.subr.mxu0 0.0
    %1492 = vmatpush1.msra.mxu0 0.0
    %1493 = vmatprep.subr.mxu0 0.0
    %1494 = vmatpush1.msra.mxu0 0.0
    %1495 = vmatprep.subr.mxu0 0.0
    %1496 = vmatpush1.msra.mxu0 0.0
    %1497 = vmatprep.subr.mxu0 0.0
    %1498 = vmatpush1.msra.mxu0 0.0
    %1499 = vmatprep.subr.mxu0 0.0
    %1500 = vmatpush1.msra.mxu0 0.0
    %1501 = vmatprep.subr.mxu0 0.0
    %1502 = vmatpush1.msra.mxu0 0.0
    %1503 = vmatprep.subr.mxu0 0.0
    %1504 = vmatpush1.msra.mxu0 0.0
    %1505 = vmatprep.subr.mxu0 0.0
    %1506 = vmatpush1.msra.mxu0 0.0
    %1507 = vmatprep.subr.mxu0 0.0
    %1508 = vmatpush1.msra.mxu0 0.0
    %1509 = vmatprep.subr.mxu0 0.0
    %1510 = vmatpush1.msra.mxu0 0.0
    %1511 = vmatprep.subr.mxu0 0.0
    %1512 = vmatpush1.msra.mxu0 0.0
    %1513 = vmatprep.subr.mxu0 0.0
    %1514 = vmatpush1.msra.mxu0 0.0
    %1515 = vmatprep.subr.mxu0 0.0
    %1516 = vmatpush1.msra.mxu0 %v307
    %1517 = vmatprep.subr.mxu0 0.0
    %1518 = vmatpush1.msra.mxu0 %v306
    %1519 = vmatprep.subr.mxu0 0.0
    %1520 = vmatpush1.msra.mxu0 %v305
    %1521 = vmatprep.subr.mxu0 0.0
    %1522 = vmatpush1.msra.mxu0 %v304
    %1523 = vmatprep.subr.mxu0 0.0
    %1524 = vmatpush2.msra.mxu0 0.0
    %1525 = vmatprep.subr.mxu0 0.0
    %1526 = vmatpush2.msra.mxu0 0.0
    %1527 = vmatprep.subr.mxu0 0.0
    %1528 = vmatpush2.msra.mxu0 0.0
    %1529 = vmatprep.subr.mxu0 0.0
    %1530 = vmatpush2.msra.mxu0 0.0
    %1531 = vmatprep.subr.mxu0 0.0
    %1532 = vmatpush2.msra.mxu0 0.0
    %1533 = vmatprep.subr.mxu0 0.0
    %1534 = vmatpush2.msra.mxu0 0.0
    %1535 = vmatprep.subr.mxu0 0.0
    %1536 = vmatpush2.msra.mxu0 0.0
    %1537 = vmatprep.subr.mxu0 0.0
    %1538 = vmatpush2.msra.mxu0 0.0
    %1539 = vmatprep.subr.mxu0 0.0
    %1540 = vmatpush2.msra.mxu0 0.0
    %1541 = vmatprep.subr.mxu0 0.0
    %1542 = vmatpush2.msra.mxu0 0.0
    %1543 = vmatprep.subr.mxu0 0.0
    %1544 = vmatpush2.msra.mxu0 0.0
    %1545 = vmatprep.subr.mxu0 0.0
    %1546 = vmatpush2.msra.mxu0 0.0
    %1547 = vmatprep.subr.mxu0 0.0
    %1548 = vmatpush2.msra.mxu0 0.0
    %1549 = vmatprep.subr.mxu0 0.0
    %1550 = vmatpush2.msra.mxu0 0.0
    %1551 = vmatprep.subr.mxu0 0.0
    %1552 = vmatpush2.msra.mxu0 0.0
    %1553 = vmatprep.subr.mxu0 0.0
    %1554 = vmatpush2.msra.mxu0 0.0
    %1555 = vmatprep.mubr.f32.mxu0 0.0
    %1556 = vmatmul.mubr.f32.gmra.mxu0 %v1419
    %v1557 = vpop.f32.mrf.mxu0
    %v1558 = vadd.f32 0.0, %v1557
    %v1559 = vpop.f32.mrf.mxu0
    %1560 = vdwg.mxu0
    %1561 = vmatprep.subr.mxu0 0.0
    %1562 = vmatpush1.msra.mxu0 0.0
    %1563 = vmatprep.subr.mxu0 0.0
    %1564 = vmatpush1.msra.mxu0 0.0
    %1565 = vmatprep.subr.mxu0 0.0
    %1566 = vmatpush1.msra.mxu0 0.0
    %1567 = vmatprep.subr.mxu0 0.0
    %1568 = vmatpush1.msra.mxu0 0.0
    %1569 = vmatprep.subr.mxu0 0.0
    %1570 = vmatpush1.msra.mxu0 0.0
    %1571 = vmatprep.subr.mxu0 0.0
    %1572 = vmatpush1.msra.mxu0 0.0
    %1573 = vmatprep.subr.mxu0 0.0
    %1574 = vmatpush1.msra.mxu0 0.0
    %1575 = vmatprep.subr.mxu0 0.0
    %1576 = vmatpush1.msra.mxu0 0.0
    %1577 = vmatprep.subr.mxu0 0.0
    %1578 = vmatpush1.msra.mxu0 0.0
    %1579 = vmatprep.subr.mxu0 0.0
    %1580 = vmatpush1.msra.mxu0 0.0
    %1581 = vmatprep.subr.mxu0 0.0
    %1582 = vmatpush1.msra.mxu0 0.0
    %1583 = vmatprep.subr.mxu0 0.0
    %1584 = vmatpush1.msra.mxu0 0.0
    %1585 = vmatprep.subr.mxu0 0.0
    %1586 = vmatpush1.msra.mxu0 %v312
    %1587 = vmatprep.subr.mxu0 0.0
    %1588 = vmatpush1.msra.mxu0 %v311
    %1589 = vmatprep.subr.mxu0 0.0
    %1590 = vmatpush1.msra.mxu0 %v310
    %1591 = vmatprep.subr.mxu0 0.0
    %1592 = vmatpush1.msra.mxu0 %v309
    %1593 = vmatprep.subr.mxu0 0.0
    %1594 = vmatpush2.msra.mxu0 0.0
    %1595 = vmatprep.subr.mxu0 0.0
    %1596 = vmatpush2.msra.mxu0 0.0
    %1597 = vmatprep.subr.mxu0 0.0
    %1598 = vmatpush2.msra.mxu0 0.0
    %1599 = vmatprep.subr.mxu0 0.0
    %1600 = vmatpush2.msra.mxu0 0.0
    %1601 = vmatprep.subr.mxu0 0.0
    %1602 = vmatpush2.msra.mxu0 0.0
    %1603 = vmatprep.subr.mxu0 0.0
    %1604 = vmatpush2.msra.mxu0 0.0
    %1605 = vmatprep.subr.mxu0 0.0
    %1606 = vmatpush2.msra.mxu0 0.0
    %1607 = vmatprep.subr.mxu0 0.0
    %1608 = vmatpush2.msra.mxu0 0.0
    %1609 = vmatprep.subr.mxu0 0.0
    %1610 = vmatpush2.msra.mxu0 0.0
    %1611 = vmatprep.subr.mxu0 0.0
    %1612 = vmatpush2.msra.mxu0 0.0
    %1613 = vmatprep.subr.mxu0 0.0
    %1614 = vmatpush2.msra.mxu0 0.0
    %1615 = vmatprep.subr.mxu0 0.0
    %1616 = vmatpush2.msra.mxu0 0.0
    %1617 = vmatprep.subr.mxu0 0.0
    %1618 = vmatpush2.msra.mxu0 0.0
    %1619 = vmatprep.subr.mxu0 0.0
    %1620 = vmatpush2.msra.mxu0 0.0
    %1621 = vmatprep.subr.mxu0 0.0
    %1622 = vmatpush2.msra.mxu0 0.0
    %1623 = vmatprep.subr.mxu0 0.0
    %1624 = vmatpush2.msra.mxu0 0.0
    %1625 = vmatprep.mubr.f32.mxu0 0.0
    %1626 = vmatmul.mubr.f32.gmra.mxu0 %v1419
    %v1627 = vpop.f32.mrf.mxu0
    %v1628 = vadd.f32 %v460, %v1627
    %v1629 = vpop.f32.mrf.mxu0
    %1630 = vdwg.mxu0
    %v1632 = vrot.slane %v1488, 4
    %v1633 = vrot.slane %v1488, 5
    %v1636 = vadd.f32 %v120, %v1632
    %v1637 = vadd.f32 %v125, %v1633
    %v1638 = vxor.u32 %v1636, 2147483648
    %v1639 = vxor.u32 %v1637, 2147483648
    %v1640 = vmul.f32 %v1638, 1.442695
    %v1641 = vpow.pop %v1640
    %v1642 = vmul.f32 %v1639, 1.442695
    %v1643 = vpow.pop %v1642
    %v1644 = vadd.f32 %v1641, 1.0
    %v1645 = vadd.f32 %v1643, 1.0
    %v1646 = vrcp.pop %v1644
    %v1647 = vmul.f32 1.0, %v1646
    %v1648 = vrcp.pop %v1645
    %v1649 = vmul.f32 1.0, %v1648
    %v1651 = vrot.slane %v1558, 4
    %v1652 = vrot.slane %v1558, 5
    %v1655 = vadd.f32 %v205, %v1651
    %v1656 = vadd.f32 %v210, %v1652
    %v1657 = vxor.u32 %v1655, 2147483648
    %v1658 = vxor.u32 %v1656, 2147483648
    %v1659 = vmul.f32 %v1657, 1.442695
    %v1660 = vpow.pop %v1659
    %v1661 = vmul.f32 %v1658, 1.442695
    %v1662 = vpow.pop %v1661
    %v1663 = vadd.f32 %v1660, 1.0
    %v1664 = vadd.f32 %v1662, 1.0
    %v1665 = vrcp.pop %v1663
    %v1666 = vmul.f32 1.0, %v1665
    %v1667 = vrcp.pop %v1664
    %v1668 = vmul.f32 1.0, %v1667
    %v1670 = vrot.slane %v1628, 4
    %v1671 = vrot.slane %v1628, 5
    %v1674 = vmul.f32 %v1647, %v1670
    %v1675 = vmul.f32 %v1649, %v1671
    %v1676 = vadd.f32 %v290, %v1674
    %v1677 = vadd.f32 %v295, %v1675
    %v1678 = vtanh.pop %v1676
    %v1679 = vtanh.pop %v1677
    %v1680 = vsub.f32 1.0, %v1666
    %v1681 = vsub.f32 1.0, %v1668
    %v1682 = vmul.f32 %v1680, %v1678
    %v1683 = vmul.f32 %v1681, %v1679
    %v1684 = vrot.slane %v1412, 7
    %v1685 = vrot.slane %v1413, 7
    %v1688 = vmul.f32 %v1666, %v1684
    %v1689 = vmul.f32 %v1668, %v1685
    %v1690 = vadd.f32 %v1682, %v1688
    %v1691 = vadd.f32 %v1683, %v1689
    %v1694 = vrot.slane %v1690, 4
    %v1695 = vrot.slane %v1691, 3
    %v1696 = vsel %vm588, %v1695, %v1694
    %v1697 = vsel %vm46, %v1696, 0
    %1699 = vmatprep.subr.mxu0 0.0
    %1700 = vmatpush1.msra.mxu0 0.0
    %1701 = vmatprep.subr.mxu0 0.0
    %1702 = vmatpush1.msra.mxu0 0.0
    %1703 = vmatprep.subr.mxu0 0.0
    %1704 = vmatpush1.msra.mxu0 0.0
    %1705 = vmatprep.subr.mxu0 0.0
    %1706 = vmatpush1.msra.mxu0 0.0
    %1707 = vmatprep.subr.mxu0 0.0
    %1708 = vmatpush1.msra.mxu0 0.0
    %1709 = vmatprep.subr.mxu0 0.0
    %1710 = vmatpush1.msra.mxu0 0.0
    %1711 = vmatprep.subr.mxu0 0.0
    %1712 = vmatpush1.msra.mxu0 0.0
    %1713 = vmatprep.subr.mxu0 0.0
    %1714 = vmatpush1.msra.mxu0 0.0
    %1715 = vmatprep.subr.mxu0 0.0
    %1716 = vmatpush1.msra.mxu0 0.0
    %1717 = vmatprep.subr.mxu0 0.0
    %1718 = vmatpush1.msra.mxu0 0.0
    %1719 = vmatprep.subr.mxu0 0.0
    %1720 = vmatpush1.msra.mxu0 0.0
    %1721 = vmatprep.subr.mxu0 0.0
    %1722 = vmatpush1.msra.mxu0 0.0
    %1723 = vmatprep.subr.mxu0 0.0
    %1724 = vmatpush1.msra.mxu0 %v302
    %1725 = vmatprep.subr.mxu0 0.0
    %1726 = vmatpush1.msra.mxu0 %v301
    %1727 = vmatprep.subr.mxu0 0.0
    %1728 = vmatpush1.msra.mxu0 %v300
    %1729 = vmatprep.subr.mxu0 0.0
    %1730 = vmatpush1.msra.mxu0 %v299
    %1731 = vmatprep.subr.mxu0 0.0
    %1732 = vmatpush2.msra.mxu0 0.0
    %1733 = vmatprep.subr.mxu0 0.0
    %1734 = vmatpush2.msra.mxu0 0.0
    %1735 = vmatprep.subr.mxu0 0.0
    %1736 = vmatpush2.msra.mxu0 0.0
    %1737 = vmatprep.subr.mxu0 0.0
    %1738 = vmatpush2.msra.mxu0 0.0
    %1739 = vmatprep.subr.mxu0 0.0
    %1740 = vmatpush2.msra.mxu0 0.0
    %1741 = vmatprep.subr.mxu0 0.0
    %1742 = vmatpush2.msra.mxu0 0.0
    %1743 = vmatprep.subr.mxu0 0.0
    %1744 = vmatpush2.msra.mxu0 0.0
    %1745 = vmatprep.subr.mxu0 0.0
    %1746 = vmatpush2.msra.mxu0 0.0
    %1747 = vmatprep.subr.mxu0 0.0
    %1748 = vmatpush2.msra.mxu0 0.0
    %1749 = vmatprep.subr.mxu0 0.0
    %1750 = vmatpush2.msra.mxu0 0.0
    %1751 = vmatprep.subr.mxu0 0.0
    %1752 = vmatpush2.msra.mxu0 0.0
    %1753 = vmatprep.subr.mxu0 0.0
    %1754 = vmatpush2.msra.mxu0 0.0
    %1755 = vmatprep.subr.mxu0 0.0
    %1756 = vmatpush2.msra.mxu0 0.0
    %1757 = vmatprep.subr.mxu0 0.0
    %1758 = vmatpush2.msra.mxu0 0.0
    %1759 = vmatprep.subr.mxu0 0.0
    %1760 = vmatpush2.msra.mxu0 0.0
    %1761 = vmatprep.subr.mxu0 0.0
    %1762 = vmatpush2.msra.mxu0 0.0
    %1763 = vmatprep.mubr.f32.mxu0 0.0
    %1764 = vmatmul.mubr.f32.gmra.mxu0 %v1697
    %v1765 = vpop.f32.mrf.mxu0
    %v1766 = vadd.f32 0.0, %v1765
    %v1767 = vpop.f32.mrf.mxu0
    %1768 = vdwg.mxu0
    %1769 = vmatprep.subr.mxu0 0.0
    %1770 = vmatpush1.msra.mxu0 0.0
    %1771 = vmatprep.subr.mxu0 0.0
    %1772 = vmatpush1.msra.mxu0 0.0
    %1773 = vmatprep.subr.mxu0 0.0
    %1774 = vmatpush1.msra.mxu0 0.0
    %1775 = vmatprep.subr.mxu0 0.0
    %1776 = vmatpush1.msra.mxu0 0.0
    %1777 = vmatprep.subr.mxu0 0.0
    %1778 = vmatpush1.msra.mxu0 0.0
    %1779 = vmatprep.subr.mxu0 0.0
    %1780 = vmatpush1.msra.mxu0 0.0
    %1781 = vmatprep.subr.mxu0 0.0
    %1782 = vmatpush1.msra.mxu0 0.0
    %1783 = vmatprep.subr.mxu0 0.0
    %1784 = vmatpush1.msra.mxu0 0.0
    %1785 = vmatprep.subr.mxu0 0.0
    %1786 = vmatpush1.msra.mxu0 0.0
    %1787 = vmatprep.subr.mxu0 0.0
    %1788 = vmatpush1.msra.mxu0 0.0
    %1789 = vmatprep.subr.mxu0 0.0
    %1790 = vmatpush1.msra.mxu0 0.0
    %1791 = vmatprep.subr.mxu0 0.0
    %1792 = vmatpush1.msra.mxu0 0.0
    %1793 = vmatprep.subr.mxu0 0.0
    %1794 = vmatpush1.msra.mxu0 %v307
    %1795 = vmatprep.subr.mxu0 0.0
    %1796 = vmatpush1.msra.mxu0 %v306
    %1797 = vmatprep.subr.mxu0 0.0
    %1798 = vmatpush1.msra.mxu0 %v305
    %1799 = vmatprep.subr.mxu0 0.0
    %1800 = vmatpush1.msra.mxu0 %v304
    %1801 = vmatprep.subr.mxu0 0.0
    %1802 = vmatpush2.msra.mxu0 0.0
    %1803 = vmatprep.subr.mxu0 0.0
    %1804 = vmatpush2.msra.mxu0 0.0
    %1805 = vmatprep.subr.mxu0 0.0
    %1806 = vmatpush2.msra.mxu0 0.0
    %1807 = vmatprep.subr.mxu0 0.0
    %1808 = vmatpush2.msra.mxu0 0.0
    %1809 = vmatprep.subr.mxu0 0.0
    %1810 = vmatpush2.msra.mxu0 0.0
    %1811 = vmatprep.subr.mxu0 0.0
    %1812 = vmatpush2.msra.mxu0 0.0
    %1813 = vmatprep.subr.mxu0 0.0
    %1814 = vmatpush2.msra.mxu0 0.0
    %1815 = vmatprep.subr.mxu0 0.0
    %1816 = vmatpush2.msra.mxu0 0.0
    %1817 = vmatprep.subr.mxu0 0.0
    %1818 = vmatpush2.msra.mxu0 0.0
    %1819 = vmatprep.subr.mxu0 0.0
    %1820 = vmatpush2.msra.mxu0 0.0
    %1821 = vmatprep.subr.mxu0 0.0
    %1822 = vmatpush2.msra.mxu0 0.0
    %1823 = vmatprep.subr.mxu0 0.0
    %1824 = vmatpush2.msra.mxu0 0.0
    %1825 = vmatprep.subr.mxu0 0.0
    %1826 = vmatpush2.msra.mxu0 0.0
    %1827 = vmatprep.subr.mxu0 0.0
    %1828 = vmatpush2.msra.mxu0 0.0
    %1829 = vmatprep.subr.mxu0 0.0
    %1830 = vmatpush2.msra.mxu0 0.0
    %1831 = vmatprep.subr.mxu0 0.0
    %1832 = vmatpush2.msra.mxu0 0.0
    %1833 = vmatprep.mubr.f32.mxu0 0.0
    %1834 = vmatmul.mubr.f32.gmra.mxu0 %v1697
    %v1835 = vpop.f32.mrf.mxu0
    %v1836 = vadd.f32 0.0, %v1835
    %v1837 = vpop.f32.mrf.mxu0
    %1838 = vdwg.mxu0
    %1839 = vmatprep.subr.mxu0 0.0
    %1840 = vmatpush1.msra.mxu0 0.0
    %1841 = vmatprep.subr.mxu0 0.0
    %1842 = vmatpush1.msra.mxu0 0.0
    %1843 = vmatprep.subr.mxu0 0.0
    %1844 = vmatpush1.msra.mxu0 0.0
    %1845 = vmatprep.subr.mxu0 0.0
    %1846 = vmatpush1.msra.mxu0 0.0
    %1847 = vmatprep.subr.mxu0 0.0
    %1848 = vmatpush1.msra.mxu0 0.0
    %1849 = vmatprep.subr.mxu0 0.0
    %1850 = vmatpush1.msra.mxu0 0.0
    %1851 = vmatprep.subr.mxu0 0.0
    %1852 = vmatpush1.msra.mxu0 0.0
    %1853 = vmatprep.subr.mxu0 0.0
    %1854 = vmatpush1.msra.mxu0 0.0
    %1855 = vmatprep.subr.mxu0 0.0
    %1856 = vmatpush1.msra.mxu0 0.0
    %1857 = vmatprep.subr.mxu0 0.0
    %1858 = vmatpush1.msra.mxu0 0.0
    %1859 = vmatprep.subr.mxu0 0.0
    %1860 = vmatpush1.msra.mxu0 0.0
    %1861 = vmatprep.subr.mxu0 0.0
    %1862 = vmatpush1.msra.mxu0 0.0
    %1863 = vmatprep.subr.mxu0 0.0
    %1864 = vmatpush1.msra.mxu0 %v312
    %1865 = vmatprep.subr.mxu0 0.0
    %1866 = vmatpush1.msra.mxu0 %v311
    %1867 = vmatprep.subr.mxu0 0.0
    %1868 = vmatpush1.msra.mxu0 %v310
    %1869 = vmatprep.subr.mxu0 0.0
    %1870 = vmatpush1.msra.mxu0 %v309
    %1871 = vmatprep.subr.mxu0 0.0
    %1872 = vmatpush2.msra.mxu0 0.0
    %1873 = vmatprep.subr.mxu0 0.0
    %1874 = vmatpush2.msra.mxu0 0.0
    %1875 = vmatprep.subr.mxu0 0.0
    %1876 = vmatpush2.msra.mxu0 0.0
    %1877 = vmatprep.subr.mxu0 0.0
    %1878 = vmatpush2.msra.mxu0 0.0
    %1879 = vmatprep.subr.mxu0 0.0
    %1880 = vmatpush2.msra.mxu0 0.0
    %1881 = vmatprep.subr.mxu0 0.0
    %1882 = vmatpush2.msra.mxu0 0.0
    %1883 = vmatprep.subr.mxu0 0.0
    %1884 = vmatpush2.msra.mxu0 0.0
    %1885 = vmatprep.subr.mxu0 0.0
    %1886 = vmatpush2.msra.mxu0 0.0
    %1887 = vmatprep.subr.mxu0 0.0
    %1888 = vmatpush2.msra.mxu0 0.0
    %1889 = vmatprep.subr.mxu0 0.0
    %1890 = vmatpush2.msra.mxu0 0.0
    %1891 = vmatprep.subr.mxu0 0.0
    %1892 = vmatpush2.msra.mxu0 0.0
    %1893 = vmatprep.subr.mxu0 0.0
    %1894 = vmatpush2.msra.mxu0 0.0
    %1895 = vmatprep.subr.mxu0 0.0
    %1896 = vmatpush2.msra.mxu0 0.0
    %1897 = vmatprep.subr.mxu0 0.0
    %1898 = vmatpush2.msra.mxu0 0.0
    %1899 = vmatprep.subr.mxu0 0.0
    %1900 = vmatpush2.msra.mxu0 0.0
    %1901 = vmatprep.subr.mxu0 0.0
    %1902 = vmatpush2.msra.mxu0 0.0
    %1903 = vmatprep.mubr.f32.mxu0 0.0
    %1904 = vmatmul.mubr.f32.gmra.mxu0 %v1697
    %v1905 = vpop.f32.mrf.mxu0
    %v1906 = vadd.f32 %v460, %v1905
    %v1907 = vpop.f32.mrf.mxu0
    %1908 = vdwg.mxu0
    %v1910 = vrot.slane %v1766, 3
    %v1911 = vrot.slane %v1766, 4
    %v1914 = vadd.f32 %v120, %v1910
    %v1915 = vadd.f32 %v125, %v1911
    %v1916 = vxor.u32 %v1914, 2147483648
    %v1917 = vxor.u32 %v1915, 2147483648
    %v1918 = vmul.f32 %v1916, 1.442695
    %v1919 = vpow.pop %v1918
    %v1920 = vmul.f32 %v1917, 1.442695
    %v1921 = vpow.pop %v1920
    %v1922 = vadd.f32 %v1919, 1.0
    %v1923 = vadd.f32 %v1921, 1.0
    %v1924 = vrcp.pop %v1922
    %v1925 = vmul.f32 1.0, %v1924
    %v1926 = vrcp.pop %v1923
    %v1927 = vmul.f32 1.0, %v1926
    %v1929 = vrot.slane %v1836, 3
    %v1930 = vrot.slane %v1836, 4
    %v1933 = vadd.f32 %v205, %v1929
    %v1934 = vadd.f32 %v210, %v1930
    %v1935 = vxor.u32 %v1933, 2147483648
    %v1936 = vxor.u32 %v1934, 2147483648
    %v1937 = vmul.f32 %v1935, 1.442695
    %v1938 = vpow.pop %v1937
    %v1939 = vmul.f32 %v1936, 1.442695
    %v1940 = vpow.pop %v1939
    %v1941 = vadd.f32 %v1938, 1.0
    %v1942 = vadd.f32 %v1940, 1.0
    %v1943 = vrcp.pop %v1941
    %v1944 = vmul.f32 1.0, %v1943
    %v1945 = vrcp.pop %v1942
    %v1946 = vmul.f32 1.0, %v1945
    %v1948 = vrot.slane %v1906, 3
    %v1949 = vrot.slane %v1906, 4
    %v1952 = vmul.f32 %v1925, %v1948
    %v1953 = vmul.f32 %v1927, %v1949
    %v1954 = vadd.f32 %v290, %v1952
    %v1955 = vadd.f32 %v295, %v1953
    %v1956 = vtanh.pop %v1954
    %v1957 = vtanh.pop %v1955
    %v1958 = vsub.f32 1.0, %v1944
    %v1959 = vsub.f32 1.0, %v1946
    %v1960 = vmul.f32 %v1958, %v1956
    %v1961 = vmul.f32 %v1959, %v1957
    %v1962 = vrot.slane %v1690, 7
    %v1963 = vrot.slane %v1691, 7
    %v1966 = vmul.f32 %v1944, %v1962
    %v1967 = vmul.f32 %v1946, %v1963
    %v1968 = vadd.f32 %v1960, %v1966
    %v1969 = vadd.f32 %v1961, %v1967
    %v1972 = vrot.slane %v1968, 5
    %v1973 = vrot.slane %v1969, 4
    %v1974 = vsel %vm588, %v1973, %v1972
    %v1975 = vsel %vm46, %v1974, 0
    %1977 = vmatprep.subr.mxu0 0.0
    %1978 = vmatpush1.msra.mxu0 0.0
    %1979 = vmatprep.subr.mxu0 0.0
    %1980 = vmatpush1.msra.mxu0 0.0
    %1981 = vmatprep.subr.mxu0 0.0
    %1982 = vmatpush1.msra.mxu0 0.0
    %1983 = vmatprep.subr.mxu0 0.0
    %1984 = vmatpush1.msra.mxu0 0.0
    %1985 = vmatprep.subr.mxu0 0.0
    %1986 = vmatpush1.msra.mxu0 0.0
    %1987 = vmatprep.subr.mxu0 0.0
    %1988 = vmatpush1.msra.mxu0 0.0
    %1989 = vmatprep.subr.mxu0 0.0
    %1990 = vmatpush1.msra.mxu0 0.0
    %1991 = vmatprep.subr.mxu0 0.0
    %1992 = vmatpush1.msra.mxu0 0.0
    %1993 = vmatprep.subr.mxu0 0.0
    %1994 = vmatpush1.msra.mxu0 0.0
    %1995 = vmatprep.subr.mxu0 0.0
    %1996 = vmatpush1.msra.mxu0 0.0
    %1997 = vmatprep.subr.mxu0 0.0
    %1998 = vmatpush1.msra.mxu0 0.0
    %1999 = vmatprep.subr.mxu0 0.0
    %2000 = vmatpush1.msra.mxu0 0.0
    %2001 = vmatprep.subr.mxu0 0.0
    %2002 = vmatpush1.msra.mxu0 %v302
    %2003 = vmatprep.subr.mxu0 0.0
    %2004 = vmatpush1.msra.mxu0 %v301
    %2005 = vmatprep.subr.mxu0 0.0
    %2006 = vmatpush1.msra.mxu0 %v300
    %2007 = vmatprep.subr.mxu0 0.0
    %2008 = vmatpush1.msra.mxu0 %v299
    %2009 = vmatprep.subr.mxu0 0.0
    %2010 = vmatpush2.msra.mxu0 0.0
    %2011 = vmatprep.subr.mxu0 0.0
    %2012 = vmatpush2.msra.mxu0 0.0
    %2013 = vmatprep.subr.mxu0 0.0
    %2014 = vmatpush2.msra.mxu0 0.0
    %2015 = vmatprep.subr.mxu0 0.0
    %2016 = vmatpush2.msra.mxu0 0.0
    %2017 = vmatprep.subr.mxu0 0.0
    %2018 = vmatpush2.msra.mxu0 0.0
    %2019 = vmatprep.subr.mxu0 0.0
    %2020 = vmatpush2.msra.mxu0 0.0
    %2021 = vmatprep.subr.mxu0 0.0
    %2022 = vmatpush2.msra.mxu0 0.0
    %2023 = vmatprep.subr.mxu0 0.0
    %2024 = vmatpush2.msra.mxu0 0.0
    %2025 = vmatprep.subr.mxu0 0.0
    %2026 = vmatpush2.msra.mxu0 0.0
    %2027 = vmatprep.subr.mxu0 0.0
    %2028 = vmatpush2.msra.mxu0 0.0
    %2029 = vmatprep.subr.mxu0 0.0
    %2030 = vmatpush2.msra.mxu0 0.0
    %2031 = vmatprep.subr.mxu0 0.0
    %2032 = vmatpush2.msra.mxu0 0.0
    %2033 = vmatprep.subr.mxu0 0.0
    %2034 = vmatpush2.msra.mxu0 0.0
    %2035 = vmatprep.subr.mxu0 0.0
    %2036 = vmatpush2.msra.mxu0 0.0
    %2037 = vmatprep.subr.mxu0 0.0
    %2038 = vmatpush2.msra.mxu0 0.0
    %2039 = vmatprep.subr.mxu0 0.0
    %2040 = vmatpush2.msra.mxu0 0.0
    %2041 = vmatprep.mubr.f32.mxu0 0.0
    %2042 = vmatmul.mubr.f32.gmra.mxu0 %v1975
    %v2043 = vpop.f32.mrf.mxu0
    %v2044 = vadd.f32 0.0, %v2043
    %v2045 = vpop.f32.mrf.mxu0
    %2046 = vdwg.mxu0
    %2047 = vmatprep.subr.mxu0 0.0
    %2048 = vmatpush1.msra.mxu0 0.0
    %2049 = vmatprep.subr.mxu0 0.0
    %2050 = vmatpush1.msra.mxu0 0.0
    %2051 = vmatprep.subr.mxu0 0.0
    %2052 = vmatpush1.msra.mxu0 0.0
    %2053 = vmatprep.subr.mxu0 0.0
    %2054 = vmatpush1.msra.mxu0 0.0
    %2055 = vmatprep.subr.mxu0 0.0
    %2056 = vmatpush1.msra.mxu0 0.0
    %2057 = vmatprep.subr.mxu0 0.0
    %2058 = vmatpush1.msra.mxu0 0.0
    %2059 = vmatprep.subr.mxu0 0.0
    %2060 = vmatpush1.msra.mxu0 0.0
    %2061 = vmatprep.subr.mxu0 0.0
    %2062 = vmatpush1.msra.mxu0 0.0
    %2063 = vmatprep.subr.mxu0 0.0
    %2064 = vmatpush1.msra.mxu0 0.0
    %2065 = vmatprep.subr.mxu0 0.0
    %2066 = vmatpush1.msra.mxu0 0.0
    %2067 = vmatprep.subr.mxu0 0.0
    %2068 = vmatpush1.msra.mxu0 0.0
    %2069 = vmatprep.subr.mxu0 0.0
    %2070 = vmatpush1.msra.mxu0 0.0
    %2071 = vmatprep.subr.mxu0 0.0
    %2072 = vmatpush1.msra.mxu0 %v307
    %2073 = vmatprep.subr.mxu0 0.0
    %2074 = vmatpush1.msra.mxu0 %v306
    %2075 = vmatprep.subr.mxu0 0.0
    %2076 = vmatpush1.msra.mxu0 %v305
    %2077 = vmatprep.subr.mxu0 0.0
    %2078 = vmatpush1.msra.mxu0 %v304
    %2079 = vmatprep.subr.mxu0 0.0
    %2080 = vmatpush2.msra.mxu0 0.0
    %2081 = vmatprep.subr.mxu0 0.0
    %2082 = vmatpush2.msra.mxu0 0.0
    %2083 = vmatprep.subr.mxu0 0.0
    %2084 = vmatpush2.msra.mxu0 0.0
    %2085 = vmatprep.subr.mxu0 0.0
    %2086 = vmatpush2.msra.mxu0 0.0
    %2087 = vmatprep.subr.mxu0 0.0
    %2088 = vmatpush2.msra.mxu0 0.0
    %2089 = vmatprep.subr.mxu0 0.0
    %2090 = vmatpush2.msra.mxu0 0.0
    %2091 = vmatprep.subr.mxu0 0.0
    %2092 = vmatpush2.msra.mxu0 0.0
    %2093 = vmatprep.subr.mxu0 0.0
    %2094 = vmatpush2.msra.mxu0 0.0
    %2095 = vmatprep.subr.mxu0 0.0
    %2096 = vmatpush2.msra.mxu0 0.0
    %2097 = vmatprep.subr.mxu0 0.0
    %2098 = vmatpush2.msra.mxu0 0.0
    %2099 = vmatprep.subr.mxu0 0.0
    %2100 = vmatpush2.msra.mxu0 0.0
    %2101 = vmatprep.subr.mxu0 0.0
    %2102 = vmatpush2.msra.mxu0 0.0
    %2103 = vmatprep.subr.mxu0 0.0
    %2104 = vmatpush2.msra.mxu0 0.0
    %2105 = vmatprep.subr.mxu0 0.0
    %2106 = vmatpush2.msra.mxu0 0.0
    %2107 = vmatprep.subr.mxu0 0.0
    %2108 = vmatpush2.msra.mxu0 0.0
    %2109 = vmatprep.subr.mxu0 0.0
    %2110 = vmatpush2.msra.mxu0 0.0
    %2111 = vmatprep.mubr.f32.mxu0 0.0
    %2112 = vmatmul.mubr.f32.gmra.mxu0 %v1975
    %v2113 = vpop.f32.mrf.mxu0
    %v2114 = vadd.f32 0.0, %v2113
    %v2115 = vpop.f32.mrf.mxu0
    %2116 = vdwg.mxu0
    %2117 = vmatprep.subr.mxu0 0.0
    %2118 = vmatpush1.msra.mxu0 0.0
    %2119 = vmatprep.subr.mxu0 0.0
    %2120 = vmatpush1.msra.mxu0 0.0
    %2121 = vmatprep.subr.mxu0 0.0
    %2122 = vmatpush1.msra.mxu0 0.0
    %2123 = vmatprep.subr.mxu0 0.0
    %2124 = vmatpush1.msra.mxu0 0.0
    %2125 = vmatprep.subr.mxu0 0.0
    %2126 = vmatpush1.msra.mxu0 0.0
    %2127 = vmatprep.subr.mxu0 0.0
    %2128 = vmatpush1.msra.mxu0 0.0
    %2129 = vmatprep.subr.mxu0 0.0
    %2130 = vmatpush1.msra.mxu0 0.0
    %2131 = vmatprep.subr.mxu0 0.0
    %2132 = vmatpush1.msra.mxu0 0.0
    %2133 = vmatprep.subr.mxu0 0.0
    %2134 = vmatpush1.msra.mxu0 0.0
    %2135 = vmatprep.subr.mxu0 0.0
    %2136 = vmatpush1.msra.mxu0 0.0
    %2137 = vmatprep.subr.mxu0 0.0
    %2138 = vmatpush1.msra.mxu0 0.0
    %2139 = vmatprep.subr.mxu0 0.0
    %2140 = vmatpush1.msra.mxu0 0.0
    %2141 = vmatprep.subr.mxu0 0.0
    %2142 = vmatpush1.msra.mxu0 %v312
    %2143 = vmatprep.subr.mxu0 0.0
    %2144 = vmatpush1.msra.mxu0 %v311
    %2145 = vmatprep.subr.mxu0 0.0
    %2146 = vmatpush1.msra.mxu0 %v310
    %2147 = vmatprep.subr.mxu0 0.0
    %2148 = vmatpush1.msra.mxu0 %v309
    %2149 = vmatprep.subr.mxu0 0.0
    %2150 = vmatpush2.msra.mxu0 0.0
    %2151 = vmatprep.subr.mxu0 0.0
    %2152 = vmatpush2.msra.mxu0 0.0
    %2153 = vmatprep.subr.mxu0 0.0
    %2154 = vmatpush2.msra.mxu0 0.0
    %2155 = vmatprep.subr.mxu0 0.0
    %2156 = vmatpush2.msra.mxu0 0.0
    %2157 = vmatprep.subr.mxu0 0.0
    %2158 = vmatpush2.msra.mxu0 0.0
    %2159 = vmatprep.subr.mxu0 0.0
    %2160 = vmatpush2.msra.mxu0 0.0
    %2161 = vmatprep.subr.mxu0 0.0
    %2162 = vmatpush2.msra.mxu0 0.0
    %2163 = vmatprep.subr.mxu0 0.0
    %2164 = vmatpush2.msra.mxu0 0.0
    %2165 = vmatprep.subr.mxu0 0.0
    %2166 = vmatpush2.msra.mxu0 0.0
    %2167 = vmatprep.subr.mxu0 0.0
    %2168 = vmatpush2.msra.mxu0 0.0
    %2169 = vmatprep.subr.mxu0 0.0
    %2170 = vmatpush2.msra.mxu0 0.0
    %2171 = vmatprep.subr.mxu0 0.0
    %2172 = vmatpush2.msra.mxu0 0.0
    %2173 = vmatprep.subr.mxu0 0.0
    %2174 = vmatpush2.msra.mxu0 0.0
    %2175 = vmatprep.subr.mxu0 0.0
    %2176 = vmatpush2.msra.mxu0 0.0
    %2177 = vmatprep.subr.mxu0 0.0
    %2178 = vmatpush2.msra.mxu0 0.0
    %2179 = vmatprep.subr.mxu0 0.0
    %2180 = vmatpush2.msra.mxu0 0.0
    %2181 = vmatprep.mubr.f32.mxu0 0.0
    %2182 = vmatmul.mubr.f32.gmra.mxu0 %v1975
    %v2183 = vpop.f32.mrf.mxu0
    %v2184 = vadd.f32 %v460, %v2183
    %v2185 = vpop.f32.mrf.mxu0
    %2186 = vdwg.mxu0
    %v2188 = vrot.slane %v2044, 2
    %v2189 = vrot.slane %v2044, 3
    %v2192 = vadd.f32 %v120, %v2188
    %v2193 = vadd.f32 %v125, %v2189
    %v2194 = vxor.u32 %v2192, 2147483648
    %v2195 = vxor.u32 %v2193, 2147483648
    %v2196 = vmul.f32 %v2194, 1.442695
    %v2197 = vpow.pop %v2196
    %v2198 = vmul.f32 %v2195, 1.442695
    %v2199 = vpow.pop %v2198
    %v2200 = vadd.f32 %v2197, 1.0
    %v2201 = vadd.f32 %v2199, 1.0
    %v2202 = vrcp.pop %v2200
    %v2203 = vmul.f32 1.0, %v2202
    %v2204 = vrcp.pop %v2201
    %v2205 = vmul.f32 1.0, %v2204
    %v2207 = vrot.slane %v2114, 2
    %v2208 = vrot.slane %v2114, 3
    %v2211 = vadd.f32 %v205, %v2207
    %v2212 = vadd.f32 %v210, %v2208
    %v2213 = vxor.u32 %v2211, 2147483648
    %v2214 = vxor.u32 %v2212, 2147483648
    %v2215 = vmul.f32 %v2213, 1.442695
    %v2216 = vpow.pop %v2215
    %v2217 = vmul.f32 %v2214, 1.442695
    %v2218 = vpow.pop %v2217
    %v2219 = vadd.f32 %v2216, 1.0
    %v2220 = vadd.f32 %v2218, 1.0
    %v2221 = vrcp.pop %v2219
    %v2222 = vmul.f32 1.0, %v2221
    %v2223 = vrcp.pop %v2220
    %v2224 = vmul.f32 1.0, %v2223
    %v2226 = vrot.slane %v2184, 2
    %v2227 = vrot.slane %v2184, 3
    %v2230 = vmul.f32 %v2203, %v2226
    %v2231 = vmul.f32 %v2205, %v2227
    %v2232 = vadd.f32 %v290, %v2230
    %v2233 = vadd.f32 %v295, %v2231
    %v2234 = vtanh.pop %v2232
    %v2235 = vtanh.pop %v2233
    %v2236 = vsub.f32 1.0, %v2222
    %v2237 = vsub.f32 1.0, %v2224
    %v2238 = vmul.f32 %v2236, %v2234
    %v2239 = vmul.f32 %v2237, %v2235
    %v2240 = vrot.slane %v1968, 7
    %v2241 = vrot.slane %v1969, 7
    %v2244 = vmul.f32 %v2222, %v2240
    %v2245 = vmul.f32 %v2224, %v2241
    %v2246 = vadd.f32 %v2238, %v2244
    %v2247 = vadd.f32 %v2239, %v2245
    %v2250 = vrot.slane %v2246, 6
    %v2251 = vrot.slane %v2247, 5
    %v2252 = vsel %vm588, %v2251, %v2250
    %v2253 = vsel %vm46, %v2252, 0
    %2255 = vmatprep.subr.mxu0 0.0
    %2256 = vmatpush1.msra.mxu0 0.0
    %2257 = vmatprep.subr.mxu0 0.0
    %2258 = vmatpush1.msra.mxu0 0.0
    %2259 = vmatprep.subr.mxu0 0.0
    %2260 = vmatpush1.msra.mxu0 0.0
    %2261 = vmatprep.subr.mxu0 0.0
    %2262 = vmatpush1.msra.mxu0 0.0
    %2263 = vmatprep.subr.mxu0 0.0
    %2264 = vmatpush1.msra.mxu0 0.0
    %2265 = vmatprep.subr.mxu0 0.0
    %2266 = vmatpush1.msra.mxu0 0.0
    %2267 = vmatprep.subr.mxu0 0.0
    %2268 = vmatpush1.msra.mxu0 0.0
    %2269 = vmatprep.subr.mxu0 0.0
    %2270 = vmatpush1.msra.mxu0 0.0
    %2271 = vmatprep.subr.mxu0 0.0
    %2272 = vmatpush1.msra.mxu0 0.0
    %2273 = vmatprep.subr.mxu0 0.0
    %2274 = vmatpush1.msra.mxu0 0.0
    %2275 = vmatprep.subr.mxu0 0.0
    %2276 = vmatpush1.msra.mxu0 0.0
    %2277 = vmatprep.subr.mxu0 0.0
    %2278 = vmatpush1.msra.mxu0 0.0
    %2279 = vmatprep.subr.mxu0 0.0
    %2280 = vmatpush1.msra.mxu0 %v302
    %2281 = vmatprep.subr.mxu0 0.0
    %2282 = vmatpush1.msra.mxu0 %v301
    %2283 = vmatprep.subr.mxu0 0.0
    %2284 = vmatpush1.msra.mxu0 %v300
    %2285 = vmatprep.subr.mxu0 0.0
    %2286 = vmatpush1.msra.mxu0 %v299
    %2287 = vmatprep.subr.mxu0 0.0
    %2288 = vmatpush2.msra.mxu0 0.0
    %2289 = vmatprep.subr.mxu0 0.0
    %2290 = vmatpush2.msra.mxu0 0.0
    %2291 = vmatprep.subr.mxu0 0.0
    %2292 = vmatpush2.msra.mxu0 0.0
    %2293 = vmatprep.subr.mxu0 0.0
    %2294 = vmatpush2.msra.mxu0 0.0
    %2295 = vmatprep.subr.mxu0 0.0
    %2296 = vmatpush2.msra.mxu0 0.0
    %2297 = vmatprep.subr.mxu0 0.0
    %2298 = vmatpush2.msra.mxu0 0.0
    %2299 = vmatprep.subr.mxu0 0.0
    %2300 = vmatpush2.msra.mxu0 0.0
    %2301 = vmatprep.subr.mxu0 0.0
    %2302 = vmatpush2.msra.mxu0 0.0
    %2303 = vmatprep.subr.mxu0 0.0
    %2304 = vmatpush2.msra.mxu0 0.0
    %2305 = vmatprep.subr.mxu0 0.0
    %2306 = vmatpush2.msra.mxu0 0.0
    %2307 = vmatprep.subr.mxu0 0.0
    %2308 = vmatpush2.msra.mxu0 0.0
    %2309 = vmatprep.subr.mxu0 0.0
    %2310 = vmatpush2.msra.mxu0 0.0
    %2311 = vmatprep.subr.mxu0 0.0
    %2312 = vmatpush2.msra.mxu0 0.0
    %2313 = vmatprep.subr.mxu0 0.0
    %2314 = vmatpush2.msra.mxu0 0.0
    %2315 = vmatprep.subr.mxu0 0.0
    %2316 = vmatpush2.msra.mxu0 0.0
    %2317 = vmatprep.subr.mxu0 0.0
    %2318 = vmatpush2.msra.mxu0 0.0
    %2319 = vmatprep.mubr.f32.mxu0 0.0
    %2320 = vmatmul.mubr.f32.gmra.mxu0 %v2253
    %v2321 = vpop.f32.mrf.mxu0
    %v2322 = vadd.f32 0.0, %v2321
    %v2323 = vpop.f32.mrf.mxu0
    %2324 = vdwg.mxu0
    %2325 = vmatprep.subr.mxu0 0.0
    %2326 = vmatpush1.msra.mxu0 0.0
    %2327 = vmatprep.subr.mxu0 0.0
    %2328 = vmatpush1.msra.mxu0 0.0
    %2329 = vmatprep.subr.mxu0 0.0
    %2330 = vmatpush1.msra.mxu0 0.0
    %2331 = vmatprep.subr.mxu0 0.0
    %2332 = vmatpush1.msra.mxu0 0.0
    %2333 = vmatprep.subr.mxu0 0.0
    %2334 = vmatpush1.msra.mxu0 0.0
    %2335 = vmatprep.subr.mxu0 0.0
    %2336 = vmatpush1.msra.mxu0 0.0
    %2337 = vmatprep.subr.mxu0 0.0
    %2338 = vmatpush1.msra.mxu0 0.0
    %2339 = vmatprep.subr.mxu0 0.0
    %2340 = vmatpush1.msra.mxu0 0.0
    %2341 = vmatprep.subr.mxu0 0.0
    %2342 = vmatpush1.msra.mxu0 0.0
    %2343 = vmatprep.subr.mxu0 0.0
    %2344 = vmatpush1.msra.mxu0 0.0
    %2345 = vmatprep.subr.mxu0 0.0
    %2346 = vmatpush1.msra.mxu0 0.0
    %2347 = vmatprep.subr.mxu0 0.0
    %2348 = vmatpush1.msra.mxu0 0.0
    %2349 = vmatprep.subr.mxu0 0.0
    %2350 = vmatpush1.msra.mxu0 %v307
    %2351 = vmatprep.subr.mxu0 0.0
    %2352 = vmatpush1.msra.mxu0 %v306
    %2353 = vmatprep.subr.mxu0 0.0
    %2354 = vmatpush1.msra.mxu0 %v305
    %2355 = vmatprep.subr.mxu0 0.0
    %2356 = vmatpush1.msra.mxu0 %v304
    %2357 = vmatprep.subr.mxu0 0.0
    %2358 = vmatpush2.msra.mxu0 0.0
    %2359 = vmatprep.subr.mxu0 0.0
    %2360 = vmatpush2.msra.mxu0 0.0
    %2361 = vmatprep.subr.mxu0 0.0
    %2362 = vmatpush2.msra.mxu0 0.0
    %2363 = vmatprep.subr.mxu0 0.0
    %2364 = vmatpush2.msra.mxu0 0.0
    %2365 = vmatprep.subr.mxu0 0.0
    %2366 = vmatpush2.msra.mxu0 0.0
    %2367 = vmatprep.subr.mxu0 0.0
    %2368 = vmatpush2.msra.mxu0 0.0
    %2369 = vmatprep.subr.mxu0 0.0
    %2370 = vmatpush2.msra.mxu0 0.0
    %2371 = vmatprep.subr.mxu0 0.0
    %2372 = vmatpush2.msra.mxu0 0.0
    %2373 = vmatprep.subr.mxu0 0.0
    %2374 = vmatpush2.msra.mxu0 0.0
    %2375 = vmatprep.subr.mxu0 0.0
    %2376 = vmatpush2.msra.mxu0 0.0
    %2377 = vmatprep.subr.mxu0 0.0
    %2378 = vmatpush2.msra.mxu0 0.0
    %2379 = vmatprep.subr.mxu0 0.0
    %2380 = vmatpush2.msra.mxu0 0.0
    %2381 = vmatprep.subr.mxu0 0.0
    %2382 = vmatpush2.msra.mxu0 0.0
    %2383 = vmatprep.subr.mxu0 0.0
    %2384 = vmatpush2.msra.mxu0 0.0
    %2385 = vmatprep.subr.mxu0 0.0
    %2386 = vmatpush2.msra.mxu0 0.0
    %2387 = vmatprep.subr.mxu0 0.0
    %2388 = vmatpush2.msra.mxu0 0.0
    %2389 = vmatprep.mubr.f32.mxu0 0.0
    %2390 = vmatmul.mubr.f32.gmra.mxu0 %v2253
    %v2391 = vpop.f32.mrf.mxu0
    %v2392 = vadd.f32 0.0, %v2391
    %v2393 = vpop.f32.mrf.mxu0
    %2394 = vdwg.mxu0
    %2395 = vmatprep.subr.mxu0 0.0
    %2396 = vmatpush1.msra.mxu0 0.0
    %2397 = vmatprep.subr.mxu0 0.0
    %2398 = vmatpush1.msra.mxu0 0.0
    %2399 = vmatprep.subr.mxu0 0.0
    %2400 = vmatpush1.msra.mxu0 0.0
    %2401 = vmatprep.subr.mxu0 0.0
    %2402 = vmatpush1.msra.mxu0 0.0
    %2403 = vmatprep.subr.mxu0 0.0
    %2404 = vmatpush1.msra.mxu0 0.0
    %2405 = vmatprep.subr.mxu0 0.0
    %2406 = vmatpush1.msra.mxu0 0.0
    %2407 = vmatprep.subr.mxu0 0.0
    %2408 = vmatpush1.msra.mxu0 0.0
    %2409 = vmatprep.subr.mxu0 0.0
    %2410 = vmatpush1.msra.mxu0 0.0
    %2411 = vmatprep.subr.mxu0 0.0
    %2412 = vmatpush1.msra.mxu0 0.0
    %2413 = vmatprep.subr.mxu0 0.0
    %2414 = vmatpush1.msra.mxu0 0.0
    %2415 = vmatprep.subr.mxu0 0.0
    %2416 = vmatpush1.msra.mxu0 0.0
    %2417 = vmatprep.subr.mxu0 0.0
    %2418 = vmatpush1.msra.mxu0 0.0
    %2419 = vmatprep.subr.mxu0 0.0
    %2420 = vmatpush1.msra.mxu0 %v312
    %2421 = vmatprep.subr.mxu0 0.0
    %2422 = vmatpush1.msra.mxu0 %v311
    %2423 = vmatprep.subr.mxu0 0.0
    %2424 = vmatpush1.msra.mxu0 %v310
    %2425 = vmatprep.subr.mxu0 0.0
    %2426 = vmatpush1.msra.mxu0 %v309
    %2427 = vmatprep.subr.mxu0 0.0
    %2428 = vmatpush2.msra.mxu0 0.0
    %2429 = vmatprep.subr.mxu0 0.0
    %2430 = vmatpush2.msra.mxu0 0.0
    %2431 = vmatprep.subr.mxu0 0.0
    %2432 = vmatpush2.msra.mxu0 0.0
    %2433 = vmatprep.subr.mxu0 0.0
    %2434 = vmatpush2.msra.mxu0 0.0
    %2435 = vmatprep.subr.mxu0 0.0
    %2436 = vmatpush2.msra.mxu0 0.0
    %2437 = vmatprep.subr.mxu0 0.0
    %2438 = vmatpush2.msra.mxu0 0.0
    %2439 = vmatprep.subr.mxu0 0.0
    %2440 = vmatpush2.msra.mxu0 0.0
    %2441 = vmatprep.subr.mxu0 0.0
    %2442 = vmatpush2.msra.mxu0 0.0
    %2443 = vmatprep.subr.mxu0 0.0
    %2444 = vmatpush2.msra.mxu0 0.0
    %2445 = vmatprep.subr.mxu0 0.0
    %2446 = vmatpush2.msra.mxu0 0.0
    %2447 = vmatprep.subr.mxu0 0.0
    %2448 = vmatpush2.msra.mxu0 0.0
    %2449 = vmatprep.subr.mxu0 0.0
    %2450 = vmatpush2.msra.mxu0 0.0
    %2451 = vmatprep.subr.mxu0 0.0
    %2452 = vmatpush2.msra.mxu0 0.0
    %2453 = vmatprep.subr.mxu0 0.0
    %2454 = vmatpush2.msra.mxu0 0.0
    %2455 = vmatprep.subr.mxu0 0.0
    %2456 = vmatpush2.msra.mxu0 0.0
    %2457 = vmatprep.subr.mxu0 0.0
    %2458 = vmatpush2.msra.mxu0 0.0
    %2459 = vmatprep.mubr.f32.mxu0 0.0
    %2460 = vmatmul.mubr.f32.gmra.mxu0 %v2253
    %v2461 = vpop.f32.mrf.mxu0
    %v2462 = vadd.f32 %v460, %v2461
    %v2463 = vpop.f32.mrf.mxu0
    %2464 = vdwg.mxu0
    %v2466 = vrot.slane %v2322, 1
    %v2467 = vrot.slane %v2322, 2
    %v2470 = vadd.f32 %v120, %v2466
    %v2471 = vadd.f32 %v125, %v2467
    %v2472 = vxor.u32 %v2470, 2147483648
    %v2473 = vxor.u32 %v2471, 2147483648
    %v2474 = vmul.f32 %v2472, 1.442695
    %v2475 = vpow.pop %v2474
    %v2476 = vmul.f32 %v2473, 1.442695
    %v2477 = vpow.pop %v2476
    %v2478 = vadd.f32 %v2475, 1.0
    %v2479 = vadd.f32 %v2477, 1.0
    %v2480 = vrcp.pop %v2478
    %v2481 = vmul.f32 1.0, %v2480
    %v2482 = vrcp.pop %v2479
    %v2483 = vmul.f32 1.0, %v2482
    %v2485 = vrot.slane %v2392, 1
    %v2486 = vrot.slane %v2392, 2
    %v2489 = vadd.f32 %v205, %v2485
    %v2490 = vadd.f32 %v210, %v2486
    %v2491 = vxor.u32 %v2489, 2147483648
    %v2492 = vxor.u32 %v2490, 2147483648
    %v2493 = vmul.f32 %v2491, 1.442695
    %v2494 = vpow.pop %v2493
    %v2495 = vmul.f32 %v2492, 1.442695
    %v2496 = vpow.pop %v2495
    %v2497 = vadd.f32 %v2494, 1.0
    %v2498 = vadd.f32 %v2496, 1.0
    %v2499 = vrcp.pop %v2497
    %v2500 = vmul.f32 1.0, %v2499
    %v2501 = vrcp.pop %v2498
    %v2502 = vmul.f32 1.0, %v2501
    %v2504 = vrot.slane %v2462, 1
    %v2505 = vrot.slane %v2462, 2
    %v2508 = vmul.f32 %v2481, %v2504
    %v2509 = vmul.f32 %v2483, %v2505
    %v2510 = vadd.f32 %v290, %v2508
    %v2511 = vadd.f32 %v295, %v2509
    %v2512 = vtanh.pop %v2510
    %v2513 = vtanh.pop %v2511
    %v2514 = vsub.f32 1.0, %v2500
    %v2515 = vsub.f32 1.0, %v2502
    %v2516 = vmul.f32 %v2514, %v2512
    %v2517 = vmul.f32 %v2515, %v2513
    %v2518 = vrot.slane %v2246, 7
    %v2519 = vrot.slane %v2247, 7
    %v2522 = vmul.f32 %v2500, %v2518
    %v2523 = vmul.f32 %v2502, %v2519
    %v2524 = vadd.f32 %v2516, %v2522
    %v2525 = vadd.f32 %v2517, %v2523
    %v2528 = vrot.slane %v2525, 7
    %vm2531 = vcmask 261127
    %2532 = vst.msk [vmem:[#allocation6 - $0x7] sm:$0x80] %vm2531, %v2524
    %vm2533 = vcmask 253952
    %2534 = vst.msk [vmem:[#allocation6 + $0x1] sm:$0x1] %vm2533, %v2528
    %v2535 = vlaneseq
    %v2536 = vshrl.u32 %v2535, 7
    %vm2537 = vcmp.eq.s32.totalorder %v2536, 0
    %v2538 = vlaneseq
    %v2539 = vshrl.u32 %v2538, 7
    %v2540 = vsub.s32 0, %v2539
    %v2541 = vrot.slane %v583, %v2540
    %v2542 = vlaneseq
    %v2543 = vshrl.u32 %v2542, 7
    %v2544 = vsub.s32 0, %v2543
    %v2545 = vrot.slane %v584, %v2544
    %v2546 = vsel %vm2537, %v2541, 0.0
    %v2547 = vsel %vm2537, %v2545, 0.0
    %vm2548 = vcmp.eq.s32.totalorder %v2536, 1
    %v2549 = vlaneseq
    %v2550 = vshrl.u32 %v2549, 7
    %v2551 = vsub.s32 1, %v2550
    %v2552 = vrot.slane %v857, %v2551
    %v2553 = vlaneseq
    %v2554 = vshrl.u32 %v2553, 7
    %v2555 = vsub.s32 1, %v2554
    %v2556 = vrot.slane %v858, %v2555
    %v2557 = vsel %vm2548, %v2552, %v2546
    %v2558 = vsel %vm2548, %v2556, %v2547
    %vm2559 = vcmp.eq.s32.totalorder %v2536, 2
    %v2560 = vlaneseq
    %v2561 = vshrl.u32 %v2560, 7
    %v2562 = vsub.s32 2, %v2561
    %v2563 = vrot.slane %v1134, %v2562
    %v2564 = vlaneseq
    %v2565 = vshrl.u32 %v2564, 7
    %v2566 = vsub.s32 2, %v2565
    %v2567 = vrot.slane %v1135, %v2566
    %v2568 = vsel %vm2559, %v2563, %v2557
    %v2569 = vsel %vm2559, %v2567, %v2558
    %vm2570 = vcmp.eq.s32.totalorder %v2536, 3
    %v2571 = vlaneseq
    %v2572 = vshrl.u32 %v2571, 7
    %v2573 = vsub.s32 3, %v2572
    %v2574 = vrot.slane %v1412, %v2573
    %v2575 = vlaneseq
    %v2576 = vshrl.u32 %v2575, 7
    %v2577 = vsub.s32 3, %v2576
    %v2578 = vrot.slane %v1413, %v2577
    %v2579 = vsel %vm2570, %v2574, %v2568
    %v2580 = vsel %vm2570, %v2578, %v2569
    %vm2581 = vcmp.eq.s32.totalorder %v2536, 4
    %v2582 = vlaneseq
    %v2583 = vshrl.u32 %v2582, 7
    %v2584 = vsub.s32 4, %v2583
    %v2585 = vrot.slane %v1690, %v2584
    %v2586 = vlaneseq
    %v2587 = vshrl.u32 %v2586, 7
    %v2588 = vsub.s32 4, %v2587
    %v2589 = vrot.slane %v1691, %v2588
    %v2590 = vsel %vm2581, %v2585, %v2579
    %v2591 = vsel %vm2581, %v2589, %v2580
    %vm2592 = vcmp.eq.s32.totalorder %v2536, 5
    %v2593 = vlaneseq
    %v2594 = vshrl.u32 %v2593, 7
    %v2595 = vsub.s32 5, %v2594
    %v2596 = vrot.slane %v1968, %v2595
    %v2597 = vlaneseq
    %v2598 = vshrl.u32 %v2597, 7
    %v2599 = vsub.s32 5, %v2598
    %v2600 = vrot.slane %v1969, %v2599
    %v2601 = vsel %vm2592, %v2596, %v2590
    %v2602 = vsel %vm2592, %v2600, %v2591
    %vm2603 = vcmp.eq.s32.totalorder %v2536, 6
    %v2604 = vlaneseq
    %v2605 = vshrl.u32 %v2604, 7
    %v2606 = vsub.s32 6, %v2605
    %v2607 = vrot.slane %v2246, %v2606
    %v2608 = vlaneseq
    %v2609 = vshrl.u32 %v2608, 7
    %v2610 = vsub.s32 6, %v2609
    %v2611 = vrot.slane %v2247, %v2610
    %v2612 = vsel %vm2603, %v2607, %v2601
    %v2613 = vsel %vm2603, %v2611, %v2602
    %vm2614 = vcmp.eq.s32.totalorder %v2536, 7
    %v2615 = vlaneseq
    %v2616 = vshrl.u32 %v2615, 7
    %v2617 = vsub.s32 7, %v2616
    %v2618 = vrot.slane %v2524, %v2617
    %v2619 = vlaneseq
    %v2620 = vshrl.u32 %v2619, 7
    %v2621 = vsub.s32 7, %v2620
    %v2622 = vrot.slane %v2525, %v2621
    %v2623 = vsel %vm2614, %v2618, %v2612
    %v2624 = vsel %vm2614, %v2622, %v2613
    %v2625 = vld [vmem:[%s3] sm:$0xff]
    %v2626 = vld [vmem:[%s3 + $0x8] sm:$0xff]
    %v2627 = vld [vmem:[%s3 + $0x10] sm:$0xff]
    %v2628 = vld [vmem:[%s3 + $0x18] sm:$0xff]
    %v2629 = vld [vmem:[%s3 + $0x20] sm:$0x1]
    %v2630 = vlaneseq
    %v2631 = vshrl.u32 %v2630, 7
    %v2632 = vsub.s32 0, %v2631
    %v2633 = vrot.slane %v2629, %v2632
    %v2635 = vsel %vm46, %v2623, 0
    %v2638 = vsel %vm46, %v2624, 0
    %2640 = vmatprep.subr.mxu0 0.0
    %2641 = vmatpush1.msra.mxu0 0.0
    %2642 = vmatprep.subr.mxu0 0.0
    %2643 = vmatpush1.msra.mxu0 0.0
    %2644 = vmatprep.subr.mxu0 0.0
    %2645 = vmatpush1.msra.mxu0 0.0
    %2646 = vmatprep.subr.mxu0 0.0
    %2647 = vmatpush1.msra.mxu0 0.0
    %2648 = vmatprep.subr.mxu0 0.0
    %2649 = vmatpush1.msra.mxu0 0.0
    %2650 = vmatprep.subr.mxu0 0.0
    %2651 = vmatpush1.msra.mxu0 0.0
    %2652 = vmatprep.subr.mxu0 0.0
    %2653 = vmatpush1.msra.mxu0 0.0
    %2654 = vmatprep.subr.mxu0 0.0
    %2655 = vmatpush1.msra.mxu0 0.0
    %2656 = vmatprep.subr.mxu0 0.0
    %2657 = vmatpush1.msra.mxu0 0.0
    %2658 = vmatprep.subr.mxu0 0.0
    %2659 = vmatpush1.msra.mxu0 0.0
    %2660 = vmatprep.subr.mxu0 0.0
    %2661 = vmatpush1.msra.mxu0 0.0
    %2662 = vmatprep.subr.mxu0 0.0
    %2663 = vmatpush1.msra.mxu0 0.0
    %2664 = vmatprep.subr.mxu0 0.0
    %2665 = vmatpush1.msra.mxu0 %v2628
    %2666 = vmatprep.subr.mxu0 0.0
    %2667 = vmatpush1.msra.mxu0 %v2627
    %2668 = vmatprep.subr.mxu0 0.0
    %2669 = vmatpush1.msra.mxu0 %v2626
    %2670 = vmatprep.subr.mxu0 0.0
    %2671 = vmatpush1.msra.mxu0 %v2625
    %2672 = vmatprep.subr.mxu0 0.0
    %2673 = vmatpush2.msra.mxu0 0.0
    %2674 = vmatprep.subr.mxu0 0.0
    %2675 = vmatpush2.msra.mxu0 0.0
    %2676 = vmatprep.subr.mxu0 0.0
    %2677 = vmatpush2.msra.mxu0 0.0
    %2678 = vmatprep.subr.mxu0 0.0
    %2679 = vmatpush2.msra.mxu0 0.0
    %2680 = vmatprep.subr.mxu0 0.0
    %2681 = vmatpush2.msra.mxu0 0.0
    %2682 = vmatprep.subr.mxu0 0.0
    %2683 = vmatpush2.msra.mxu0 0.0
    %2684 = vmatprep.subr.mxu0 0.0
    %2685 = vmatpush2.msra.mxu0 0.0
    %2686 = vmatprep.subr.mxu0 0.0
    %2687 = vmatpush2.msra.mxu0 0.0
    %2688 = vmatprep.subr.mxu0 0.0
    %2689 = vmatpush2.msra.mxu0 0.0
    %2690 = vmatprep.subr.mxu0 0.0
    %2691 = vmatpush2.msra.mxu0 0.0
    %2692 = vmatprep.subr.mxu0 0.0
    %2693 = vmatpush2.msra.mxu0 0.0
    %2694 = vmatprep.subr.mxu0 0.0
    %2695 = vmatpush2.msra.mxu0 0.0
    %2696 = vmatprep.subr.mxu0 0.0
    %2697 = vmatpush2.msra.mxu0 0.0
    %2698 = vmatprep.subr.mxu0 0.0
    %2699 = vmatpush2.msra.mxu0 0.0
    %2700 = vmatprep.subr.mxu0 0.0
    %2701 = vmatpush2.msra.mxu0 0.0
    %2702 = vmatprep.subr.mxu0 0.0
    %2703 = vmatpush2.msra.mxu0 0.0
    %2704 = vmatprep.mubr.f32.mxu0 0.0
    %2705 = vmatmul.mubr.f32.gmra.mxu0 %v2635
    %v2706 = vpop.f32.mrf.mxu0
    %v2707 = vadd.f32 %v2633, %v2706
    %v2708 = vpop.f32.mrf.mxu0
    %2709 = vmatprep.mubr.f32.mxu0 0.0
    %2710 = vmatmul.mubr.f32.gmra.mxu0 %v2638
    %v2711 = vpop.f32.mrf.mxu0
    %v2712 = vadd.f32 %v2633, %v2711
    %v2713 = vpop.f32.mrf.mxu0
    %2714 = vdwg.mxu0
    %vm2715 = vcmask 130048
    %2716 = vst.msk [vmem:[#allocation5] sm:$0xff] %vm2715, %v2707
    %2717 = vst.msk [vmem:[#allocation5 + $0x8] sm:$0xff] %vm2715, %v2712
    // Predicated region
    $region22: #{decoder_rnn_forward.1} parent=1 // pred_check
      _
    $region23: #{decoder_rnn_forward.1} parent=1 // pred_check_branch
      %2719 = sbr.rel (0) target = $region25
    $region24: #{decoder_rnn_forward.1} parent=1 // pred_region
      %s2721 = ssub.s32 256, 256
      %2722 = vsyncadd [#allocation4], %s2721
      %s2723 = sshll.u32 [#allocation5], 4
      %s2724 = int_to_ptr.vmem [resolvable:$true] %s2723
      %2729 = dma.vmem_to_hbm [thread:$0]  %s2724, 256, %s4, [#allocation4], 128, 128, 8
    $region25: #{decoder_rnn_forward.1} parent=1 // pred_fallthru
      _
    // Predicated region
    $region26: #{decoder_rnn_forward.1} parent=1 // pred_check
      _
    $region27: #{decoder_rnn_forward.1} parent=1 // pred_check_branch
      %2731 = sbr.rel (0) target = $region29
    $region28: #{decoder_rnn_forward.1} parent=1 // pred_region
      %s2733 = ssub.s32 32, 32
      %2734 = vsyncadd [#allocation7], %s2733
      %s2736 = sshll.u32 [#allocation6], 4
      %s2737 = int_to_ptr.vmem [resolvable:$true] %s2736
      %2739 = dma.vmem_to_hbm [thread:$0]  %s2737, 32, %s5, [#allocation7]
    $region29: #{decoder_rnn_forward.1} parent=1 // pred_fallthru
      _
    // Predicated region
    $region30: #{decoder_rnn_forward.1} parent=1 // pred_check
      _
    $region31: #{decoder_rnn_forward.1} parent=1 // pred_check_branch
      %2741 = sbr.rel (0) target = $region33
    $region32: #{decoder_rnn_forward.1} parent=1 // pred_region
      %2742 = dma.done [#allocation4], 256
    $region33: #{decoder_rnn_forward.1} parent=1 // pred_fallthru
      _
    // Predicated region
    $region34: #{decoder_rnn_forward.1} parent=1 // pred_check
      _
    $region35: #{decoder_rnn_forward.1} parent=1 // pred_check_branch
      %2744 = sbr.rel (0) target = $region37
    $region36: #{decoder_rnn_forward.1} parent=1 // pred_region
      %2745 = dma.done [#allocation7], 32
    $region37: #{decoder_rnn_forward.1} parent=1 // pred_fallthru
      _
    %2746 = vsyncpa [#allocation3], 1
    %2747 = vsyncpa [#allocation4], 1
    %2748 = vsyncpa [#allocation7], 1

</llo_original>
